<compile_context>
chip_gen: v5e
topology: v5e:2x2
jax: 0.10.0
libtpu: 0.0.40
codegen_flags: <defaults>
</compile_context>

<pallas_src>
import jax
import jax.numpy as jnp
from jax.experimental import pallas as pl
from jax.experimental.pallas import tpu as pltpu

# Logical (PyTorch) dims of Whole_FC_Net: 392 -> 190 -> 160 -> 5 -> 2.
_IN = 392
_DIMS = [(392, 190), (190, 160), (160, 5), (5, 2)]
# Lane-aligned padded dims (multiples of 128 on the output side) for the MXU.
_PDIMS = [(392, 256), (256, 256), (256, 128), (128, 128)]
_OUT = 2

_TILE_M_MAX = 2048   # rows per grid step upper bound (fits v7x 64 MiB VMEM)
_TILE_M_MIN = 256    # full MXU M on v6e/v7x, 8-sublane aligned on v5e


def _round_up(v, m):
    return ((v + m - 1) // m) * m


def _pick_tile_m(n):
    """Large tiles amortize per-grid-step overhead; prefer >=2 tiles so the
    'parallel' batch axis can shard across both v7x TensorCores."""
    return max(_TILE_M_MIN, min(_TILE_M_MAX, _round_up(pl.cdiv(n, 2), 256)))


def _mlp_kernel(x_ref,
                w0_ref, b0_ref,
                w1_ref, b1_ref,
                w2_ref, b2_ref,
                w3_ref, b3_ref,
                o_ref):
    """Fused 4x (matmul + bias + ReLU). bf16 MXU inputs, f32 accumulation."""
    h = x_ref[...].astype(jnp.bfloat16)  # f32 -> bf16 cast on the VPU (free)
    acc = None
    for w_ref, b_ref in ((w0_ref, b0_ref), (w1_ref, b1_ref),
                         (w2_ref, b2_ref), (w3_ref, b3_ref)):
        acc = jnp.dot(h, w_ref[...], preferred_element_type=jnp.float32)  # MXU
        acc = jnp.maximum(acc + b_ref[...], 0.0)                          # VPU
        h = acc.astype(jnp.bfloat16)                                      # feed next MXU pass
    # Store only the 2 useful columns; padded weight/bias columns are exactly 0
    # after ReLU so nothing useful is dropped.
    o_ref[...] = acc[:, :_OUT].astype(o_ref.dtype)


def _resident_spec(shape):
    """Whole-array block that stays VMEM-resident across all grid steps."""
    return pl.BlockSpec(shape, lambda i: (0,) * len(shape))


def whole_fc_net(x, prepped):
    """Forward pass of Whole_FC_Net.

    x: any shape with total elements divisible by 392 (e.g. (N, 2, 14, 14)).
    prepped: dict from prepare_params() (padded bf16 weights, padded f32 biases).
    Returns (N, 2) float32.
    """
    x2d = x.reshape(-1, _IN)  # glue: torch .view(-1, 392); dtype left as stored
    n = x2d.shape[0]
    tile_m = _pick_tile_m(n)
    n_tiles = pl.cdiv(n, tile_m)

    args = (x2d,
            prepped["w0"], prepped["b0"],
            prepped["w1"], prepped["b1"],
            prepped["w2"], prepped["b2"],
            prepped["w3"], prepped["b3"])

    in_specs = [pl.BlockSpec((tile_m, _IN), lambda i: (i, 0))]  # x: batch-tiled
    for (pfi, pfo) in _PDIMS:                                   # weights + biases: resident
        in_specs.append(_resident_spec((pfi, pfo)))
        in_specs.append(_resident_spec((1, pfo)))
    # (tile_m, 2) out block: last dim equals the full array dim -> legal.
    out_spec = pl.BlockSpec((tile_m, _OUT), lambda i: (i, 0))

    # Advisory cost estimate (kept in sync with actual dtypes/shapes).
    flops = 2 * n * sum(a * b for a, b in _PDIMS)
    bytes_accessed = (n * _IN * x2d.dtype.itemsize          # x read (f32)
                      + sum(a * b * 2 for a, b in _PDIMS)   # weights (bf16)
                      + sum(b * 4 for _, b in _PDIMS)       # biases (f32)
                      + n * _OUT * 4)                       # output (f32, exact)
    cost = pl.CostEstimate(flops=flops, transcendentals=0,
                           bytes_accessed=bytes_accessed)

    out = pl.pallas_call(
        _mlp_kernel,
        out_shape=jax.ShapeDtypeStruct((n, _OUT), jnp.float32),
        grid=(n_tiles,),
        in_specs=in_specs,
        out_specs=out_spec,
        compiler_params=pltpu.CompilerParams(
            dimension_semantics=("parallel",),      # shards tiles across v7x's 2 TCs
            vmem_limit_bytes=32 * 1024 * 1024,      # v5e default (16 MiB) too small
        ),
        cost_estimate=cost,
    )(*args)
    return out


def init_params(key):
    """Deterministic synthetic parameters with the module's logical shapes."""
    params = {}
    for i, (fan_in, fan_out) in enumerate(_DIMS):
        kw, kb, key = jax.random.split(key, 3)
        bound = float(fan_in) ** -0.5
        params[f"w{i}"] = jax.random.uniform(
            kw, (fan_in, fan_out), jnp.float32, -bound, bound)
        params[f"b{i}"] = jax.random.uniform(
            kb, (fan_out,), jnp.float32, -bound, bound)
    return params


def prepare_params(params):
    """Zero-pad to lane-aligned shapes; weights -> bf16, biases -> f32 (1, out_pad)."""
    prepped = {}
    for i, ((fi, fo), (pfi, pfo)) in enumerate(zip(_DIMS, _PDIMS)):
        w = params[f"w{i}"]
        b = params[f"b{i}"].reshape(1, fo)
        w_pad = jnp.zeros((pfi, pfo), jnp.float32).at[:fi, :fo].set(w)
        b_pad = jnp.zeros((1, pfo), jnp.float32).at[:, :fo].set(b)
        prepped[f"w{i}"] = w_pad.astype(jnp.bfloat16)
        prepped[f"b{i}"] = b_pad
    return prepped


def _reference(x, params):
    """Plain f32 JAX reference, same math as Whole_FC_Net.forward (incl. the
    ReLU after the final 5->2 layer, exactly as written in the torch module)."""
    h = x.reshape(-1, _IN)
    for i in range(4):
        h = jnp.maximum(h @ params[f"w{i}"] + params[f"b{i}"], 0.0)
    return h


if __name__ == "__main__":
    key = jax.random.PRNGKey(0)
    kx, kx2, kp = jax.random.split(key, 3)

    params = init_params(kp)
    prepped = prepare_params(params)

    # batch=2, 2 channels of 14x14 -> 2*14*14 = 392 features per example.
    x = jax.random.normal(kx, (2, 2, 14, 14), jnp.float32)
    out = jax.block_until_ready(whole_fc_net(x, prepped))
    ref = _reference(x, params)
    assert out.shape == (2, _OUT), out.shape
    # bf16 MXU inputs with f32 accumulation -> small numerical drift vs f32 ref.
    assert jnp.allclose(out, ref, atol=3e-2, rtol=3e-2), (out, ref)

    # Second run exercising multiple grid tiles + a partial last block.
    x2 = jax.random.normal(kx2, (520, _IN), jnp.float32)
    out2 = jax.block_until_ready(whole_fc_net(x2, prepped))
    ref2 = _reference(x2, params)
    assert out2.shape == (520, _OUT), out2.shape
    assert jnp.allclose(out2, ref2, atol=3e-2, rtol=3e-2)

    print("KERNEL_OK")
</pallas_src>

<mosaic_0001>
module attributes {stable_mosaic.version = 11 : i64} {
  func.func @_mlp_kernel(%arg0: i32, %arg1: memref<256x392xf32, #tpu.memory_space<vmem>>, %arg2: memref<392x256xbf16, #tpu.memory_space<vmem>>, %arg3: memref<1x256xf32, #tpu.memory_space<vmem>>, %arg4: memref<256x256xbf16, #tpu.memory_space<vmem>>, %arg5: memref<1x256xf32, #tpu.memory_space<vmem>>, %arg6: memref<256x128xbf16, #tpu.memory_space<vmem>>, %arg7: memref<1x128xf32, #tpu.memory_space<vmem>>, %arg8: memref<128x128xbf16, #tpu.memory_space<vmem>>, %arg9: memref<1x128xf32, #tpu.memory_space<vmem>>, %arg10: memref<256x2xf32, #tpu.memory_space<vmem>>) attributes {dimension_semantics = [#tpu.dimension_semantics<parallel>], iteration_bounds = array<i64: 1>, scalar_prefetch = 0 : i64, scratch_operands = 0 : i64, tpu.core_type = #tpu.core_type<tc>, window_params = [{transform_indices = @transform_0, window_bounds = array<i64: 256, 392>}, {pipeline_mode = #tpu.pipeline_mode<synchronous>, transform_indices = @transform_1, window_bounds = array<i64: 392, 256>}, {pipeline_mode = #tpu.pipeline_mode<synchronous>, transform_indices = @transform_2, window_bounds = array<i64: 1, 256>}, {pipeline_mode = #tpu.pipeline_mode<synchronous>, transform_indices = @transform_3, window_bounds = array<i64: 256, 256>}, {pipeline_mode = #tpu.pipeline_mode<synchronous>, transform_indices = @transform_4, window_bounds = array<i64: 1, 256>}, {pipeline_mode = #tpu.pipeline_mode<synchronous>, transform_indices = @transform_5, window_bounds = array<i64: 256, 128>}, {pipeline_mode = #tpu.pipeline_mode<synchronous>, transform_indices = @transform_6, window_bounds = array<i64: 1, 128>}, {pipeline_mode = #tpu.pipeline_mode<synchronous>, transform_indices = @transform_7, window_bounds = array<i64: 128, 128>}, {pipeline_mode = #tpu.pipeline_mode<synchronous>, transform_indices = @transform_8, window_bounds = array<i64: 1, 128>}, {transform_indices = @transform_9, window_bounds = array<i64: 256, 2>}]} {
    %c0 = arith.constant 0 : index
    %c0_0 = arith.constant 0 : index
    %0 = vector.load %arg1[%c0, %c0_0] : memref<256x392xf32, #tpu.memory_space<vmem>>, vector<256x392xf32>
    %1 = arith.truncf %0 : vector<256x392xf32> to vector<256x392xbf16>
    %c0_1 = arith.constant 0 : index
    %c0_2 = arith.constant 0 : index
    %2 = vector.load %arg2[%c0_1, %c0_2] : memref<392x256xbf16, #tpu.memory_space<vmem>>, vector<392x256xbf16>
    %cst = arith.constant dense<0.000000e+00> : vector<256x256xf32>
    %3 = tpu.matmul %1, %2, %cst {dimension_numbers = #tpu.dot_dimension_numbers<[1], [0], [0], [1], [0, 0, 1, 1], [], []>} : vector<256x392xbf16>, vector<392x256xbf16>, vector<256x256xf32> -> vector<256x256xf32>
    %c0_3 = arith.constant 0 : index
    %c0_4 = arith.constant 0 : index
    %4 = vector.load %arg3[%c0_3, %c0_4] : memref<1x256xf32, #tpu.memory_space<vmem>>, vector<1x256xf32>
    %5 = vector.broadcast %4 : vector<1x256xf32> to vector<256x256xf32>
    %6 = arith.addf %3, %5 : vector<256x256xf32>
    %cst_5 = arith.constant 0.000000e+00 : f32
    %7 = vector.broadcast %cst_5 : f32 to vector<256x256xf32>
    %8 = arith.maximumf %6, %7 : vector<256x256xf32>
    %9 = arith.truncf %8 : vector<256x256xf32> to vector<256x256xbf16>
    %c0_6 = arith.constant 0 : index
    %c0_7 = arith.constant 0 : index
    %10 = vector.load %arg4[%c0_6, %c0_7] : memref<256x256xbf16, #tpu.memory_space<vmem>>, vector<256x256xbf16>
    %cst_8 = arith.constant dense<0.000000e+00> : vector<256x256xf32>
    %11 = tpu.matmul %9, %10, %cst_8 {dimension_numbers = #tpu.dot_dimension_numbers<[1], [0], [0], [1], [0, 0, 1, 1], [], []>} : vector<256x256xbf16>, vector<256x256xbf16>, vector<256x256xf32> -> vector<256x256xf32>
    %c0_9 = arith.constant 0 : index
    %c0_10 = arith.constant 0 : index
    %12 = vector.load %arg5[%c0_9, %c0_10] : memref<1x256xf32, #tpu.memory_space<vmem>>, vector<1x256xf32>
    %13 = vector.broadcast %12 : vector<1x256xf32> to vector<256x256xf32>
    %14 = arith.addf %11, %13 : vector<256x256xf32>
    %cst_11 = arith.constant 0.000000e+00 : f32
    %15 = vector.broadcast %cst_11 : f32 to vector<256x256xf32>
    %16 = arith.maximumf %14, %15 : vector<256x256xf32>
    %17 = arith.truncf %16 : vector<256x256xf32> to vector<256x256xbf16>
    %c0_12 = arith.constant 0 : index
    %c0_13 = arith.constant 0 : index
    %18 = vector.load %arg6[%c0_12, %c0_13] : memref<256x128xbf16, #tpu.memory_space<vmem>>, vector<256x128xbf16>
    %cst_14 = arith.constant dense<0.000000e+00> : vector<256x128xf32>
    %19 = tpu.matmul %17, %18, %cst_14 {dimension_numbers = #tpu.dot_dimension_numbers<[1], [0], [0], [1], [0, 0, 1, 1], [], []>} : vector<256x256xbf16>, vector<256x128xbf16>, vector<256x128xf32> -> vector<256x128xf32>
    %c0_15 = arith.constant 0 : index
    %c0_16 = arith.constant 0 : index
    %20 = vector.load %arg7[%c0_15, %c0_16] : memref<1x128xf32, #tpu.memory_space<vmem>>, vector<1x128xf32>
    %21 = vector.broadcast %20 : vector<1x128xf32> to vector<256x128xf32>
    %22 = arith.addf %19, %21 : vector<256x128xf32>
    %cst_17 = arith.constant 0.000000e+00 : f32
    %23 = vector.broadcast %cst_17 : f32 to vector<256x128xf32>
    %24 = arith.maximumf %22, %23 : vector<256x128xf32>
    %25 = arith.truncf %24 : vector<256x128xf32> to vector<256x128xbf16>
    %c0_18 = arith.constant 0 : index
    %c0_19 = arith.constant 0 : index
    %26 = vector.load %arg8[%c0_18, %c0_19] : memref<128x128xbf16, #tpu.memory_space<vmem>>, vector<128x128xbf16>
    %cst_20 = arith.constant dense<0.000000e+00> : vector<256x128xf32>
    %27 = tpu.matmul %25, %26, %cst_20 {dimension_numbers = #tpu.dot_dimension_numbers<[1], [0], [0], [1], [0, 0, 1, 1], [], []>} : vector<256x128xbf16>, vector<128x128xbf16>, vector<256x128xf32> -> vector<256x128xf32>
    %c0_21 = arith.constant 0 : index
    %c0_22 = arith.constant 0 : index
    %28 = vector.load %arg9[%c0_21, %c0_22] : memref<1x128xf32, #tpu.memory_space<vmem>>, vector<1x128xf32>
    %29 = vector.broadcast %28 : vector<1x128xf32> to vector<256x128xf32>
    %30 = arith.addf %27, %29 : vector<256x128xf32>
    %cst_23 = arith.constant 0.000000e+00 : f32
    %31 = vector.broadcast %cst_23 : f32 to vector<256x128xf32>
    %32 = arith.maximumf %30, %31 : vector<256x128xf32>
    %33 = vector.extract_strided_slice %32 {offsets = [0, 0], sizes = [256, 2], strides = [1, 1]} : vector<256x128xf32> to vector<256x2xf32>
    %c0_24 = arith.constant 0 : index
    %c0_25 = arith.constant 0 : index
    %34 = vector.load %arg10[%c0_24, %c0_25] : memref<256x2xf32, #tpu.memory_space<vmem>>, vector<256x2xf32>
    tpu.vector_store %arg10[%c0_24, %c0_25], %33 {strides = array<i32>} : memref<256x2xf32, #tpu.memory_space<vmem>>, vector<256x2xf32>,
    return
  }
  func.func @transform_0(%arg0: i32) -> (i32, i32) {
    %c0_i32 = arith.constant 0 : i32
    %c0_i32_0 = arith.constant 0 : i32
    return %arg0, %c0_i32 : i32, i32
  }
  func.func @transform_1(%arg0: i32) -> (i32, i32) {
    %c0_i32 = arith.constant 0 : i32
    %c0_i32_0 = arith.constant 0 : i32
    %c0_i32_1 = arith.constant 0 : i32
    return %c0_i32, %c0_i32_0 : i32, i32
  }
  func.func @transform_2(%arg0: i32) -> (i32, i32) {
    %c0_i32 = arith.constant 0 : i32
    %c0_i32_0 = arith.constant 0 : i32
    %c0_i32_1 = arith.constant 0 : i32
    return %c0_i32, %c0_i32_0 : i32, i32
  }
  func.func @transform_3(%arg0: i32) -> (i32, i32) {
    %c0_i32 = arith.constant 0 : i32
    %c0_i32_0 = arith.constant 0 : i32
    %c0_i32_1 = arith.constant 0 : i32
    return %c0_i32, %c0_i32_0 : i32, i32
  }
  func.func @transform_4(%arg0: i32) -> (i32, i32) {
    %c0_i32 = arith.constant 0 : i32
    %c0_i32_0 = arith.constant 0 : i32
    %c0_i32_1 = arith.constant 0 : i32
    return %c0_i32, %c0_i32_0 : i32, i32
  }
  func.func @transform_5(%arg0: i32) -> (i32, i32) {
    %c0_i32 = arith.constant 0 : i32
    %c0_i32_0 = arith.constant 0 : i32
    %c0_i32_1 = arith.constant 0 : i32
    return %c0_i32, %c0_i32_0 : i32, i32
  }
  func.func @transform_6(%arg0: i32) -> (i32, i32) {
    %c0_i32 = arith.constant 0 : i32
    %c0_i32_0 = arith.constant 0 : i32
    %c0_i32_1 = arith.constant 0 : i32
    return %c0_i32, %c0_i32_0 : i32, i32
  }
  func.func @transform_7(%arg0: i32) -> (i32, i32) {
    %c0_i32 = arith.constant 0 : i32
    %c0_i32_0 = arith.constant 0 : i32
    %c0_i32_1 = arith.constant 0 : i32
    return %c0_i32, %c0_i32_0 : i32, i32
  }
  func.func @transform_8(%arg0: i32) -> (i32, i32) {
    %c0_i32 = arith.constant 0 : i32
    %c0_i32_0 = arith.constant 0 : i32
    %c0_i32_1 = arith.constant 0 : i32
    return %c0_i32, %c0_i32_0 : i32, i32
  }
  func.func @transform_9(%arg0: i32) -> (i32, i32) {
    %c0_i32 = arith.constant 0 : i32
    %c0_i32_0 = arith.constant 0 : i32
    return %arg0, %c0_i32 : i32, i32
  }
}

</mosaic_0001>

<llo_original>
// kernel: tpu_custom_call.1
$region0: #{tpu_custom_call.1}
  #allocation0 [shape = 'u32[]', space=smem, size = 0x4, offset = 0x4, fixed_abs, tag = 'smem constant byte address 0x4 - core index']
  #allocation1 [shape = 'u32[72,128]{1,0:T(1,128)}', space=vmem, size = 0x9000, scoped, tag = 'internal scratch']
  %s0 = inlined_call_operand.hbm [shape: f32[2,392], index: 0, kind: input, shape index: {}]
  %s1 = inlined_call_operand.hbm [shape: bf16[392,256], index: 1, kind: input, shape index: {}]
  %s2 = inlined_call_operand.hbm [shape: f32[1,256], index: 2, kind: input, shape index: {}]
  %s3 = inlined_call_operand.hbm [shape: bf16[256,256], index: 3, kind: input, shape index: {}]
  %s4 = inlined_call_operand.vmem [shape: f32[1,256], index: 4, kind: input, shape index: {}]
  %s5 = inlined_call_operand.hbm [shape: bf16[256,128], index: 5, kind: input, shape index: {}]
  %s6 = inlined_call_operand.vmem [shape: f32[1,128], index: 6, kind: input, shape index: {}]
  %s7 = inlined_call_operand.hbm [shape: bf16[128,128], index: 7, kind: input, shape index: {}]
  %s8 = inlined_call_operand.vmem [shape: f32[1,128], index: 8, kind: input, shape index: {}]
  %s9 = inlined_call_operand.hbm [shape: f32[2,2], index: 9, kind: output, shape index: {}]
  %s10 = sld [smem:[#allocation0]]
  $region70: #{tpu_custom_call.1} parent=0
    _
  %s12 = ssub.s32 1, %s10
  %s13 = scalar_select 0, %s12, %s10
  $region1: #{tpu_custom_call.1} parent=0
    #allocation2 [shape = 'u8[524288]{0}', space=vmem, size = 0x80000, scoped, tag = 'input window, operand 0, single buffered']
    #allocation3 [shape = 's32[1]{0}', space=sflag, size = 0x4, scoped, tag = 'scoped memory for tpu_custom_call.1']
    #allocation4 [shape = 's32[1]{0}', space=sflag, size = 0x4, scoped, tag = 'scoped memory for tpu_custom_call.1']
    #allocation5 [shape = 'u8[200704]{0}', space=vmem, size = 0x31000, scoped, tag = 'input window, operand 1, single buffered']
    #allocation6 [shape = 's32[1]{0}', space=sflag, size = 0x4, scoped, tag = 'scoped memory for tpu_custom_call.1']
    #allocation7 [shape = 'u8[1024]{0}', space=vmem, size = 0x400, scoped, tag = 'input window, operand 2, single buffered']
    #allocation8 [shape = 'u8[131072]{0}', space=vmem, size = 0x20000, scoped, tag = 'input window, operand 3, single buffered']
    #allocation9 [shape = 's32[1]{0}', space=sflag, size = 0x4, scoped, tag = 'scoped memory for tpu_custom_call.1']
    #allocation10 [shape = 'u8[65536]{0}', space=vmem, size = 0x10000, scoped, tag = 'input window, operand 5, single buffered']
    #allocation11 [shape = 'u8[32768]{0}', space=vmem, size = 0x8000, scoped, tag = 'input window, operand 7, single buffered']
    #allocation12 [shape = 's32[1]{0}', space=sflag, size = 0x4, scoped, tag = 'scoped memory for tpu_custom_call.1']
    #allocation13 [shape = 'u8[131072]{0}', space=vmem, size = 0x20000, scoped, tag = 'output window, operand 0, single buffered']
    %14 = vsyncpa [#allocation3], 0
    %15 = vsyncpa [#allocation6], 0
    %16 = vsyncpa [#allocation9], 0
    %17 = vsyncpa [#allocation12], 0
    %18 = vsyncpa [#allocation4], 0
    // Predicated region
    $region2: #{tpu_custom_call.1} parent=1 // pred_check
      _
    $region3: #{tpu_custom_call.1} parent=1 // pred_check_branch
      %20 = sbr.rel (0) target = $region5
    $region4: #{tpu_custom_call.1} parent=1 // pred_region
      %22 = vsyncadd [#allocation3], 16256
      %s23 = sshll.u32 %s0, 4
      %s24 = int_to_ptr.hbm [resolvable:$true] %s23
      %s25 = sshll.u32 [#allocation2], 4
      %s26 = int_to_ptr.vmem [resolvable:$true] %s25
      %31 = dma.hbm_to_vmem [thread:$0]  %s24, 128, %s26, [#allocation3], 128, 128, 8
    $region5: #{tpu_custom_call.1} parent=1 // pred_fallthru
      _
    // Predicated region
    $region6: #{tpu_custom_call.1} parent=1 // pred_check
      _
    $region7: #{tpu_custom_call.1} parent=1 // pred_check_branch
      %33 = sbr.rel (0) target = $region9
    $region8: #{tpu_custom_call.1} parent=1 // pred_region
      %35 = vsyncadd [#allocation6], 0
      %s36 = sshll.u32 %s1, 4
      %s37 = int_to_ptr.hbm [resolvable:$true] %s36
      %s38 = sshll.u32 [#allocation5], 4
      %s39 = int_to_ptr.vmem [resolvable:$true] %s38
      %44 = dma.hbm_to_vmem [thread:$0]  %s37, 6272, %s39, [#allocation6], 128, 128, 8
    $region9: #{tpu_custom_call.1} parent=1 // pred_fallthru
      _
    // Predicated region
    $region10: #{tpu_custom_call.1} parent=1 // pred_check
      _
    $region11: #{tpu_custom_call.1} parent=1 // pred_check_branch
      %46 = sbr.rel (0) target = $region13
    $region12: #{tpu_custom_call.1} parent=1 // pred_region
      %48 = vsyncadd [#allocation6], 0
      %s50 = sshll.u32 %s2, 4
      %s51 = int_to_ptr.hbm [resolvable:$true] %s50
      %s52 = sshll.u32 [#allocation7], 4
      %s53 = int_to_ptr.vmem [resolvable:$true] %s52
      %55 = dma.hbm_to_vmem [thread:$0]  %s51, 32, %s53, [#allocation6]
    $region13: #{tpu_custom_call.1} parent=1 // pred_fallthru
      _
    // Predicated region
    $region14: #{tpu_custom_call.1} parent=1 // pred_check
      _
    $region15: #{tpu_custom_call.1} parent=1 // pred_check_branch
      %57 = sbr.rel (0) target = $region17
    $region16: #{tpu_custom_call.1} parent=1 // pred_region
      %59 = vsyncadd [#allocation9], 0
      %s60 = sshll.u32 %s3, 4
      %s61 = int_to_ptr.hbm [resolvable:$true] %s60
      %s62 = sshll.u32 [#allocation8], 4
      %s63 = int_to_ptr.vmem [resolvable:$true] %s62
      %68 = dma.hbm_to_vmem [thread:$0]  %s61, 4096, %s63, [#allocation9], 128, 128, 8
    $region17: #{tpu_custom_call.1} parent=1 // pred_fallthru
      _
    // Predicated region
    $region18: #{tpu_custom_call.1} parent=1 // pred_check
      _
    $region19: #{tpu_custom_call.1} parent=1 // pred_check_branch
      %70 = sbr.rel (0) target = $region21
    $region20: #{tpu_custom_call.1} parent=1 // pred_region
      _
    $region21: #{tpu_custom_call.1} parent=1 // pred_fallthru
      _
    // Predicated region
    $region22: #{tpu_custom_call.1} parent=1 // pred_check
      _
    $region23: #{tpu_custom_call.1} parent=1 // pred_check_branch
      %72 = sbr.rel (0) target = $region25
    $region24: #{tpu_custom_call.1} parent=1 // pred_region
      %74 = vsyncadd [#allocation9], 0
      %s75 = sshll.u32 %s5, 4
      %s76 = int_to_ptr.hbm [resolvable:$true] %s75
      %s77 = sshll.u32 [#allocation10], 4
      %s78 = int_to_ptr.vmem [resolvable:$true] %s77
      %83 = dma.hbm_to_vmem [thread:$0]  %s76, 2048, %s78, [#allocation9], 64, 64, 4
    $region25: #{tpu_custom_call.1} parent=1 // pred_fallthru
      _
    // Predicated region
    $region26: #{tpu_custom_call.1} parent=1 // pred_check
      _
    $region27: #{tpu_custom_call.1} parent=1 // pred_check_branch
      %85 = sbr.rel (0) target = $region29
    $region28: #{tpu_custom_call.1} parent=1 // pred_region
      _
    $region29: #{tpu_custom_call.1} parent=1 // pred_fallthru
      _
    // Predicated region
    $region30: #{tpu_custom_call.1} parent=1 // pred_check
      _
    $region31: #{tpu_custom_call.1} parent=1 // pred_check_branch
      %87 = sbr.rel (0) target = $region33
    $region32: #{tpu_custom_call.1} parent=1 // pred_region
      %89 = vsyncadd [#allocation12], 0
      %s90 = sshll.u32 %s7, 4
      %s91 = int_to_ptr.hbm [resolvable:$true] %s90
      %s92 = sshll.u32 [#allocation11], 4
      %s93 = int_to_ptr.vmem [resolvable:$true] %s92
      %98 = dma.hbm_to_vmem [thread:$0]  %s91, 1024, %s93, [#allocation12], 64, 64, 4
    $region33: #{tpu_custom_call.1} parent=1 // pred_fallthru
      _
    // Predicated region
    $region34: #{tpu_custom_call.1} parent=1 // pred_check
      _
    $region35: #{tpu_custom_call.1} parent=1 // pred_check_branch
      %100 = sbr.rel (0) target = $region37
    $region36: #{tpu_custom_call.1} parent=1 // pred_region
      _
    $region37: #{tpu_custom_call.1} parent=1 // pred_fallthru
      _
    // Predicated region
    $region38: #{tpu_custom_call.1} parent=1 // pred_check
      _
    $region39: #{tpu_custom_call.1} parent=1 // pred_check_branch
      %102 = sbr.rel (0) target = $region41
    $region40: #{tpu_custom_call.1} parent=1 // pred_region
      %104 = dma.done [#allocation3], 16384
    $region41: #{tpu_custom_call.1} parent=1 // pred_fallthru
      _
    // Predicated region
    $region42: #{tpu_custom_call.1} parent=1 // pred_check
      _
    $region43: #{tpu_custom_call.1} parent=1 // pred_check_branch
      %106 = sbr.rel (0) target = $region45
    $region44: #{tpu_custom_call.1} parent=1 // pred_region
      %108 = dma.done [#allocation6], 6272
    $region45: #{tpu_custom_call.1} parent=1 // pred_fallthru
      _
    // Predicated region
    $region46: #{tpu_custom_call.1} parent=1 // pred_check
      _
    $region47: #{tpu_custom_call.1} parent=1 // pred_check_branch
      %110 = sbr.rel (0) target = $region49
    $region48: #{tpu_custom_call.1} parent=1 // pred_region
      %112 = dma.done [#allocation6], 32
    $region49: #{tpu_custom_call.1} parent=1 // pred_fallthru
      _
    // Predicated region
    $region50: #{tpu_custom_call.1} parent=1 // pred_check
      _
    $region51: #{tpu_custom_call.1} parent=1 // pred_check_branch
      %114 = sbr.rel (0) target = $region53
    $region52: #{tpu_custom_call.1} parent=1 // pred_region
      %116 = dma.done [#allocation9], 4096
    $region53: #{tpu_custom_call.1} parent=1 // pred_fallthru
      _
    // Predicated region
    $region54: #{tpu_custom_call.1} parent=1 // pred_check
      _
    $region55: #{tpu_custom_call.1} parent=1 // pred_check_branch
      %118 = sbr.rel (0) target = $region57
    $region56: #{tpu_custom_call.1} parent=1 // pred_region
      %120 = dma.done [#allocation9], 2048
    $region57: #{tpu_custom_call.1} parent=1 // pred_fallthru
      _
    // Predicated region
    $region58: #{tpu_custom_call.1} parent=1 // pred_check
      _
    $region59: #{tpu_custom_call.1} parent=1 // pred_check_branch
      %122 = sbr.rel (0) target = $region61
    $region60: #{tpu_custom_call.1} parent=1 // pred_region
      %124 = dma.done [#allocation12], 1024
    $region61: #{tpu_custom_call.1} parent=1 // pred_fallthru
      _
    %v126 = vld [vmem:[#allocation2] sm:$0xff]
    %v127 = vld [vmem:[#allocation2 + $0x8] sm:$0xff]
    %v128 = vld [vmem:[#allocation2 + $0x10] sm:$0xff]
    %v129 = vld [vmem:[#allocation2 + $0x18] sm:$0xff]
    %v130 = vld [vmem:[#allocation2 + $0x20] sm:$0xff]
    %v131 = vld [vmem:[#allocation2 + $0x28] sm:$0xff]
    %v132 = vld [vmem:[#allocation2 + $0x30] sm:$0xff]
    %v133 = vld [vmem:[#allocation2 + $0x38] sm:$0xff]
    %v134 = vld [vmem:[#allocation2 + $0x40] sm:$0xff]
    %v135 = vld [vmem:[#allocation2 + $0x48] sm:$0xff]
    %v136 = vld [vmem:[#allocation2 + $0x50] sm:$0xff]
    %v137 = vld [vmem:[#allocation2 + $0x58] sm:$0xff]
    %v138 = vld [vmem:[#allocation2 + $0x60] sm:$0xff]
    %v139 = vld [vmem:[#allocation2 + $0x68] sm:$0xff]
    %v140 = vld [vmem:[#allocation2 + $0x70] sm:$0xff]
    %v141 = vld [vmem:[#allocation2 + $0x78] sm:$0xff]
    %v142 = vld [vmem:[#allocation2 + $0x80] sm:$0xff]
    %v143 = vld [vmem:[#allocation2 + $0x88] sm:$0xff]
    %v144 = vld [vmem:[#allocation2 + $0x90] sm:$0xff]
    %v145 = vld [vmem:[#allocation2 + $0x98] sm:$0xff]
    %v146 = vld [vmem:[#allocation2 + $0xa0] sm:$0xff]
    %v147 = vld [vmem:[#allocation2 + $0xa8] sm:$0xff]
    %v148 = vld [vmem:[#allocation2 + $0xb0] sm:$0xff]
    %v149 = vld [vmem:[#allocation2 + $0xb8] sm:$0xff]
    %v150 = vld [vmem:[#allocation2 + $0xc0] sm:$0xff]
    %v151 = vld [vmem:[#allocation2 + $0xc8] sm:$0xff]
    %v152 = vld [vmem:[#allocation2 + $0xd0] sm:$0xff]
    %v153 = vld [vmem:[#allocation2 + $0xd8] sm:$0xff]
    %v154 = vld [vmem:[#allocation2 + $0xe0] sm:$0xff]
    %v155 = vld [vmem:[#allocation2 + $0xe8] sm:$0xff]
    %v156 = vld [vmem:[#allocation2 + $0xf0] sm:$0xff]
    %v157 = vld [vmem:[#allocation2 + $0xf8] sm:$0xff]
    %v158 = vld [vmem:[#allocation2 + $0x100] sm:$0xff]
    %v159 = vld [vmem:[#allocation2 + $0x108] sm:$0xff]
    %v160 = vld [vmem:[#allocation2 + $0x110] sm:$0xff]
    %v161 = vld [vmem:[#allocation2 + $0x118] sm:$0xff]
    %v162 = vld [vmem:[#allocation2 + $0x120] sm:$0xff]
    %v163 = vld [vmem:[#allocation2 + $0x128] sm:$0xff]
    %v164 = vld [vmem:[#allocation2 + $0x130] sm:$0xff]
    %v165 = vld [vmem:[#allocation2 + $0x138] sm:$0xff]
    %v166 = vld [vmem:[#allocation2 + $0x140] sm:$0xff]
    %v167 = vld [vmem:[#allocation2 + $0x148] sm:$0xff]
    %v168 = vld [vmem:[#allocation2 + $0x150] sm:$0xff]
    %v169 = vld [vmem:[#allocation2 + $0x158] sm:$0xff]
    %v170 = vld [vmem:[#allocation2 + $0x160] sm:$0xff]
    %v171 = vld [vmem:[#allocation2 + $0x168] sm:$0xff]
    %v172 = vld [vmem:[#allocation2 + $0x170] sm:$0xff]
    %v173 = vld [vmem:[#allocation2 + $0x178] sm:$0xff]
    %v174 = vld [vmem:[#allocation2 + $0x180] sm:$0xff]
    %v175 = vld [vmem:[#allocation2 + $0x188] sm:$0xff]
    %v176 = vld [vmem:[#allocation2 + $0x190] sm:$0xff]
    %v177 = vld [vmem:[#allocation2 + $0x198] sm:$0xff]
    %v178 = vld [vmem:[#allocation2 + $0x1a0] sm:$0xff]
    %v179 = vld [vmem:[#allocation2 + $0x1a8] sm:$0xff]
    %v180 = vld [vmem:[#allocation2 + $0x1b0] sm:$0xff]
    %v181 = vld [vmem:[#allocation2 + $0x1b8] sm:$0xff]
    %v182 = vld [vmem:[#allocation2 + $0x1c0] sm:$0xff]
    %v183 = vld [vmem:[#allocation2 + $0x1c8] sm:$0xff]
    %v184 = vld [vmem:[#allocation2 + $0x1d0] sm:$0xff]
    %v185 = vld [vmem:[#allocation2 + $0x1d8] sm:$0xff]
    %v186 = vld [vmem:[#allocation2 + $0x1e0] sm:$0xff]
    %v187 = vld [vmem:[#allocation2 + $0x1e8] sm:$0xff]
    %v188 = vld [vmem:[#allocation2 + $0x1f0] sm:$0xff]
    %v189 = vld [vmem:[#allocation2 + $0x1f8] sm:$0xff]
    %v190 = vld [vmem:[#allocation2 + $0x200] sm:$0xff]
    %v191 = vld [vmem:[#allocation2 + $0x208] sm:$0xff]
    %v192 = vld [vmem:[#allocation2 + $0x210] sm:$0xff]
    %v193 = vld [vmem:[#allocation2 + $0x218] sm:$0xff]
    %v194 = vld [vmem:[#allocation2 + $0x220] sm:$0xff]
    %v195 = vld [vmem:[#allocation2 + $0x228] sm:$0xff]
    %v196 = vld [vmem:[#allocation2 + $0x230] sm:$0xff]
    %v197 = vld [vmem:[#allocation2 + $0x238] sm:$0xff]
    %v198 = vld [vmem:[#allocation2 + $0x240] sm:$0xff]
    %v199 = vld [vmem:[#allocation2 + $0x248] sm:$0xff]
    %v200 = vld [vmem:[#allocation2 + $0x250] sm:$0xff]
    %v201 = vld [vmem:[#allocation2 + $0x258] sm:$0xff]
    %v202 = vld [vmem:[#allocation2 + $0x260] sm:$0xff]
    %v203 = vld [vmem:[#allocation2 + $0x268] sm:$0xff]
    %v204 = vld [vmem:[#allocation2 + $0x270] sm:$0xff]
    %v205 = vld [vmem:[#allocation2 + $0x278] sm:$0xff]
    %v206 = vld [vmem:[#allocation2 + $0x280] sm:$0xff]
    %v207 = vld [vmem:[#allocation2 + $0x288] sm:$0xff]
    %v208 = vld [vmem:[#allocation2 + $0x290] sm:$0xff]
    %v209 = vld [vmem:[#allocation2 + $0x298] sm:$0xff]
    %v210 = vld [vmem:[#allocation2 + $0x2a0] sm:$0xff]
    %v211 = vld [vmem:[#allocation2 + $0x2a8] sm:$0xff]
    %v212 = vld [vmem:[#allocation2 + $0x2b0] sm:$0xff]
    %v213 = vld [vmem:[#allocation2 + $0x2b8] sm:$0xff]
    %v214 = vld [vmem:[#allocation2 + $0x2c0] sm:$0xff]
    %v215 = vld [vmem:[#allocation2 + $0x2c8] sm:$0xff]
    %v216 = vld [vmem:[#allocation2 + $0x2d0] sm:$0xff]
    %v217 = vld [vmem:[#allocation2 + $0x2d8] sm:$0xff]
    %v218 = vld [vmem:[#allocation2 + $0x2e0] sm:$0xff]
    %v219 = vld [vmem:[#allocation2 + $0x2e8] sm:$0xff]
    %v220 = vld [vmem:[#allocation2 + $0x2f0] sm:$0xff]
    %v221 = vld [vmem:[#allocation2 + $0x2f8] sm:$0xff]
    %v222 = vld [vmem:[#allocation2 + $0x300] sm:$0xff]
    %v223 = vld [vmem:[#allocation2 + $0x308] sm:$0xff]
    %v224 = vld [vmem:[#allocation2 + $0x310] sm:$0xff]
    %v225 = vld [vmem:[#allocation2 + $0x318] sm:$0xff]
    %v226 = vld [vmem:[#allocation2 + $0x320] sm:$0xff]
    %v227 = vld [vmem:[#allocation2 + $0x328] sm:$0xff]
    %v228 = vld [vmem:[#allocation2 + $0x330] sm:$0xff]
    %v229 = vld [vmem:[#allocation2 + $0x338] sm:$0xff]
    %v230 = vld [vmem:[#allocation2 + $0x340] sm:$0xff]
    %v231 = vld [vmem:[#allocation2 + $0x348] sm:$0xff]
    %v232 = vld [vmem:[#allocation2 + $0x350] sm:$0xff]
    %v233 = vld [vmem:[#allocation2 + $0x358] sm:$0xff]
    %v234 = vld [vmem:[#allocation2 + $0x360] sm:$0xff]
    %v235 = vld [vmem:[#allocation2 + $0x368] sm:$0xff]
    %v236 = vld [vmem:[#allocation2 + $0x370] sm:$0xff]
    %v237 = vld [vmem:[#allocation2 + $0x378] sm:$0xff]
    %v238 = vld [vmem:[#allocation2 + $0x380] sm:$0xff]
    %v239 = vld [vmem:[#allocation2 + $0x388] sm:$0xff]
    %v240 = vld [vmem:[#allocation2 + $0x390] sm:$0xff]
    %v241 = vld [vmem:[#allocation2 + $0x398] sm:$0xff]
    %v242 = vld [vmem:[#allocation2 + $0x3a0] sm:$0xff]
    %v243 = vld [vmem:[#allocation2 + $0x3a8] sm:$0xff]
    %v244 = vld [vmem:[#allocation2 + $0x3b0] sm:$0xff]
    %v245 = vld [vmem:[#allocation2 + $0x3b8] sm:$0xff]
    %v246 = vld [vmem:[#allocation2 + $0x3c0] sm:$0xff]
    %v247 = vld [vmem:[#allocation2 + $0x3c8] sm:$0xff]
    %v248 = vld [vmem:[#allocation2 + $0x3d0] sm:$0xff]
    %v249 = vld [vmem:[#allocation2 + $0x3d8] sm:$0xff]
    %v250 = vld [vmem:[#allocation2 + $0x3e0] sm:$0xff]
    %v251 = vld [vmem:[#allocation2 + $0x3e8] sm:$0xff]
    %v252 = vld [vmem:[#allocation2 + $0x3f0] sm:$0xff]
    %v253 = vld [vmem:[#allocation2 + $0x3f8] sm:$0xff]
    %382 = vst [vmem:[#allocation1] ss:$4 sm:$0xff] %v126
    %s383 = scalar_lea.vmem [#allocation1], 1
    %384 = vst [vmem:[%s383] ss:$4 sm:$0xff] %v127
    %s385 = scalar_lea.vmem [#allocation1], 2
    %386 = vst [vmem:[%s385] ss:$4 sm:$0xff] %v128
    %s387 = scalar_lea.vmem [#allocation1], 3
    %388 = vst [vmem:[%s387] ss:$4 sm:$0xff] %v129
    %s389 = scalar_lea.vmem [#allocation1], 32
    %390 = vst [vmem:[%s389] ss:$4 sm:$0xff] %v130
    %s391 = scalar_lea.vmem [#allocation1], 33
    %392 = vst [vmem:[%s391] ss:$4 sm:$0xff] %v131
    %s393 = scalar_lea.vmem [#allocation1], 34
    %394 = vst [vmem:[%s393] ss:$4 sm:$0xff] %v132
    %s395 = scalar_lea.vmem [#allocation1], 35
    %396 = vst [vmem:[%s395] ss:$4 sm:$0xff] %v133
    %v397 = vld.sshfl [vmem:[#allocation1] sm:$0xff pattern:$0x73625140]
    %v398 = vld.sshfl [vmem:[#allocation1 + $0x8] sm:$0xff pattern:$0x73625140]
    %v399 = vld.sshfl [vmem:[#allocation1 + $0x10] sm:$0xff pattern:$0x73625140]
    %v400 = vld.sshfl [vmem:[#allocation1 + $0x18] sm:$0xff pattern:$0x73625140]
    %v401 = vld.sshfl [vmem:[#allocation1 + $0x20] sm:$0xff pattern:$0x73625140]
    %v402 = vld.sshfl [vmem:[#allocation1 + $0x28] sm:$0xff pattern:$0x73625140]
    %v403 = vld.sshfl [vmem:[#allocation1 + $0x30] sm:$0xff pattern:$0x73625140]
    %v404 = vld.sshfl [vmem:[#allocation1 + $0x38] sm:$0xff pattern:$0x73625140]
    %405 = vst [vmem:[#allocation1] ss:$4 sm:$0xff] %v134
    %406 = vst [vmem:[%s383] ss:$4 sm:$0xff] %v135
    %407 = vst [vmem:[%s385] ss:$4 sm:$0xff] %v136
    %408 = vst [vmem:[%s387] ss:$4 sm:$0xff] %v137
    %409 = vst [vmem:[%s389] ss:$4 sm:$0xff] %v138
    %410 = vst [vmem:[%s391] ss:$4 sm:$0xff] %v139
    %411 = vst [vmem:[%s393] ss:$4 sm:$0xff] %v140
    %412 = vst [vmem:[%s395] ss:$4 sm:$0xff] %v141
    %v413 = vld.sshfl [vmem:[#allocation1] sm:$0xff pattern:$0x73625140]
    %v414 = vld.sshfl [vmem:[#allocation1 + $0x8] sm:$0xff pattern:$0x73625140]
    %v415 = vld.sshfl [vmem:[#allocation1 + $0x10] sm:$0xff pattern:$0x73625140]
    %v416 = vld.sshfl [vmem:[#allocation1 + $0x18] sm:$0xff pattern:$0x73625140]
    %v417 = vld.sshfl [vmem:[#allocation1 + $0x20] sm:$0xff pattern:$0x73625140]
    %v418 = vld.sshfl [vmem:[#allocation1 + $0x28] sm:$0xff pattern:$0x73625140]
    %v419 = vld.sshfl [vmem:[#allocation1 + $0x30] sm:$0xff pattern:$0x73625140]
    %v420 = vld.sshfl [vmem:[#allocation1 + $0x38] sm:$0xff pattern:$0x73625140]
    %421 = vst [vmem:[#allocation1] ss:$4 sm:$0xff] %v142
    %422 = vst [vmem:[%s383] ss:$4 sm:$0xff] %v143
    %423 = vst [vmem:[%s385] ss:$4 sm:$0xff] %v144
    %424 = vst [vmem:[%s387] ss:$4 sm:$0xff] %v145
    %425 = vst [vmem:[%s389] ss:$4 sm:$0xff] %v146
    %426 = vst [vmem:[%s391] ss:$4 sm:$0xff] %v147
    %427 = vst [vmem:[%s393] ss:$4 sm:$0xff] %v148
    %428 = vst [vmem:[%s395] ss:$4 sm:$0xff] %v149
    %v429 = vld.sshfl [vmem:[#allocation1] sm:$0xff pattern:$0x73625140]
    %v430 = vld.sshfl [vmem:[#allocation1 + $0x8] sm:$0xff pattern:$0x73625140]
    %v431 = vld.sshfl [vmem:[#allocation1 + $0x10] sm:$0xff pattern:$0x73625140]
    %v432 = vld.sshfl [vmem:[#allocation1 + $0x18] sm:$0xff pattern:$0x73625140]
    %v433 = vld.sshfl [vmem:[#allocation1 + $0x20] sm:$0xff pattern:$0x73625140]
    %v434 = vld.sshfl [vmem:[#allocation1 + $0x28] sm:$0xff pattern:$0x73625140]
    %v435 = vld.sshfl [vmem:[#allocation1 + $0x30] sm:$0xff pattern:$0x73625140]
    %v436 = vld.sshfl [vmem:[#allocation1 + $0x38] sm:$0xff pattern:$0x73625140]
    %437 = vst [vmem:[#allocation1] ss:$4 sm:$0xff] %v150
    %438 = vst [vmem:[%s383] ss:$4 sm:$0xff] %v151
    %439 = vst [vmem:[%s385] ss:$4 sm:$0xff] %v152
    %440 = vst [vmem:[%s387] ss:$4 sm:$0xff] %v153
    %441 = vst [vmem:[%s389] ss:$4 sm:$0xff] %v154
    %442 = vst [vmem:[%s391] ss:$4 sm:$0xff] %v155
    %443 = vst [vmem:[%s393] ss:$4 sm:$0xff] %v156
    %444 = vst [vmem:[%s395] ss:$4 sm:$0xff] %v157
    %v445 = vld.sshfl [vmem:[#allocation1] sm:$0xff pattern:$0x73625140]
    %v446 = vld.sshfl [vmem:[#allocation1 + $0x8] sm:$0xff pattern:$0x73625140]
    %v447 = vld.sshfl [vmem:[#allocation1 + $0x10] sm:$0xff pattern:$0x73625140]
    %v448 = vld.sshfl [vmem:[#allocation1 + $0x18] sm:$0xff pattern:$0x73625140]
    %v449 = vld.sshfl [vmem:[#allocation1 + $0x20] sm:$0xff pattern:$0x73625140]
    %v450 = vld.sshfl [vmem:[#allocation1 + $0x28] sm:$0xff pattern:$0x73625140]
    %v451 = vld.sshfl [vmem:[#allocation1 + $0x30] sm:$0xff pattern:$0x73625140]
    %v452 = vld.sshfl [vmem:[#allocation1 + $0x38] sm:$0xff pattern:$0x73625140]
    %453 = vst [vmem:[#allocation1] ss:$4 sm:$0xff] %v158
    %454 = vst [vmem:[%s383] ss:$4 sm:$0xff] %v159
    %455 = vst [vmem:[%s385] ss:$4 sm:$0xff] %v160
    %456 = vst [vmem:[%s387] ss:$4 sm:$0xff] %v161
    %457 = vst [vmem:[%s389] ss:$4 sm:$0xff] %v162
    %458 = vst [vmem:[%s391] ss:$4 sm:$0xff] %v163
    %459 = vst [vmem:[%s393] ss:$4 sm:$0xff] %v164
    %460 = vst [vmem:[%s395] ss:$4 sm:$0xff] %v165
    %v461 = vld.sshfl [vmem:[#allocation1] sm:$0xff pattern:$0x73625140]
    %v462 = vld.sshfl [vmem:[#allocation1 + $0x8] sm:$0xff pattern:$0x73625140]
    %v463 = vld.sshfl [vmem:[#allocation1 + $0x10] sm:$0xff pattern:$0x73625140]
    %v464 = vld.sshfl [vmem:[#allocation1 + $0x18] sm:$0xff pattern:$0x73625140]
    %v465 = vld.sshfl [vmem:[#allocation1 + $0x20] sm:$0xff pattern:$0x73625140]
    %v466 = vld.sshfl [vmem:[#allocation1 + $0x28] sm:$0xff pattern:$0x73625140]
    %v467 = vld.sshfl [vmem:[#allocation1 + $0x30] sm:$0xff pattern:$0x73625140]
    %v468 = vld.sshfl [vmem:[#allocation1 + $0x38] sm:$0xff pattern:$0x73625140]
    %469 = vst [vmem:[#allocation1] ss:$4 sm:$0xff] %v166
    %470 = vst [vmem:[%s383] ss:$4 sm:$0xff] %v167
    %471 = vst [vmem:[%s385] ss:$4 sm:$0xff] %v168
    %472 = vst [vmem:[%s387] ss:$4 sm:$0xff] %v169
    %473 = vst [vmem:[%s389] ss:$4 sm:$0xff] %v170
    %474 = vst [vmem:[%s391] ss:$4 sm:$0xff] %v171
    %475 = vst [vmem:[%s393] ss:$4 sm:$0xff] %v172
    %476 = vst [vmem:[%s395] ss:$4 sm:$0xff] %v173
    %v477 = vld.sshfl [vmem:[#allocation1] sm:$0xff pattern:$0x73625140]
    %v478 = vld.sshfl [vmem:[#allocation1 + $0x8] sm:$0xff pattern:$0x73625140]
    %v479 = vld.sshfl [vmem:[#allocation1 + $0x10] sm:$0xff pattern:$0x73625140]
    %v480 = vld.sshfl [vmem:[#allocation1 + $0x18] sm:$0xff pattern:$0x73625140]
    %v481 = vld.sshfl [vmem:[#allocation1 + $0x20] sm:$0xff pattern:$0x73625140]
    %v482 = vld.sshfl [vmem:[#allocation1 + $0x28] sm:$0xff pattern:$0x73625140]
    %v483 = vld.sshfl [vmem:[#allocation1 + $0x30] sm:$0xff pattern:$0x73625140]
    %v484 = vld.sshfl [vmem:[#allocation1 + $0x38] sm:$0xff pattern:$0x73625140]
    %485 = vst [vmem:[#allocation1] ss:$4 sm:$0xff] %v174
    %486 = vst [vmem:[%s383] ss:$4 sm:$0xff] %v175
    %487 = vst [vmem:[%s385] ss:$4 sm:$0xff] %v176
    %488 = vst [vmem:[%s387] ss:$4 sm:$0xff] %v177
    %489 = vst [vmem:[%s389] ss:$4 sm:$0xff] %v178
    %490 = vst [vmem:[%s391] ss:$4 sm:$0xff] %v179
    %491 = vst [vmem:[%s393] ss:$4 sm:$0xff] %v180
    %492 = vst [vmem:[%s395] ss:$4 sm:$0xff] %v181
    %v493 = vld.sshfl [vmem:[#allocation1] sm:$0xff pattern:$0x73625140]
    %v494 = vld.sshfl [vmem:[#allocation1 + $0x8] sm:$0xff pattern:$0x73625140]
    %v495 = vld.sshfl [vmem:[#allocation1 + $0x10] sm:$0xff pattern:$0x73625140]
    %v496 = vld.sshfl [vmem:[#allocation1 + $0x18] sm:$0xff pattern:$0x73625140]
    %v497 = vld.sshfl [vmem:[#allocation1 + $0x20] sm:$0xff pattern:$0x73625140]
    %v498 = vld.sshfl [vmem:[#allocation1 + $0x28] sm:$0xff pattern:$0x73625140]
    %v499 = vld.sshfl [vmem:[#allocation1 + $0x30] sm:$0xff pattern:$0x73625140]
    %v500 = vld.sshfl [vmem:[#allocation1 + $0x38] sm:$0xff pattern:$0x73625140]
    %501 = vst [vmem:[#allocation1] ss:$4 sm:$0xff] %v182
    %502 = vst [vmem:[%s383] ss:$4 sm:$0xff] %v183
    %503 = vst [vmem:[%s385] ss:$4 sm:$0xff] %v184
    %504 = vst [vmem:[%s387] ss:$4 sm:$0xff] %v185
    %505 = vst [vmem:[%s389] ss:$4 sm:$0xff] %v186
    %506 = vst [vmem:[%s391] ss:$4 sm:$0xff] %v187
    %507 = vst [vmem:[%s393] ss:$4 sm:$0xff] %v188
    %508 = vst [vmem:[%s395] ss:$4 sm:$0xff] %v189
    %v509 = vld.sshfl [vmem:[#allocation1] sm:$0xff pattern:$0x73625140]
    %v510 = vld.sshfl [vmem:[#allocation1 + $0x8] sm:$0xff pattern:$0x73625140]
    %v511 = vld.sshfl [vmem:[#allocation1 + $0x10] sm:$0xff pattern:$0x73625140]
    %v512 = vld.sshfl [vmem:[#allocation1 + $0x18] sm:$0xff pattern:$0x73625140]
    %v513 = vld.sshfl [vmem:[#allocation1 + $0x20] sm:$0xff pattern:$0x73625140]
    %v514 = vld.sshfl [vmem:[#allocation1 + $0x28] sm:$0xff pattern:$0x73625140]
    %v515 = vld.sshfl [vmem:[#allocation1 + $0x30] sm:$0xff pattern:$0x73625140]
    %v516 = vld.sshfl [vmem:[#allocation1 + $0x38] sm:$0xff pattern:$0x73625140]
    %517 = vst [vmem:[#allocation1] ss:$4 sm:$0xff] %v190
    %518 = vst [vmem:[%s383] ss:$4 sm:$0xff] %v191
    %519 = vst [vmem:[%s385] ss:$4 sm:$0xff] %v192
    %520 = vst [vmem:[%s387] ss:$4 sm:$0xff] %v193
    %521 = vst [vmem:[%s389] ss:$4 sm:$0xff] %v194
    %522 = vst [vmem:[%s391] ss:$4 sm:$0xff] %v195
    %523 = vst [vmem:[%s393] ss:$4 sm:$0xff] %v196
    %524 = vst [vmem:[%s395] ss:$4 sm:$0xff] %v197
    %v525 = vld.sshfl [vmem:[#allocation1] sm:$0xff pattern:$0x73625140]
    %v526 = vld.sshfl [vmem:[#allocation1 + $0x8] sm:$0xff pattern:$0x73625140]
    %v527 = vld.sshfl [vmem:[#allocation1 + $0x10] sm:$0xff pattern:$0x73625140]
    %v528 = vld.sshfl [vmem:[#allocation1 + $0x18] sm:$0xff pattern:$0x73625140]
    %v529 = vld.sshfl [vmem:[#allocation1 + $0x20] sm:$0xff pattern:$0x73625140]
    %v530 = vld.sshfl [vmem:[#allocation1 + $0x28] sm:$0xff pattern:$0x73625140]
    %v531 = vld.sshfl [vmem:[#allocation1 + $0x30] sm:$0xff pattern:$0x73625140]
    %v532 = vld.sshfl [vmem:[#allocation1 + $0x38] sm:$0xff pattern:$0x73625140]
    %533 = vst [vmem:[#allocation1] ss:$4 sm:$0xff] %v198
    %534 = vst [vmem:[%s383] ss:$4 sm:$0xff] %v199
    %535 = vst [vmem:[%s385] ss:$4 sm:$0xff] %v200
    %536 = vst [vmem:[%s387] ss:$4 sm:$0xff] %v201
    %537 = vst [vmem:[%s389] ss:$4 sm:$0xff] %v202
    %538 = vst [vmem:[%s391] ss:$4 sm:$0xff] %v203
    %539 = vst [vmem:[%s393] ss:$4 sm:$0xff] %v204
    %540 = vst [vmem:[%s395] ss:$4 sm:$0xff] %v205
    %v541 = vld.sshfl [vmem:[#allocation1] sm:$0xff pattern:$0x73625140]
    %v542 = vld.sshfl [vmem:[#allocation1 + $0x8] sm:$0xff pattern:$0x73625140]
    %v543 = vld.sshfl [vmem:[#allocation1 + $0x10] sm:$0xff pattern:$0x73625140]
    %v544 = vld.sshfl [vmem:[#allocation1 + $0x18] sm:$0xff pattern:$0x73625140]
    %v545 = vld.sshfl [vmem:[#allocation1 + $0x20] sm:$0xff pattern:$0x73625140]
    %v546 = vld.sshfl [vmem:[#allocation1 + $0x28] sm:$0xff pattern:$0x73625140]
    %v547 = vld.sshfl [vmem:[#allocation1 + $0x30] sm:$0xff pattern:$0x73625140]
    %v548 = vld.sshfl [vmem:[#allocation1 + $0x38] sm:$0xff pattern:$0x73625140]
    %549 = vst [vmem:[#allocation1] ss:$4 sm:$0xff] %v206
    %550 = vst [vmem:[%s383] ss:$4 sm:$0xff] %v207
    %551 = vst [vmem:[%s385] ss:$4 sm:$0xff] %v208
    %552 = vst [vmem:[%s387] ss:$4 sm:$0xff] %v209
    %553 = vst [vmem:[%s389] ss:$4 sm:$0xff] %v210
    %554 = vst [vmem:[%s391] ss:$4 sm:$0xff] %v211
    %555 = vst [vmem:[%s393] ss:$4 sm:$0xff] %v212
    %556 = vst [vmem:[%s395] ss:$4 sm:$0xff] %v213
    %v557 = vld.sshfl [vmem:[#allocation1] sm:$0xff pattern:$0x73625140]
    %v558 = vld.sshfl [vmem:[#allocation1 + $0x8] sm:$0xff pattern:$0x73625140]
    %v559 = vld.sshfl [vmem:[#allocation1 + $0x10] sm:$0xff pattern:$0x73625140]
    %v560 = vld.sshfl [vmem:[#allocation1 + $0x18] sm:$0xff pattern:$0x73625140]
    %v561 = vld.sshfl [vmem:[#allocation1 + $0x20] sm:$0xff pattern:$0x73625140]
    %v562 = vld.sshfl [vmem:[#allocation1 + $0x28] sm:$0xff pattern:$0x73625140]
    %v563 = vld.sshfl [vmem:[#allocation1 + $0x30] sm:$0xff pattern:$0x73625140]
    %v564 = vld.sshfl [vmem:[#allocation1 + $0x38] sm:$0xff pattern:$0x73625140]
    %565 = vst [vmem:[#allocation1] ss:$4 sm:$0xff] %v214
    %566 = vst [vmem:[%s383] ss:$4 sm:$0xff] %v215
    %567 = vst [vmem:[%s385] ss:$4 sm:$0xff] %v216
    %568 = vst [vmem:[%s387] ss:$4 sm:$0xff] %v217
    %569 = vst [vmem:[%s389] ss:$4 sm:$0xff] %v218
    %570 = vst [vmem:[%s391] ss:$4 sm:$0xff] %v219
    %571 = vst [vmem:[%s393] ss:$4 sm:$0xff] %v220
    %572 = vst [vmem:[%s395] ss:$4 sm:$0xff] %v221
    %v573 = vld.sshfl [vmem:[#allocation1] sm:$0xff pattern:$0x73625140]
    %v574 = vld.sshfl [vmem:[#allocation1 + $0x8] sm:$0xff pattern:$0x73625140]
    %v575 = vld.sshfl [vmem:[#allocation1 + $0x10] sm:$0xff pattern:$0x73625140]
    %v576 = vld.sshfl [vmem:[#allocation1 + $0x18] sm:$0xff pattern:$0x73625140]
    %v577 = vld.sshfl [vmem:[#allocation1 + $0x20] sm:$0xff pattern:$0x73625140]
    %v578 = vld.sshfl [vmem:[#allocation1 + $0x28] sm:$0xff pattern:$0x73625140]
    %v579 = vld.sshfl [vmem:[#allocation1 + $0x30] sm:$0xff pattern:$0x73625140]
    %v580 = vld.sshfl [vmem:[#allocation1 + $0x38] sm:$0xff pattern:$0x73625140]
    %581 = vst [vmem:[#allocation1] ss:$4 sm:$0xff] %v222
    %582 = vst [vmem:[%s383] ss:$4 sm:$0xff] %v223
    %583 = vst [vmem:[%s385] ss:$4 sm:$0xff] %v224
    %584 = vst [vmem:[%s387] ss:$4 sm:$0xff] %v225
    %585 = vst [vmem:[%s389] ss:$4 sm:$0xff] %v226
    %586 = vst [vmem:[%s391] ss:$4 sm:$0xff] %v227
    %587 = vst [vmem:[%s393] ss:$4 sm:$0xff] %v228
    %588 = vst [vmem:[%s395] ss:$4 sm:$0xff] %v229
    %v589 = vld.sshfl [vmem:[#allocation1] sm:$0xff pattern:$0x73625140]
    %v590 = vld.sshfl [vmem:[#allocation1 + $0x8] sm:$0xff pattern:$0x73625140]
    %v591 = vld.sshfl [vmem:[#allocation1 + $0x10] sm:$0xff pattern:$0x73625140]
    %v592 = vld.sshfl [vmem:[#allocation1 + $0x18] sm:$0xff pattern:$0x73625140]
    %v593 = vld.sshfl [vmem:[#allocation1 + $0x20] sm:$0xff pattern:$0x73625140]
    %v594 = vld.sshfl [vmem:[#allocation1 + $0x28] sm:$0xff pattern:$0x73625140]
    %v595 = vld.sshfl [vmem:[#allocation1 + $0x30] sm:$0xff pattern:$0x73625140]
    %v596 = vld.sshfl [vmem:[#allocation1 + $0x38] sm:$0xff pattern:$0x73625140]
    %597 = vst [vmem:[#allocation1] ss:$4 sm:$0xff] %v230
    %598 = vst [vmem:[%s383] ss:$4 sm:$0xff] %v231
    %599 = vst [vmem:[%s385] ss:$4 sm:$0xff] %v232
    %600 = vst [vmem:[%s387] ss:$4 sm:$0xff] %v233
    %601 = vst [vmem:[%s389] ss:$4 sm:$0xff] %v234
    %602 = vst [vmem:[%s391] ss:$4 sm:$0xff] %v235
    %603 = vst [vmem:[%s393] ss:$4 sm:$0xff] %v236
    %604 = vst [vmem:[%s395] ss:$4 sm:$0xff] %v237
    %v605 = vld.sshfl [vmem:[#allocation1] sm:$0xff pattern:$0x73625140]
    %v606 = vld.sshfl [vmem:[#allocation1 + $0x8] sm:$0xff pattern:$0x73625140]
    %v607 = vld.sshfl [vmem:[#allocation1 + $0x10] sm:$0xff pattern:$0x73625140]
    %v608 = vld.sshfl [vmem:[#allocation1 + $0x18] sm:$0xff pattern:$0x73625140]
    %v609 = vld.sshfl [vmem:[#allocation1 + $0x20] sm:$0xff pattern:$0x73625140]
    %v610 = vld.sshfl [vmem:[#allocation1 + $0x28] sm:$0xff pattern:$0x73625140]
    %v611 = vld.sshfl [vmem:[#allocation1 + $0x30] sm:$0xff pattern:$0x73625140]
    %v612 = vld.sshfl [vmem:[#allocation1 + $0x38] sm:$0xff pattern:$0x73625140]
    %613 = vst [vmem:[#allocation1] ss:$4 sm:$0xff] %v238
    %614 = vst [vmem:[%s383] ss:$4 sm:$0xff] %v239
    %615 = vst [vmem:[%s385] ss:$4 sm:$0xff] %v240
    %616 = vst [vmem:[%s387] ss:$4 sm:$0xff] %v241
    %617 = vst [vmem:[%s389] ss:$4 sm:$0xff] %v242
    %618 = vst [vmem:[%s391] ss:$4 sm:$0xff] %v243
    %619 = vst [vmem:[%s393] ss:$4 sm:$0xff] %v244
    %620 = vst [vmem:[%s395] ss:$4 sm:$0xff] %v245
    %v621 = vld.sshfl [vmem:[#allocation1] sm:$0xff pattern:$0x73625140]
    %v622 = vld.sshfl [vmem:[#allocation1 + $0x8] sm:$0xff pattern:$0x73625140]
    %v623 = vld.sshfl [vmem:[#allocation1 + $0x10] sm:$0xff pattern:$0x73625140]
    %v624 = vld.sshfl [vmem:[#allocation1 + $0x18] sm:$0xff pattern:$0x73625140]
    %v625 = vld.sshfl [vmem:[#allocation1 + $0x20] sm:$0xff pattern:$0x73625140]
    %v626 = vld.sshfl [vmem:[#allocation1 + $0x28] sm:$0xff pattern:$0x73625140]
    %v627 = vld.sshfl [vmem:[#allocation1 + $0x30] sm:$0xff pattern:$0x73625140]
    %v628 = vld.sshfl [vmem:[#allocation1 + $0x38] sm:$0xff pattern:$0x73625140]
    %629 = vst [vmem:[#allocation1] ss:$4 sm:$0xff] %v246
    %630 = vst [vmem:[%s383] ss:$4 sm:$0xff] %v247
    %631 = vst [vmem:[%s385] ss:$4 sm:$0xff] %v248
    %632 = vst [vmem:[%s387] ss:$4 sm:$0xff] %v249
    %633 = vst [vmem:[%s389] ss:$4 sm:$0xff] %v250
    %634 = vst [vmem:[%s391] ss:$4 sm:$0xff] %v251
    %635 = vst [vmem:[%s393] ss:$4 sm:$0xff] %v252
    %636 = vst [vmem:[%s395] ss:$4 sm:$0xff] %v253
    %v637 = vld.sshfl [vmem:[#allocation1] sm:$0xff pattern:$0x73625140]
    %v638 = vld.sshfl [vmem:[#allocation1 + $0x8] sm:$0xff pattern:$0x73625140]
    %v639 = vld.sshfl [vmem:[#allocation1 + $0x10] sm:$0xff pattern:$0x73625140]
    %v640 = vld.sshfl [vmem:[#allocation1 + $0x18] sm:$0xff pattern:$0x73625140]
    %v641 = vld.sshfl [vmem:[#allocation1 + $0x20] sm:$0xff pattern:$0x73625140]
    %v642 = vld.sshfl [vmem:[#allocation1 + $0x28] sm:$0xff pattern:$0x73625140]
    %v643 = vld.sshfl [vmem:[#allocation1 + $0x30] sm:$0xff pattern:$0x73625140]
    %v644 = vld.sshfl [vmem:[#allocation1 + $0x38] sm:$0xff pattern:$0x73625140]
    %v773 = vpack.c.bf16 %v401, %v397
    %v774 = vpack.c.bf16 %v402, %v398
    %v775 = vpack.c.bf16 %v403, %v399
    %v776 = vpack.c.bf16 %v404, %v400
    %v777 = vpack.c.bf16 %v417, %v413
    %v778 = vpack.c.bf16 %v418, %v414
    %v779 = vpack.c.bf16 %v419, %v415
    %v780 = vpack.c.bf16 %v420, %v416
    %v781 = vpack.c.bf16 %v433, %v429
    %v782 = vpack.c.bf16 %v434, %v430
    %v783 = vpack.c.bf16 %v435, %v431
    %v784 = vpack.c.bf16 %v436, %v432
    %v785 = vpack.c.bf16 %v449, %v445
    %v786 = vpack.c.bf16 %v450, %v446
    %v787 = vpack.c.bf16 %v451, %v447
    %v788 = vpack.c.bf16 %v452, %v448
    %v789 = vpack.c.bf16 %v465, %v461
    %v790 = vpack.c.bf16 %v466, %v462
    %v791 = vpack.c.bf16 %v467, %v463
    %v792 = vpack.c.bf16 %v468, %v464
    %v793 = vpack.c.bf16 %v481, %v477
    %v794 = vpack.c.bf16 %v482, %v478
    %v795 = vpack.c.bf16 %v483, %v479
    %v796 = vpack.c.bf16 %v484, %v480
    %v797 = vpack.c.bf16 %v497, %v493
    %v798 = vpack.c.bf16 %v498, %v494
    %v799 = vpack.c.bf16 %v499, %v495
    %v800 = vpack.c.bf16 %v500, %v496
    %v801 = vpack.c.bf16 %v513, %v509
    %v802 = vpack.c.bf16 %v514, %v510
    %v803 = vpack.c.bf16 %v515, %v511
    %v804 = vpack.c.bf16 %v516, %v512
    %v805 = vpack.c.bf16 %v529, %v525
    %v806 = vpack.c.bf16 %v530, %v526
    %v807 = vpack.c.bf16 %v531, %v527
    %v808 = vpack.c.bf16 %v532, %v528
    %v809 = vpack.c.bf16 %v545, %v541
    %v810 = vpack.c.bf16 %v546, %v542
    %v811 = vpack.c.bf16 %v547, %v543
    %v812 = vpack.c.bf16 %v548, %v544
    %v813 = vpack.c.bf16 %v561, %v557
    %v814 = vpack.c.bf16 %v562, %v558
    %v815 = vpack.c.bf16 %v563, %v559
    %v816 = vpack.c.bf16 %v564, %v560
    %v817 = vpack.c.bf16 %v577, %v573
    %v818 = vpack.c.bf16 %v578, %v574
    %v819 = vpack.c.bf16 %v579, %v575
    %v820 = vpack.c.bf16 %v580, %v576
    %v821 = vpack.c.bf16 %v593, %v589
    %v822 = vpack.c.bf16 %v594, %v590
    %v823 = vpack.c.bf16 %v595, %v591
    %v824 = vpack.c.bf16 %v596, %v592
    %v825 = vpack.c.bf16 %v609, %v605
    %v826 = vpack.c.bf16 %v610, %v606
    %v827 = vpack.c.bf16 %v611, %v607
    %v828 = vpack.c.bf16 %v612, %v608
    %v829 = vpack.c.bf16 %v625, %v621
    %v830 = vpack.c.bf16 %v626, %v622
    %v831 = vpack.c.bf16 %v627, %v623
    %v832 = vpack.c.bf16 %v628, %v624
    %v833 = vpack.c.bf16 %v641, %v637
    %v834 = vpack.c.bf16 %v642, %v638
    %v835 = vpack.c.bf16 %v643, %v639
    %v836 = vpack.c.bf16 %v644, %v640
    %v837 = vld [vmem:[#allocation5] sm:$0xff]
    %v838 = vld [vmem:[#allocation5 + $0x8] sm:$0xff]
    %v839 = vld [vmem:[#allocation5 + $0x10] sm:$0xff]
    %v840 = vld [vmem:[#allocation5 + $0x18] sm:$0xff]
    %v841 = vld [vmem:[#allocation5 + $0x20] sm:$0xff]
    %v842 = vld [vmem:[#allocation5 + $0x28] sm:$0xff]
    %v843 = vld [vmem:[#allocation5 + $0x30] sm:$0xff]
    %v844 = vld [vmem:[#allocation5 + $0x38] sm:$0xff]
    %v845 = vld [vmem:[#allocation5 + $0x40] sm:$0xff]
    %v846 = vld [vmem:[#allocation5 + $0x48] sm:$0xff]
    %v847 = vld [vmem:[#allocation5 + $0x50] sm:$0xff]
    %v848 = vld [vmem:[#allocation5 + $0x58] sm:$0xff]
    %v849 = vld [vmem:[#allocation5 + $0x60] sm:$0xff]
    %v850 = vld [vmem:[#allocation5 + $0x68] sm:$0xff]
    %v851 = vld [vmem:[#allocation5 + $0x70] sm:$0xff]
    %v852 = vld [vmem:[#allocation5 + $0x78] sm:$0xff]
    %v853 = vld [vmem:[#allocation5 + $0x80] sm:$0xff]
    %v854 = vld [vmem:[#allocation5 + $0x88] sm:$0xff]
    %v855 = vld [vmem:[#allocation5 + $0x90] sm:$0xff]
    %v856 = vld [vmem:[#allocation5 + $0x98] sm:$0xff]
    %v857 = vld [vmem:[#allocation5 + $0xa0] sm:$0xff]
    %v858 = vld [vmem:[#allocation5 + $0xa8] sm:$0xff]
    %v859 = vld [vmem:[#allocation5 + $0xb0] sm:$0xff]
    %v860 = vld [vmem:[#allocation5 + $0xb8] sm:$0xff]
    %v861 = vld [vmem:[#allocation5 + $0xc0] sm:$0xff]
    %v862 = vld [vmem:[#allocation5 + $0xc8] sm:$0xff]
    %v863 = vld [vmem:[#allocation5 + $0xd0] sm:$0xff]
    %v864 = vld [vmem:[#allocation5 + $0xd8] sm:$0xff]
    %v865 = vld [vmem:[#allocation5 + $0xe0] sm:$0xff]
    %v866 = vld [vmem:[#allocation5 + $0xe8] sm:$0xff]
    %v867 = vld [vmem:[#allocation5 + $0xf0] sm:$0xff]
    %v868 = vld [vmem:[#allocation5 + $0xf8] sm:$0xff]
    %v869 = vld [vmem:[#allocation5 + $0x100] sm:$0xff]
    %v870 = vld [vmem:[#allocation5 + $0x108] sm:$0xff]
    %v871 = vld [vmem:[#allocation5 + $0x110] sm:$0xff]
    %v872 = vld [vmem:[#allocation5 + $0x118] sm:$0xff]
    %v873 = vld [vmem:[#allocation5 + $0x120] sm:$0xff]
    %v874 = vld [vmem:[#allocation5 + $0x128] sm:$0xff]
    %v875 = vld [vmem:[#allocation5 + $0x130] sm:$0xff]
    %v876 = vld [vmem:[#allocation5 + $0x138] sm:$0xff]
    %v877 = vld [vmem:[#allocation5 + $0x140] sm:$0xff]
    %v878 = vld [vmem:[#allocation5 + $0x148] sm:$0xff]
    %v879 = vld [vmem:[#allocation5 + $0x150] sm:$0xff]
    %v880 = vld [vmem:[#allocation5 + $0x158] sm:$0xff]
    %v881 = vld [vmem:[#allocation5 + $0x160] sm:$0xff]
    %v882 = vld [vmem:[#allocation5 + $0x168] sm:$0xff]
    %v883 = vld [vmem:[#allocation5 + $0x170] sm:$0xff]
    %v884 = vld [vmem:[#allocation5 + $0x178] sm:$0xff]
    %v885 = vld [vmem:[#allocation5 + $0x180] sm:$0xff]
    %v886 = vld [vmem:[#allocation7] sm:$0x3]
    %v888 = vperm.slane %v886, 0
    %v889 = vperm.slane %v886, 1
    %v941 = vunpack.c.l.b16 %v837
    %v942 = vunpack.c.h.b16 %v837
    %v943 = vunpack.c.l.b16 %v838
    %v944 = vunpack.c.h.b16 %v838
    %v945 = vunpack.c.l.b16 %v839
    %v946 = vunpack.c.h.b16 %v839
    %v947 = vunpack.c.l.b16 %v840
    %v948 = vunpack.c.h.b16 %v840
    %v949 = vunpack.c.l.b16 %v841
    %v950 = vunpack.c.h.b16 %v841
    %v951 = vunpack.c.l.b16 %v842
    %v952 = vunpack.c.h.b16 %v842
    %v953 = vunpack.c.l.b16 %v843
    %v954 = vunpack.c.h.b16 %v843
    %v955 = vunpack.c.l.b16 %v844
    %v956 = vunpack.c.h.b16 %v844
    %v957 = vunpack.c.l.b16 %v845
    %v958 = vunpack.c.h.b16 %v845
    %v959 = vunpack.c.l.b16 %v846
    %v960 = vunpack.c.h.b16 %v846
    %v961 = vunpack.c.l.b16 %v847
    %v962 = vunpack.c.h.b16 %v847
    %v963 = vunpack.c.l.b16 %v848
    %v964 = vunpack.c.h.b16 %v848
    %v965 = vunpack.c.l.b16 %v849
    %v966 = vunpack.c.h.b16 %v849
    %v967 = vunpack.c.l.b16 %v850
    %v968 = vunpack.c.h.b16 %v850
    %v969 = vunpack.c.l.b16 %v851
    %v970 = vunpack.c.h.b16 %v851
    %v971 = vunpack.c.l.b16 %v852
    %v972 = vunpack.c.h.b16 %v852
    %v973 = vunpack.c.l.b16 %v853
    %v974 = vunpack.c.h.b16 %v853
    %v975 = vunpack.c.l.b16 %v854
    %v976 = vunpack.c.h.b16 %v854
    %v977 = vunpack.c.l.b16 %v855
    %v978 = vunpack.c.h.b16 %v855
    %v979 = vunpack.c.l.b16 %v856
    %v980 = vunpack.c.h.b16 %v856
    %v981 = vunpack.c.l.b16 %v857
    %v982 = vunpack.c.h.b16 %v857
    %v983 = vunpack.c.l.b16 %v858
    %v984 = vunpack.c.h.b16 %v858
    %v985 = vunpack.c.l.b16 %v859
    %v986 = vunpack.c.h.b16 %v859
    %v987 = vunpack.c.l.b16 %v860
    %v988 = vunpack.c.h.b16 %v860
    %v989 = vunpack.c.l.b16 %v861
    %v990 = vunpack.c.h.b16 %v861
    %v991 = vunpack.c.l.b16 %v862
    %v992 = vunpack.c.h.b16 %v862
    %v993 = vunpack.c.l.b16 %v863
    %v994 = vunpack.c.h.b16 %v863
    %v995 = vunpack.c.l.b16 %v864
    %v996 = vunpack.c.h.b16 %v864
    %v997 = vunpack.c.l.b16 %v865
    %v998 = vunpack.c.h.b16 %v865
    %v999 = vunpack.c.l.b16 %v866
    %v1000 = vunpack.c.h.b16 %v866
    %v1001 = vunpack.c.l.b16 %v867
    %v1002 = vunpack.c.h.b16 %v867
    %v1003 = vunpack.c.l.b16 %v868
    %v1004 = vunpack.c.h.b16 %v868
    %v1005 = vunpack.c.l.b16 %v869
    %v1006 = vunpack.c.h.b16 %v869
    %v1007 = vunpack.c.l.b16 %v870
    %v1008 = vunpack.c.h.b16 %v870
    %v1009 = vunpack.c.l.b16 %v871
    %v1010 = vunpack.c.h.b16 %v871
    %v1011 = vunpack.c.l.b16 %v872
    %v1012 = vunpack.c.h.b16 %v872
    %v1013 = vunpack.c.l.b16 %v873
    %v1014 = vunpack.c.h.b16 %v873
    %v1015 = vunpack.c.l.b16 %v874
    %v1016 = vunpack.c.h.b16 %v874
    %v1017 = vunpack.c.l.b16 %v875
    %v1018 = vunpack.c.h.b16 %v875
    %v1019 = vunpack.c.l.b16 %v876
    %v1020 = vunpack.c.h.b16 %v876
    %v1021 = vunpack.c.l.b16 %v877
    %v1022 = vunpack.c.h.b16 %v877
    %v1023 = vunpack.c.l.b16 %v878
    %v1024 = vunpack.c.h.b16 %v878
    %v1025 = vunpack.c.l.b16 %v879
    %v1026 = vunpack.c.h.b16 %v879
    %v1027 = vunpack.c.l.b16 %v880
    %v1028 = vunpack.c.h.b16 %v880
    %v1029 = vunpack.c.l.b16 %v881
    %v1030 = vunpack.c.h.b16 %v881
    %v1031 = vunpack.c.l.b16 %v882
    %v1032 = vunpack.c.h.b16 %v882
    %v1033 = vunpack.c.l.b16 %v883
    %v1034 = vunpack.c.h.b16 %v883
    %v1035 = vunpack.c.l.b16 %v884
    %v1036 = vunpack.c.h.b16 %v884
    %v1037 = vunpack.c.l.b16 %v885
    %v1038 = vunpack.c.h.b16 %v885
    %v1039 = vpack.c.b16 %v943, %v941
    %v1040 = vpack.c.b16 %v944, %v942
    %v1041 = vpack.c.b16 %v947, %v945
    %v1042 = vpack.c.b16 %v948, %v946
    %v1043 = vpack.c.b16 %v951, %v949
    %v1044 = vpack.c.b16 %v952, %v950
    %v1045 = vpack.c.b16 %v955, %v953
    %v1046 = vpack.c.b16 %v956, %v954
    %v1047 = vpack.c.b16 %v959, %v957
    %v1048 = vpack.c.b16 %v960, %v958
    %v1049 = vpack.c.b16 %v963, %v961
    %v1050 = vpack.c.b16 %v964, %v962
    %v1051 = vpack.c.b16 %v967, %v965
    %v1052 = vpack.c.b16 %v968, %v966
    %v1053 = vpack.c.b16 %v971, %v969
    %v1054 = vpack.c.b16 %v972, %v970
    %v1055 = vpack.c.b16 %v975, %v973
    %v1056 = vpack.c.b16 %v976, %v974
    %v1057 = vpack.c.b16 %v979, %v977
    %v1058 = vpack.c.b16 %v980, %v978
    %v1059 = vpack.c.b16 %v983, %v981
    %v1060 = vpack.c.b16 %v984, %v982
    %v1061 = vpack.c.b16 %v987, %v985
    %v1062 = vpack.c.b16 %v988, %v986
    %v1063 = vpack.c.b16 %v991, %v989
    %v1064 = vpack.c.b16 %v992, %v990
    %v1065 = vpack.c.b16 %v995, %v993
    %v1066 = vpack.c.b16 %v996, %v994
    %v1067 = vpack.c.b16 %v999, %v997
    %v1068 = vpack.c.b16 %v1000, %v998
    %v1069 = vpack.c.b16 %v1003, %v1001
    %v1070 = vpack.c.b16 %v1004, %v1002
    %v1071 = vpack.c.b16 %v1007, %v1005
    %v1072 = vpack.c.b16 %v1008, %v1006
    %v1073 = vpack.c.b16 %v1011, %v1009
    %v1074 = vpack.c.b16 %v1012, %v1010
    %v1075 = vpack.c.b16 %v1015, %v1013
    %v1076 = vpack.c.b16 %v1016, %v1014
    %v1077 = vpack.c.b16 %v1019, %v1017
    %v1078 = vpack.c.b16 %v1020, %v1018
    %v1079 = vpack.c.b16 %v1023, %v1021
    %v1080 = vpack.c.b16 %v1024, %v1022
    %v1081 = vpack.c.b16 %v1027, %v1025
    %v1082 = vpack.c.b16 %v1028, %v1026
    %v1083 = vpack.c.b16 %v1031, %v1029
    %v1084 = vpack.c.b16 %v1032, %v1030
    %v1085 = vpack.c.b16 %v1035, %v1033
    %v1086 = vpack.c.b16 %v1036, %v1034
    %v1087 = vpack.c.b16 %v1037, %v1037
    %v1088 = vpack.c.b16 %v1038, %v1038
    %vm1137 = vcmask 64512
    %v1139 = vsel %vm1137, %v776, 0
    %v1142 = vsel %vm1137, %v780, 0
    %v1145 = vsel %vm1137, %v784, 0
    %v1148 = vsel %vm1137, %v788, 0
    %v1151 = vsel %vm1137, %v792, 0
    %v1154 = vsel %vm1137, %v796, 0
    %v1157 = vsel %vm1137, %v800, 0
    %v1160 = vsel %vm1137, %v804, 0
    %v1163 = vsel %vm1137, %v808, 0
    %v1166 = vsel %vm1137, %v812, 0
    %v1169 = vsel %vm1137, %v816, 0
    %v1172 = vsel %vm1137, %v820, 0
    %v1175 = vsel %vm1137, %v824, 0
    %v1178 = vsel %vm1137, %v828, 0
    %v1181 = vsel %vm1137, %v832, 0
    %v1184 = vsel %vm1137, %v836, 0
    %vm1186 = vcmask 1043456
    %v1188 = vsel %vm1186, %v1087, 0
    %v1191 = vsel %vm1186, %v1088, 0
    %1193 = vmatpush.bf16.msra.mxu0 %v1053
    %1194 = vmatpush.bf16.msra.mxu0 %v1051
    %1195 = vmatpush.bf16.msra.mxu0 %v1049
    %1196 = vmatpush.bf16.msra.mxu0 %v1047
    %1197 = vmatpush.bf16.msra.mxu0 %v1045
    %1198 = vmatpush.bf16.msra.mxu0 %v1043
    %1199 = vmatpush.bf16.msra.mxu0 %v1041
    %1200 = vmatpush.bf16.msra.mxu0 %v1039
    %1201 = vmatmul.bf16.gmra.mxu0 %v773
    %v1202 = vpop.f32.mrf.mxu0
    %v1203 = vadd.f32 %v888, %v1202
    %v1204 = vpop.f32.mrf.mxu0
    %v1205 = vadd.f32 %v888, %v1204
    %1206 = vmatmul.bf16.gmra.mxu0 %v777
    %v1207 = vpop.f32.mrf.mxu0
    %v1208 = vadd.f32 %v888, %v1207
    %v1209 = vpop.f32.mrf.mxu0
    %v1210 = vadd.f32 %v888, %v1209
    %1211 = vmatmul.bf16.gmra.mxu0 %v781
    %v1212 = vpop.f32.mrf.mxu0
    %v1213 = vadd.f32 %v888, %v1212
    %v1214 = vpop.f32.mrf.mxu0
    %v1215 = vadd.f32 %v888, %v1214
    %1216 = vmatmul.bf16.gmra.mxu0 %v785
    %v1217 = vpop.f32.mrf.mxu0
    %v1218 = vadd.f32 %v888, %v1217
    %v1219 = vpop.f32.mrf.mxu0
    %v1220 = vadd.f32 %v888, %v1219
    %1221 = vmatmul.bf16.gmra.mxu0 %v789
    %v1222 = vpop.f32.mrf.mxu0
    %v1223 = vadd.f32 %v888, %v1222
    %v1224 = vpop.f32.mrf.mxu0
    %v1225 = vadd.f32 %v888, %v1224
    %1226 = vmatmul.bf16.gmra.mxu0 %v793
    %v1227 = vpop.f32.mrf.mxu0
    %v1228 = vadd.f32 %v888, %v1227
    %v1229 = vpop.f32.mrf.mxu0
    %v1230 = vadd.f32 %v888, %v1229
    %1231 = vmatmul.bf16.gmra.mxu0 %v797
    %v1232 = vpop.f32.mrf.mxu0
    %v1233 = vadd.f32 %v888, %v1232
    %v1234 = vpop.f32.mrf.mxu0
    %v1235 = vadd.f32 %v888, %v1234
    %1236 = vmatmul.bf16.gmra.mxu0 %v801
    %v1237 = vpop.f32.mrf.mxu0
    %v1238 = vadd.f32 %v888, %v1237
    %v1239 = vpop.f32.mrf.mxu0
    %v1240 = vadd.f32 %v888, %v1239
    %1241 = vmatmul.bf16.gmra.mxu0 %v805
    %v1242 = vpop.f32.mrf.mxu0
    %v1243 = vadd.f32 %v888, %v1242
    %v1244 = vpop.f32.mrf.mxu0
    %v1245 = vadd.f32 %v888, %v1244
    %1246 = vmatmul.bf16.gmra.mxu0 %v809
    %v1247 = vpop.f32.mrf.mxu0
    %v1248 = vadd.f32 %v888, %v1247
    %v1249 = vpop.f32.mrf.mxu0
    %v1250 = vadd.f32 %v888, %v1249
    %1251 = vmatmul.bf16.gmra.mxu0 %v813
    %v1252 = vpop.f32.mrf.mxu0
    %v1253 = vadd.f32 %v888, %v1252
    %v1254 = vpop.f32.mrf.mxu0
    %v1255 = vadd.f32 %v888, %v1254
    %1256 = vmatmul.bf16.gmra.mxu0 %v817
    %v1257 = vpop.f32.mrf.mxu0
    %v1258 = vadd.f32 %v888, %v1257
    %v1259 = vpop.f32.mrf.mxu0
    %v1260 = vadd.f32 %v888, %v1259
    %1261 = vmatmul.bf16.gmra.mxu0 %v821
    %v1262 = vpop.f32.mrf.mxu0
    %v1263 = vadd.f32 %v888, %v1262
    %v1264 = vpop.f32.mrf.mxu0
    %v1265 = vadd.f32 %v888, %v1264
    %1266 = vmatmul.bf16.gmra.mxu0 %v825
    %v1267 = vpop.f32.mrf.mxu0
    %v1268 = vadd.f32 %v888, %v1267
    %v1269 = vpop.f32.mrf.mxu0
    %v1270 = vadd.f32 %v888, %v1269
    %1271 = vmatmul.bf16.gmra.mxu0 %v829
    %v1272 = vpop.f32.mrf.mxu0
    %v1273 = vadd.f32 %v888, %v1272
    %v1274 = vpop.f32.mrf.mxu0
    %v1275 = vadd.f32 %v888, %v1274
    %1276 = vmatmul.bf16.gmra.mxu0 %v833
    %v1277 = vpop.f32.mrf.mxu0
    %v1278 = vadd.f32 %v888, %v1277
    %v1279 = vpop.f32.mrf.mxu0
    %v1280 = vadd.f32 %v888, %v1279
    %1281 = vdwg.mxu0
    %1282 = vmatpush.bf16.msra.mxu0 %v1069
    %1283 = vmatpush.bf16.msra.mxu0 %v1067
    %1284 = vmatpush.bf16.msra.mxu0 %v1065
    %1285 = vmatpush.bf16.msra.mxu0 %v1063
    %1286 = vmatpush.bf16.msra.mxu0 %v1061
    %1287 = vmatpush.bf16.msra.mxu0 %v1059
    %1288 = vmatpush.bf16.msra.mxu0 %v1057
    %1289 = vmatpush.bf16.msra.mxu0 %v1055
    %1290 = vmatmul.bf16.gmra.mxu0 %v774
    %v1291 = vpop.f32.mrf.mxu0
    %v1292 = vadd.f32 %v1203, %v1291
    %v1293 = vpop.f32.mrf.mxu0
    %v1294 = vadd.f32 %v1205, %v1293
    %1295 = vmatmul.bf16.gmra.mxu0 %v778
    %v1296 = vpop.f32.mrf.mxu0
    %v1297 = vadd.f32 %v1208, %v1296
    %v1298 = vpop.f32.mrf.mxu0
    %v1299 = vadd.f32 %v1210, %v1298
    %1300 = vmatmul.bf16.gmra.mxu0 %v782
    %v1301 = vpop.f32.mrf.mxu0
    %v1302 = vadd.f32 %v1213, %v1301
    %v1303 = vpop.f32.mrf.mxu0
    %v1304 = vadd.f32 %v1215, %v1303
    %1305 = vmatmul.bf16.gmra.mxu0 %v786
    %v1306 = vpop.f32.mrf.mxu0
    %v1307 = vadd.f32 %v1218, %v1306
    %v1308 = vpop.f32.mrf.mxu0
    %v1309 = vadd.f32 %v1220, %v1308
    %1310 = vmatmul.bf16.gmra.mxu0 %v790
    %v1311 = vpop.f32.mrf.mxu0
    %v1312 = vadd.f32 %v1223, %v1311
    %v1313 = vpop.f32.mrf.mxu0
    %v1314 = vadd.f32 %v1225, %v1313
    %1315 = vmatmul.bf16.gmra.mxu0 %v794
    %v1316 = vpop.f32.mrf.mxu0
    %v1317 = vadd.f32 %v1228, %v1316
    %v1318 = vpop.f32.mrf.mxu0
    %v1319 = vadd.f32 %v1230, %v1318
    %1320 = vmatmul.bf16.gmra.mxu0 %v798
    %v1321 = vpop.f32.mrf.mxu0
    %v1322 = vadd.f32 %v1233, %v1321
    %v1323 = vpop.f32.mrf.mxu0
    %v1324 = vadd.f32 %v1235, %v1323
    %1325 = vmatmul.bf16.gmra.mxu0 %v802
    %v1326 = vpop.f32.mrf.mxu0
    %v1327 = vadd.f32 %v1238, %v1326
    %v1328 = vpop.f32.mrf.mxu0
    %v1329 = vadd.f32 %v1240, %v1328
    %1330 = vmatmul.bf16.gmra.mxu0 %v806
    %v1331 = vpop.f32.mrf.mxu0
    %v1332 = vadd.f32 %v1243, %v1331
    %v1333 = vpop.f32.mrf.mxu0
    %v1334 = vadd.f32 %v1245, %v1333
    %1335 = vmatmul.bf16.gmra.mxu0 %v810
    %v1336 = vpop.f32.mrf.mxu0
    %v1337 = vadd.f32 %v1248, %v1336
    %v1338 = vpop.f32.mrf.mxu0
    %v1339 = vadd.f32 %v1250, %v1338
    %1340 = vmatmul.bf16.gmra.mxu0 %v814
    %v1341 = vpop.f32.mrf.mxu0
    %v1342 = vadd.f32 %v1253, %v1341
    %v1343 = vpop.f32.mrf.mxu0
    %v1344 = vadd.f32 %v1255, %v1343
    %1345 = vmatmul.bf16.gmra.mxu0 %v818
    %v1346 = vpop.f32.mrf.mxu0
    %v1347 = vadd.f32 %v1258, %v1346
    %v1348 = vpop.f32.mrf.mxu0
    %v1349 = vadd.f32 %v1260, %v1348
    %1350 = vmatmul.bf16.gmra.mxu0 %v822
    %v1351 = vpop.f32.mrf.mxu0
    %v1352 = vadd.f32 %v1263, %v1351
    %v1353 = vpop.f32.mrf.mxu0
    %v1354 = vadd.f32 %v1265, %v1353
    %1355 = vmatmul.bf16.gmra.mxu0 %v826
    %v1356 = vpop.f32.mrf.mxu0
    %v1357 = vadd.f32 %v1268, %v1356
    %v1358 = vpop.f32.mrf.mxu0
    %v1359 = vadd.f32 %v1270, %v1358
    %1360 = vmatmul.bf16.gmra.mxu0 %v830
    %v1361 = vpop.f32.mrf.mxu0
    %v1362 = vadd.f32 %v1273, %v1361
    %v1363 = vpop.f32.mrf.mxu0
    %v1364 = vadd.f32 %v1275, %v1363
    %1365 = vmatmul.bf16.gmra.mxu0 %v834
    %v1366 = vpop.f32.mrf.mxu0
    %v1367 = vadd.f32 %v1278, %v1366
    %v1368 = vpop.f32.mrf.mxu0
    %v1369 = vadd.f32 %v1280, %v1368
    %1370 = vdwg.mxu0
    %1371 = vmatpush.bf16.msra.mxu0 %v1085
    %1372 = vmatpush.bf16.msra.mxu0 %v1083
    %1373 = vmatpush.bf16.msra.mxu0 %v1081
    %1374 = vmatpush.bf16.msra.mxu0 %v1079
    %1375 = vmatpush.bf16.msra.mxu0 %v1077
    %1376 = vmatpush.bf16.msra.mxu0 %v1075
    %1377 = vmatpush.bf16.msra.mxu0 %v1073
    %1378 = vmatpush.bf16.msra.mxu0 %v1071
    %1379 = vmatmul.bf16.gmra.mxu0 %v775
    %v1380 = vpop.f32.mrf.mxu0
    %v1381 = vadd.f32 %v1292, %v1380
    %v1382 = vpop.f32.mrf.mxu0
    %v1383 = vadd.f32 %v1294, %v1382
    %1384 = vmatmul.bf16.gmra.mxu0 %v779
    %v1385 = vpop.f32.mrf.mxu0
    %v1386 = vadd.f32 %v1297, %v1385
    %v1387 = vpop.f32.mrf.mxu0
    %v1388 = vadd.f32 %v1299, %v1387
    %1389 = vmatmul.bf16.gmra.mxu0 %v783
    %v1390 = vpop.f32.mrf.mxu0
    %v1391 = vadd.f32 %v1302, %v1390
    %v1392 = vpop.f32.mrf.mxu0
    %v1393 = vadd.f32 %v1304, %v1392
    %1394 = vmatmul.bf16.gmra.mxu0 %v787
    %v1395 = vpop.f32.mrf.mxu0
    %v1396 = vadd.f32 %v1307, %v1395
    %v1397 = vpop.f32.mrf.mxu0
    %v1398 = vadd.f32 %v1309, %v1397
    %1399 = vmatmul.bf16.gmra.mxu0 %v791
    %v1400 = vpop.f32.mrf.mxu0
    %v1401 = vadd.f32 %v1312, %v1400
    %v1402 = vpop.f32.mrf.mxu0
    %v1403 = vadd.f32 %v1314, %v1402
    %1404 = vmatmul.bf16.gmra.mxu0 %v795
    %v1405 = vpop.f32.mrf.mxu0
    %v1406 = vadd.f32 %v1317, %v1405
    %v1407 = vpop.f32.mrf.mxu0
    %v1408 = vadd.f32 %v1319, %v1407
    %1409 = vmatmul.bf16.gmra.mxu0 %v799
    %v1410 = vpop.f32.mrf.mxu0
    %v1411 = vadd.f32 %v1322, %v1410
    %v1412 = vpop.f32.mrf.mxu0
    %v1413 = vadd.f32 %v1324, %v1412
    %1414 = vmatmul.bf16.gmra.mxu0 %v803
    %v1415 = vpop.f32.mrf.mxu0
    %v1416 = vadd.f32 %v1327, %v1415
    %v1417 = vpop.f32.mrf.mxu0
    %v1418 = vadd.f32 %v1329, %v1417
    %1419 = vmatmul.bf16.gmra.mxu0 %v807
    %v1420 = vpop.f32.mrf.mxu0
    %v1421 = vadd.f32 %v1332, %v1420
    %v1422 = vpop.f32.mrf.mxu0
    %v1423 = vadd.f32 %v1334, %v1422
    %1424 = vmatmul.bf16.gmra.mxu0 %v811
    %v1425 = vpop.f32.mrf.mxu0
    %v1426 = vadd.f32 %v1337, %v1425
    %v1427 = vpop.f32.mrf.mxu0
    %v1428 = vadd.f32 %v1339, %v1427
    %1429 = vmatmul.bf16.gmra.mxu0 %v815
    %v1430 = vpop.f32.mrf.mxu0
    %v1431 = vadd.f32 %v1342, %v1430
    %v1432 = vpop.f32.mrf.mxu0
    %v1433 = vadd.f32 %v1344, %v1432
    %1434 = vmatmul.bf16.gmra.mxu0 %v819
    %v1435 = vpop.f32.mrf.mxu0
    %v1436 = vadd.f32 %v1347, %v1435
    %v1437 = vpop.f32.mrf.mxu0
    %v1438 = vadd.f32 %v1349, %v1437
    %1439 = vmatmul.bf16.gmra.mxu0 %v823
    %v1440 = vpop.f32.mrf.mxu0
    %v1441 = vadd.f32 %v1352, %v1440
    %v1442 = vpop.f32.mrf.mxu0
    %v1443 = vadd.f32 %v1354, %v1442
    %1444 = vmatmul.bf16.gmra.mxu0 %v827
    %v1445 = vpop.f32.mrf.mxu0
    %v1446 = vadd.f32 %v1357, %v1445
    %v1447 = vpop.f32.mrf.mxu0
    %v1448 = vadd.f32 %v1359, %v1447
    %1449 = vmatmul.bf16.gmra.mxu0 %v831
    %v1450 = vpop.f32.mrf.mxu0
    %v1451 = vadd.f32 %v1362, %v1450
    %v1452 = vpop.f32.mrf.mxu0
    %v1453 = vadd.f32 %v1364, %v1452
    %1454 = vmatmul.bf16.gmra.mxu0 %v835
    %v1455 = vpop.f32.mrf.mxu0
    %v1456 = vadd.f32 %v1367, %v1455
    %v1457 = vpop.f32.mrf.mxu0
    %v1458 = vadd.f32 %v1369, %v1457
    %1459 = vdwg.mxu0
    %1460 = vmatpush.bf16.msra.mxu0 0
    %1461 = vmatpush.bf16.msra.mxu0 0
    %1462 = vmatpush.bf16.msra.mxu0 0
    %1463 = vmatpush.bf16.msra.mxu0 0
    %1464 = vmatpush.bf16.msra.mxu0 0
    %1465 = vmatpush.bf16.msra.mxu0 0
    %1466 = vmatpush.bf16.msra.mxu0 0
    %1467 = vmatpush.bf16.msra.mxu0 %v1188
    %1468 = vmatmul.bf16.gmra.mxu0 %v1139
    %v1469 = vpop.f32.mrf.mxu0
    %v1470 = vadd.f32 %v1381, %v1469
    %v1471 = vpop.f32.mrf.mxu0
    %v1472 = vadd.f32 %v1383, %v1471
    %1473 = vmatmul.bf16.gmra.mxu0 %v1142
    %v1474 = vpop.f32.mrf.mxu0
    %v1475 = vadd.f32 %v1386, %v1474
    %v1476 = vpop.f32.mrf.mxu0
    %v1477 = vadd.f32 %v1388, %v1476
    %1478 = vmatmul.bf16.gmra.mxu0 %v1145
    %v1479 = vpop.f32.mrf.mxu0
    %v1480 = vadd.f32 %v1391, %v1479
    %v1481 = vpop.f32.mrf.mxu0
    %v1482 = vadd.f32 %v1393, %v1481
    %1483 = vmatmul.bf16.gmra.mxu0 %v1148
    %v1484 = vpop.f32.mrf.mxu0
    %v1485 = vadd.f32 %v1396, %v1484
    %v1486 = vpop.f32.mrf.mxu0
    %v1487 = vadd.f32 %v1398, %v1486
    %1488 = vmatmul.bf16.gmra.mxu0 %v1151
    %v1489 = vpop.f32.mrf.mxu0
    %v1490 = vadd.f32 %v1401, %v1489
    %v1491 = vpop.f32.mrf.mxu0
    %v1492 = vadd.f32 %v1403, %v1491
    %1493 = vmatmul.bf16.gmra.mxu0 %v1154
    %v1494 = vpop.f32.mrf.mxu0
    %v1495 = vadd.f32 %v1406, %v1494
    %v1496 = vpop.f32.mrf.mxu0
    %v1497 = vadd.f32 %v1408, %v1496
    %1498 = vmatmul.bf16.gmra.mxu0 %v1157
    %v1499 = vpop.f32.mrf.mxu0
    %v1500 = vadd.f32 %v1411, %v1499
    %v1501 = vpop.f32.mrf.mxu0
    %v1502 = vadd.f32 %v1413, %v1501
    %1503 = vmatmul.bf16.gmra.mxu0 %v1160
    %v1504 = vpop.f32.mrf.mxu0
    %v1505 = vadd.f32 %v1416, %v1504
    %v1506 = vpop.f32.mrf.mxu0
    %v1507 = vadd.f32 %v1418, %v1506
    %1508 = vmatmul.bf16.gmra.mxu0 %v1163
    %v1509 = vpop.f32.mrf.mxu0
    %v1510 = vadd.f32 %v1421, %v1509
    %v1511 = vpop.f32.mrf.mxu0
    %v1512 = vadd.f32 %v1423, %v1511
    %1513 = vmatmul.bf16.gmra.mxu0 %v1166
    %v1514 = vpop.f32.mrf.mxu0
    %v1515 = vadd.f32 %v1426, %v1514
    %v1516 = vpop.f32.mrf.mxu0
    %v1517 = vadd.f32 %v1428, %v1516
    %1518 = vmatmul.bf16.gmra.mxu0 %v1169
    %v1519 = vpop.f32.mrf.mxu0
    %v1520 = vadd.f32 %v1431, %v1519
    %v1521 = vpop.f32.mrf.mxu0
    %v1522 = vadd.f32 %v1433, %v1521
    %1523 = vmatmul.bf16.gmra.mxu0 %v1172
    %v1524 = vpop.f32.mrf.mxu0
    %v1525 = vadd.f32 %v1436, %v1524
    %v1526 = vpop.f32.mrf.mxu0
    %v1527 = vadd.f32 %v1438, %v1526
    %1528 = vmatmul.bf16.gmra.mxu0 %v1175
    %v1529 = vpop.f32.mrf.mxu0
    %v1530 = vadd.f32 %v1441, %v1529
    %v1531 = vpop.f32.mrf.mxu0
    %v1532 = vadd.f32 %v1443, %v1531
    %1533 = vmatmul.bf16.gmra.mxu0 %v1178
    %v1534 = vpop.f32.mrf.mxu0
    %v1535 = vadd.f32 %v1446, %v1534
    %v1536 = vpop.f32.mrf.mxu0
    %v1537 = vadd.f32 %v1448, %v1536
    %1538 = vmatmul.bf16.gmra.mxu0 %v1181
    %v1539 = vpop.f32.mrf.mxu0
    %v1540 = vadd.f32 %v1451, %v1539
    %v1541 = vpop.f32.mrf.mxu0
    %v1542 = vadd.f32 %v1453, %v1541
    %1543 = vmatmul.bf16.gmra.mxu0 %v1184
    %v1544 = vpop.f32.mrf.mxu0
    %v1545 = vadd.f32 %v1456, %v1544
    %v1546 = vpop.f32.mrf.mxu0
    %v1547 = vadd.f32 %v1458, %v1546
    %1548 = vdwg.mxu0
    %1549 = vmatpush.bf16.msra.mxu0 %v1054
    %1550 = vmatpush.bf16.msra.mxu0 %v1052
    %1551 = vmatpush.bf16.msra.mxu0 %v1050
    %1552 = vmatpush.bf16.msra.mxu0 %v1048
    %1553 = vmatpush.bf16.msra.mxu0 %v1046
    %1554 = vmatpush.bf16.msra.mxu0 %v1044
    %1555 = vmatpush.bf16.msra.mxu0 %v1042
    %1556 = vmatpush.bf16.msra.mxu0 %v1040
    %1557 = vmatmul.bf16.gmra.mxu0 %v773
    %v1558 = vpop.f32.mrf.mxu0
    %v1559 = vadd.f32 %v889, %v1558
    %v1560 = vpop.f32.mrf.mxu0
    %v1561 = vadd.f32 %v889, %v1560
    %1562 = vmatmul.bf16.gmra.mxu0 %v777
    %v1563 = vpop.f32.mrf.mxu0
    %v1564 = vadd.f32 %v889, %v1563
    %v1565 = vpop.f32.mrf.mxu0
    %v1566 = vadd.f32 %v889, %v1565
    %1567 = vmatmul.bf16.gmra.mxu0 %v781
    %v1568 = vpop.f32.mrf.mxu0
    %v1569 = vadd.f32 %v889, %v1568
    %v1570 = vpop.f32.mrf.mxu0
    %v1571 = vadd.f32 %v889, %v1570
    %1572 = vmatmul.bf16.gmra.mxu0 %v785
    %v1573 = vpop.f32.mrf.mxu0
    %v1574 = vadd.f32 %v889, %v1573
    %v1575 = vpop.f32.mrf.mxu0
    %v1576 = vadd.f32 %v889, %v1575
    %1577 = vmatmul.bf16.gmra.mxu0 %v789
    %v1578 = vpop.f32.mrf.mxu0
    %v1579 = vadd.f32 %v889, %v1578
    %v1580 = vpop.f32.mrf.mxu0
    %v1581 = vadd.f32 %v889, %v1580
    %1582 = vmatmul.bf16.gmra.mxu0 %v793
    %v1583 = vpop.f32.mrf.mxu0
    %v1584 = vadd.f32 %v889, %v1583
    %v1585 = vpop.f32.mrf.mxu0
    %v1586 = vadd.f32 %v889, %v1585
    %1587 = vmatmul.bf16.gmra.mxu0 %v797
    %v1588 = vpop.f32.mrf.mxu0
    %v1589 = vadd.f32 %v889, %v1588
    %v1590 = vpop.f32.mrf.mxu0
    %v1591 = vadd.f32 %v889, %v1590
    %1592 = vmatmul.bf16.gmra.mxu0 %v801
    %v1593 = vpop.f32.mrf.mxu0
    %v1594 = vadd.f32 %v889, %v1593
    %v1595 = vpop.f32.mrf.mxu0
    %v1596 = vadd.f32 %v889, %v1595
    %1597 = vmatmul.bf16.gmra.mxu0 %v805
    %v1598 = vpop.f32.mrf.mxu0
    %v1599 = vadd.f32 %v889, %v1598
    %v1600 = vpop.f32.mrf.mxu0
    %v1601 = vadd.f32 %v889, %v1600
    %1602 = vmatmul.bf16.gmra.mxu0 %v809
    %v1603 = vpop.f32.mrf.mxu0
    %v1604 = vadd.f32 %v889, %v1603
    %v1605 = vpop.f32.mrf.mxu0
    %v1606 = vadd.f32 %v889, %v1605
    %1607 = vmatmul.bf16.gmra.mxu0 %v813
    %v1608 = vpop.f32.mrf.mxu0
    %v1609 = vadd.f32 %v889, %v1608
    %v1610 = vpop.f32.mrf.mxu0
    %v1611 = vadd.f32 %v889, %v1610
    %1612 = vmatmul.bf16.gmra.mxu0 %v817
    %v1613 = vpop.f32.mrf.mxu0
    %v1614 = vadd.f32 %v889, %v1613
    %v1615 = vpop.f32.mrf.mxu0
    %v1616 = vadd.f32 %v889, %v1615
    %1617 = vmatmul.bf16.gmra.mxu0 %v821
    %v1618 = vpop.f32.mrf.mxu0
    %v1619 = vadd.f32 %v889, %v1618
    %v1620 = vpop.f32.mrf.mxu0
    %v1621 = vadd.f32 %v889, %v1620
    %1622 = vmatmul.bf16.gmra.mxu0 %v825
    %v1623 = vpop.f32.mrf.mxu0
    %v1624 = vadd.f32 %v889, %v1623
    %v1625 = vpop.f32.mrf.mxu0
    %v1626 = vadd.f32 %v889, %v1625
    %1627 = vmatmul.bf16.gmra.mxu0 %v829
    %v1628 = vpop.f32.mrf.mxu0
    %v1629 = vadd.f32 %v889, %v1628
    %v1630 = vpop.f32.mrf.mxu0
    %v1631 = vadd.f32 %v889, %v1630
    %1632 = vmatmul.bf16.gmra.mxu0 %v833
    %v1633 = vpop.f32.mrf.mxu0
    %v1634 = vadd.f32 %v889, %v1633
    %v1635 = vpop.f32.mrf.mxu0
    %v1636 = vadd.f32 %v889, %v1635
    %1637 = vdwg.mxu0
    %1638 = vmatpush.bf16.msra.mxu0 %v1070
    %1639 = vmatpush.bf16.msra.mxu0 %v1068
    %1640 = vmatpush.bf16.msra.mxu0 %v1066
    %1641 = vmatpush.bf16.msra.mxu0 %v1064
    %1642 = vmatpush.bf16.msra.mxu0 %v1062
    %1643 = vmatpush.bf16.msra.mxu0 %v1060
    %1644 = vmatpush.bf16.msra.mxu0 %v1058
    %1645 = vmatpush.bf16.msra.mxu0 %v1056
    %1646 = vmatmul.bf16.gmra.mxu0 %v774
    %v1647 = vpop.f32.mrf.mxu0
    %v1648 = vadd.f32 %v1559, %v1647
    %v1649 = vpop.f32.mrf.mxu0
    %v1650 = vadd.f32 %v1561, %v1649
    %1651 = vmatmul.bf16.gmra.mxu0 %v778
    %v1652 = vpop.f32.mrf.mxu0
    %v1653 = vadd.f32 %v1564, %v1652
    %v1654 = vpop.f32.mrf.mxu0
    %v1655 = vadd.f32 %v1566, %v1654
    %1656 = vmatmul.bf16.gmra.mxu0 %v782
    %v1657 = vpop.f32.mrf.mxu0
    %v1658 = vadd.f32 %v1569, %v1657
    %v1659 = vpop.f32.mrf.mxu0
    %v1660 = vadd.f32 %v1571, %v1659
    %1661 = vmatmul.bf16.gmra.mxu0 %v786
    %v1662 = vpop.f32.mrf.mxu0
    %v1663 = vadd.f32 %v1574, %v1662
    %v1664 = vpop.f32.mrf.mxu0
    %v1665 = vadd.f32 %v1576, %v1664
    %1666 = vmatmul.bf16.gmra.mxu0 %v790
    %v1667 = vpop.f32.mrf.mxu0
    %v1668 = vadd.f32 %v1579, %v1667
    %v1669 = vpop.f32.mrf.mxu0
    %v1670 = vadd.f32 %v1581, %v1669
    %1671 = vmatmul.bf16.gmra.mxu0 %v794
    %v1672 = vpop.f32.mrf.mxu0
    %v1673 = vadd.f32 %v1584, %v1672
    %v1674 = vpop.f32.mrf.mxu0
    %v1675 = vadd.f32 %v1586, %v1674
    %1676 = vmatmul.bf16.gmra.mxu0 %v798
    %v1677 = vpop.f32.mrf.mxu0
    %v1678 = vadd.f32 %v1589, %v1677
    %v1679 = vpop.f32.mrf.mxu0
    %v1680 = vadd.f32 %v1591, %v1679
    %1681 = vmatmul.bf16.gmra.mxu0 %v802
    %v1682 = vpop.f32.mrf.mxu0
    %v1683 = vadd.f32 %v1594, %v1682
    %v1684 = vpop.f32.mrf.mxu0
    %v1685 = vadd.f32 %v1596, %v1684
    %1686 = vmatmul.bf16.gmra.mxu0 %v806
    %v1687 = vpop.f32.mrf.mxu0
    %v1688 = vadd.f32 %v1599, %v1687
    %v1689 = vpop.f32.mrf.mxu0
    %v1690 = vadd.f32 %v1601, %v1689
    %1691 = vmatmul.bf16.gmra.mxu0 %v810
    %v1692 = vpop.f32.mrf.mxu0
    %v1693 = vadd.f32 %v1604, %v1692
    %v1694 = vpop.f32.mrf.mxu0
    %v1695 = vadd.f32 %v1606, %v1694
    %1696 = vmatmul.bf16.gmra.mxu0 %v814
    %v1697 = vpop.f32.mrf.mxu0
    %v1698 = vadd.f32 %v1609, %v1697
    %v1699 = vpop.f32.mrf.mxu0
    %v1700 = vadd.f32 %v1611, %v1699
    %1701 = vmatmul.bf16.gmra.mxu0 %v818
    %v1702 = vpop.f32.mrf.mxu0
    %v1703 = vadd.f32 %v1614, %v1702
    %v1704 = vpop.f32.mrf.mxu0
    %v1705 = vadd.f32 %v1616, %v1704
    %1706 = vmatmul.bf16.gmra.mxu0 %v822
    %v1707 = vpop.f32.mrf.mxu0
    %v1708 = vadd.f32 %v1619, %v1707
    %v1709 = vpop.f32.mrf.mxu0
    %v1710 = vadd.f32 %v1621, %v1709
    %1711 = vmatmul.bf16.gmra.mxu0 %v826
    %v1712 = vpop.f32.mrf.mxu0
    %v1713 = vadd.f32 %v1624, %v1712
    %v1714 = vpop.f32.mrf.mxu0
    %v1715 = vadd.f32 %v1626, %v1714
    %1716 = vmatmul.bf16.gmra.mxu0 %v830
    %v1717 = vpop.f32.mrf.mxu0
    %v1718 = vadd.f32 %v1629, %v1717
    %v1719 = vpop.f32.mrf.mxu0
    %v1720 = vadd.f32 %v1631, %v1719
    %1721 = vmatmul.bf16.gmra.mxu0 %v834
    %v1722 = vpop.f32.mrf.mxu0
    %v1723 = vadd.f32 %v1634, %v1722
    %v1724 = vpop.f32.mrf.mxu0
    %v1725 = vadd.f32 %v1636, %v1724
    %1726 = vdwg.mxu0
    %1727 = vmatpush.bf16.msra.mxu0 %v1086
    %1728 = vmatpush.bf16.msra.mxu0 %v1084
    %1729 = vmatpush.bf16.msra.mxu0 %v1082
    %1730 = vmatpush.bf16.msra.mxu0 %v1080
    %1731 = vmatpush.bf16.msra.mxu0 %v1078
    %1732 = vmatpush.bf16.msra.mxu0 %v1076
    %1733 = vmatpush.bf16.msra.mxu0 %v1074
    %1734 = vmatpush.bf16.msra.mxu0 %v1072
    %1735 = vmatmul.bf16.gmra.mxu0 %v775
    %v1736 = vpop.f32.mrf.mxu0
    %v1737 = vadd.f32 %v1648, %v1736
    %v1738 = vpop.f32.mrf.mxu0
    %v1739 = vadd.f32 %v1650, %v1738
    %1740 = vmatmul.bf16.gmra.mxu0 %v779
    %v1741 = vpop.f32.mrf.mxu0
    %v1742 = vadd.f32 %v1653, %v1741
    %v1743 = vpop.f32.mrf.mxu0
    %v1744 = vadd.f32 %v1655, %v1743
    %1745 = vmatmul.bf16.gmra.mxu0 %v783
    %v1746 = vpop.f32.mrf.mxu0
    %v1747 = vadd.f32 %v1658, %v1746
    %v1748 = vpop.f32.mrf.mxu0
    %v1749 = vadd.f32 %v1660, %v1748
    %1750 = vmatmul.bf16.gmra.mxu0 %v787
    %v1751 = vpop.f32.mrf.mxu0
    %v1752 = vadd.f32 %v1663, %v1751
    %v1753 = vpop.f32.mrf.mxu0
    %v1754 = vadd.f32 %v1665, %v1753
    %1755 = vmatmul.bf16.gmra.mxu0 %v791
    %v1756 = vpop.f32.mrf.mxu0
    %v1757 = vadd.f32 %v1668, %v1756
    %v1758 = vpop.f32.mrf.mxu0
    %v1759 = vadd.f32 %v1670, %v1758
    %1760 = vmatmul.bf16.gmra.mxu0 %v795
    %v1761 = vpop.f32.mrf.mxu0
    %v1762 = vadd.f32 %v1673, %v1761
    %v1763 = vpop.f32.mrf.mxu0
    %v1764 = vadd.f32 %v1675, %v1763
    %1765 = vmatmul.bf16.gmra.mxu0 %v799
    %v1766 = vpop.f32.mrf.mxu0
    %v1767 = vadd.f32 %v1678, %v1766
    %v1768 = vpop.f32.mrf.mxu0
    %v1769 = vadd.f32 %v1680, %v1768
    %1770 = vmatmul.bf16.gmra.mxu0 %v803
    %v1771 = vpop.f32.mrf.mxu0
    %v1772 = vadd.f32 %v1683, %v1771
    %v1773 = vpop.f32.mrf.mxu0
    %v1774 = vadd.f32 %v1685, %v1773
    %1775 = vmatmul.bf16.gmra.mxu0 %v807
    %v1776 = vpop.f32.mrf.mxu0
    %v1777 = vadd.f32 %v1688, %v1776
    %v1778 = vpop.f32.mrf.mxu0
    %v1779 = vadd.f32 %v1690, %v1778
    %1780 = vmatmul.bf16.gmra.mxu0 %v811
    %v1781 = vpop.f32.mrf.mxu0
    %v1782 = vadd.f32 %v1693, %v1781
    %v1783 = vpop.f32.mrf.mxu0
    %v1784 = vadd.f32 %v1695, %v1783
    %1785 = vmatmul.bf16.gmra.mxu0 %v815
    %v1786 = vpop.f32.mrf.mxu0
    %v1787 = vadd.f32 %v1698, %v1786
    %v1788 = vpop.f32.mrf.mxu0
    %v1789 = vadd.f32 %v1700, %v1788
    %1790 = vmatmul.bf16.gmra.mxu0 %v819
    %v1791 = vpop.f32.mrf.mxu0
    %v1792 = vadd.f32 %v1703, %v1791
    %v1793 = vpop.f32.mrf.mxu0
    %v1794 = vadd.f32 %v1705, %v1793
    %1795 = vmatmul.bf16.gmra.mxu0 %v823
    %v1796 = vpop.f32.mrf.mxu0
    %v1797 = vadd.f32 %v1708, %v1796
    %v1798 = vpop.f32.mrf.mxu0
    %v1799 = vadd.f32 %v1710, %v1798
    %1800 = vmatmul.bf16.gmra.mxu0 %v827
    %v1801 = vpop.f32.mrf.mxu0
    %v1802 = vadd.f32 %v1713, %v1801
    %v1803 = vpop.f32.mrf.mxu0
    %v1804 = vadd.f32 %v1715, %v1803
    %1805 = vmatmul.bf16.gmra.mxu0 %v831
    %v1806 = vpop.f32.mrf.mxu0
    %v1807 = vadd.f32 %v1718, %v1806
    %v1808 = vpop.f32.mrf.mxu0
    %v1809 = vadd.f32 %v1720, %v1808
    %1810 = vmatmul.bf16.gmra.mxu0 %v835
    %v1811 = vpop.f32.mrf.mxu0
    %v1812 = vadd.f32 %v1723, %v1811
    %v1813 = vpop.f32.mrf.mxu0
    %v1814 = vadd.f32 %v1725, %v1813
    %1815 = vdwg.mxu0
    %1816 = vmatpush.bf16.msra.mxu0 0
    %1817 = vmatpush.bf16.msra.mxu0 0
    %1818 = vmatpush.bf16.msra.mxu0 0
    %1819 = vmatpush.bf16.msra.mxu0 0
    %1820 = vmatpush.bf16.msra.mxu0 0
    %1821 = vmatpush.bf16.msra.mxu0 0
    %1822 = vmatpush.bf16.msra.mxu0 0
    %1823 = vmatpush.bf16.msra.mxu0 %v1191
    %1824 = vmatmul.bf16.gmra.mxu0 %v1139
    %v1825 = vpop.f32.mrf.mxu0
    %v1826 = vadd.f32 %v1737, %v1825
    %v1827 = vpop.f32.mrf.mxu0
    %v1828 = vadd.f32 %v1739, %v1827
    %1829 = vmatmul.bf16.gmra.mxu0 %v1142
    %v1830 = vpop.f32.mrf.mxu0
    %v1831 = vadd.f32 %v1742, %v1830
    %v1832 = vpop.f32.mrf.mxu0
    %v1833 = vadd.f32 %v1744, %v1832
    %1834 = vmatmul.bf16.gmra.mxu0 %v1145
    %v1835 = vpop.f32.mrf.mxu0
    %v1836 = vadd.f32 %v1747, %v1835
    %v1837 = vpop.f32.mrf.mxu0
    %v1838 = vadd.f32 %v1749, %v1837
    %1839 = vmatmul.bf16.gmra.mxu0 %v1148
    %v1840 = vpop.f32.mrf.mxu0
    %v1841 = vadd.f32 %v1752, %v1840
    %v1842 = vpop.f32.mrf.mxu0
    %v1843 = vadd.f32 %v1754, %v1842
    %1844 = vmatmul.bf16.gmra.mxu0 %v1151
    %v1845 = vpop.f32.mrf.mxu0
    %v1846 = vadd.f32 %v1757, %v1845
    %v1847 = vpop.f32.mrf.mxu0
    %v1848 = vadd.f32 %v1759, %v1847
    %1849 = vmatmul.bf16.gmra.mxu0 %v1154
    %v1850 = vpop.f32.mrf.mxu0
    %v1851 = vadd.f32 %v1762, %v1850
    %v1852 = vpop.f32.mrf.mxu0
    %v1853 = vadd.f32 %v1764, %v1852
    %1854 = vmatmul.bf16.gmra.mxu0 %v1157
    %v1855 = vpop.f32.mrf.mxu0
    %v1856 = vadd.f32 %v1767, %v1855
    %v1857 = vpop.f32.mrf.mxu0
    %v1858 = vadd.f32 %v1769, %v1857
    %1859 = vmatmul.bf16.gmra.mxu0 %v1160
    %v1860 = vpop.f32.mrf.mxu0
    %v1861 = vadd.f32 %v1772, %v1860
    %v1862 = vpop.f32.mrf.mxu0
    %v1863 = vadd.f32 %v1774, %v1862
    %1864 = vmatmul.bf16.gmra.mxu0 %v1163
    %v1865 = vpop.f32.mrf.mxu0
    %v1866 = vadd.f32 %v1777, %v1865
    %v1867 = vpop.f32.mrf.mxu0
    %v1868 = vadd.f32 %v1779, %v1867
    %1869 = vmatmul.bf16.gmra.mxu0 %v1166
    %v1870 = vpop.f32.mrf.mxu0
    %v1871 = vadd.f32 %v1782, %v1870
    %v1872 = vpop.f32.mrf.mxu0
    %v1873 = vadd.f32 %v1784, %v1872
    %1874 = vmatmul.bf16.gmra.mxu0 %v1169
    %v1875 = vpop.f32.mrf.mxu0
    %v1876 = vadd.f32 %v1787, %v1875
    %v1877 = vpop.f32.mrf.mxu0
    %v1878 = vadd.f32 %v1789, %v1877
    %1879 = vmatmul.bf16.gmra.mxu0 %v1172
    %v1880 = vpop.f32.mrf.mxu0
    %v1881 = vadd.f32 %v1792, %v1880
    %v1882 = vpop.f32.mrf.mxu0
    %v1883 = vadd.f32 %v1794, %v1882
    %1884 = vmatmul.bf16.gmra.mxu0 %v1175
    %v1885 = vpop.f32.mrf.mxu0
    %v1886 = vadd.f32 %v1797, %v1885
    %v1887 = vpop.f32.mrf.mxu0
    %v1888 = vadd.f32 %v1799, %v1887
    %1889 = vmatmul.bf16.gmra.mxu0 %v1178
    %v1890 = vpop.f32.mrf.mxu0
    %v1891 = vadd.f32 %v1802, %v1890
    %v1892 = vpop.f32.mrf.mxu0
    %v1893 = vadd.f32 %v1804, %v1892
    %1894 = vmatmul.bf16.gmra.mxu0 %v1181
    %v1895 = vpop.f32.mrf.mxu0
    %v1896 = vadd.f32 %v1807, %v1895
    %v1897 = vpop.f32.mrf.mxu0
    %v1898 = vadd.f32 %v1809, %v1897
    %1899 = vmatmul.bf16.gmra.mxu0 %v1184
    %v1900 = vpop.f32.mrf.mxu0
    %v1901 = vadd.f32 %v1812, %v1900
    %v1902 = vpop.f32.mrf.mxu0
    %v1903 = vadd.f32 %v1814, %v1902
    %1904 = vdwg.mxu0
    %v1905 = vmax.f32 %v1470, 0.0
    %v1906 = vmax.f32 %v1826, 0.0
    %v1907 = vmax.f32 %v1472, 0.0
    %v1908 = vmax.f32 %v1828, 0.0
    %v1909 = vmax.f32 %v1475, 0.0
    %v1910 = vmax.f32 %v1831, 0.0
    %v1911 = vmax.f32 %v1477, 0.0
    %v1912 = vmax.f32 %v1833, 0.0
    %v1913 = vmax.f32 %v1480, 0.0
    %v1914 = vmax.f32 %v1836, 0.0
    %v1915 = vmax.f32 %v1482, 0.0
    %v1916 = vmax.f32 %v1838, 0.0
    %v1917 = vmax.f32 %v1485, 0.0
    %v1918 = vmax.f32 %v1841, 0.0
    %v1919 = vmax.f32 %v1487, 0.0
    %v1920 = vmax.f32 %v1843, 0.0
    %v1921 = vmax.f32 %v1490, 0.0
    %v1922 = vmax.f32 %v1846, 0.0
    %v1923 = vmax.f32 %v1492, 0.0
    %v1924 = vmax.f32 %v1848, 0.0
    %v1925 = vmax.f32 %v1495, 0.0
    %v1926 = vmax.f32 %v1851, 0.0
    %v1927 = vmax.f32 %v1497, 0.0
    %v1928 = vmax.f32 %v1853, 0.0
    %v1929 = vmax.f32 %v1500, 0.0
    %v1930 = vmax.f32 %v1856, 0.0
    %v1931 = vmax.f32 %v1502, 0.0
    %v1932 = vmax.f32 %v1858, 0.0
    %v1933 = vmax.f32 %v1505, 0.0
    %v1934 = vmax.f32 %v1861, 0.0
    %v1935 = vmax.f32 %v1507, 0.0
    %v1936 = vmax.f32 %v1863, 0.0
    %v1937 = vmax.f32 %v1510, 0.0
    %v1938 = vmax.f32 %v1866, 0.0
    %v1939 = vmax.f32 %v1512, 0.0
    %v1940 = vmax.f32 %v1868, 0.0
    %v1941 = vmax.f32 %v1515, 0.0
    %v1942 = vmax.f32 %v1871, 0.0
    %v1943 = vmax.f32 %v1517, 0.0
    %v1944 = vmax.f32 %v1873, 0.0
    %v1945 = vmax.f32 %v1520, 0.0
    %v1946 = vmax.f32 %v1876, 0.0
    %v1947 = vmax.f32 %v1522, 0.0
    %v1948 = vmax.f32 %v1878, 0.0
    %v1949 = vmax.f32 %v1525, 0.0
    %v1950 = vmax.f32 %v1881, 0.0
    %v1951 = vmax.f32 %v1527, 0.0
    %v1952 = vmax.f32 %v1883, 0.0
    %v1953 = vmax.f32 %v1530, 0.0
    %v1954 = vmax.f32 %v1886, 0.0
    %v1955 = vmax.f32 %v1532, 0.0
    %v1956 = vmax.f32 %v1888, 0.0
    %v1957 = vmax.f32 %v1535, 0.0
    %v1958 = vmax.f32 %v1891, 0.0
    %v1959 = vmax.f32 %v1537, 0.0
    %v1960 = vmax.f32 %v1893, 0.0
    %v1961 = vmax.f32 %v1540, 0.0
    %v1962 = vmax.f32 %v1896, 0.0
    %v1963 = vmax.f32 %v1542, 0.0
    %v1964 = vmax.f32 %v1898, 0.0
    %v1965 = vmax.f32 %v1545, 0.0
    %v1966 = vmax.f32 %v1901, 0.0
    %v1967 = vmax.f32 %v1547, 0.0
    %v1968 = vmax.f32 %v1903, 0.0
    %v1969 = vpack.c.bf16 %v1907, %v1905
    %v1970 = vpack.c.bf16 %v1908, %v1906
    %v1971 = vpack.c.bf16 %v1911, %v1909
    %v1972 = vpack.c.bf16 %v1912, %v1910
    %v1973 = vpack.c.bf16 %v1915, %v1913
    %v1974 = vpack.c.bf16 %v1916, %v1914
    %v1975 = vpack.c.bf16 %v1919, %v1917
    %v1976 = vpack.c.bf16 %v1920, %v1918
    %v1977 = vpack.c.bf16 %v1923, %v1921
    %v1978 = vpack.c.bf16 %v1924, %v1922
    %v1979 = vpack.c.bf16 %v1927, %v1925
    %v1980 = vpack.c.bf16 %v1928, %v1926
    %v1981 = vpack.c.bf16 %v1931, %v1929
    %v1982 = vpack.c.bf16 %v1932, %v1930
    %v1983 = vpack.c.bf16 %v1935, %v1933
    %v1984 = vpack.c.bf16 %v1936, %v1934
    %v1985 = vpack.c.bf16 %v1939, %v1937
    %v1986 = vpack.c.bf16 %v1940, %v1938
    %v1987 = vpack.c.bf16 %v1943, %v1941
    %v1988 = vpack.c.bf16 %v1944, %v1942
    %v1989 = vpack.c.bf16 %v1947, %v1945
    %v1990 = vpack.c.bf16 %v1948, %v1946
    %v1991 = vpack.c.bf16 %v1951, %v1949
    %v1992 = vpack.c.bf16 %v1952, %v1950
    %v1993 = vpack.c.bf16 %v1955, %v1953
    %v1994 = vpack.c.bf16 %v1956, %v1954
    %v1995 = vpack.c.bf16 %v1959, %v1957
    %v1996 = vpack.c.bf16 %v1960, %v1958
    %v1997 = vpack.c.bf16 %v1963, %v1961
    %v1998 = vpack.c.bf16 %v1964, %v1962
    %v1999 = vpack.c.bf16 %v1967, %v1965
    %v2000 = vpack.c.bf16 %v1968, %v1966
    %v2001 = vld [vmem:[#allocation8] sm:$0xff]
    %v2002 = vld [vmem:[#allocation8 + $0x8] sm:$0xff]
    %v2003 = vld [vmem:[#allocation8 + $0x10] sm:$0xff]
    %v2004 = vld [vmem:[#allocation8 + $0x18] sm:$0xff]
    %v2005 = vld [vmem:[#allocation8 + $0x20] sm:$0xff]
    %v2006 = vld [vmem:[#allocation8 + $0x28] sm:$0xff]
    %v2007 = vld [vmem:[#allocation8 + $0x30] sm:$0xff]
    %v2008 = vld [vmem:[#allocation8 + $0x38] sm:$0xff]
    %v2009 = vld [vmem:[#allocation8 + $0x40] sm:$0xff]
    %v2010 = vld [vmem:[#allocation8 + $0x48] sm:$0xff]
    %v2011 = vld [vmem:[#allocation8 + $0x50] sm:$0xff]
    %v2012 = vld [vmem:[#allocation8 + $0x58] sm:$0xff]
    %v2013 = vld [vmem:[#allocation8 + $0x60] sm:$0xff]
    %v2014 = vld [vmem:[#allocation8 + $0x68] sm:$0xff]
    %v2015 = vld [vmem:[#allocation8 + $0x70] sm:$0xff]
    %v2016 = vld [vmem:[#allocation8 + $0x78] sm:$0xff]
    %v2017 = vld [vmem:[#allocation8 + $0x80] sm:$0xff]
    %v2018 = vld [vmem:[#allocation8 + $0x88] sm:$0xff]
    %v2019 = vld [vmem:[#allocation8 + $0x90] sm:$0xff]
    %v2020 = vld [vmem:[#allocation8 + $0x98] sm:$0xff]
    %v2021 = vld [vmem:[#allocation8 + $0xa0] sm:$0xff]
    %v2022 = vld [vmem:[#allocation8 + $0xa8] sm:$0xff]
    %v2023 = vld [vmem:[#allocation8 + $0xb0] sm:$0xff]
    %v2024 = vld [vmem:[#allocation8 + $0xb8] sm:$0xff]
    %v2025 = vld [vmem:[#allocation8 + $0xc0] sm:$0xff]
    %v2026 = vld [vmem:[#allocation8 + $0xc8] sm:$0xff]
    %v2027 = vld [vmem:[#allocation8 + $0xd0] sm:$0xff]
    %v2028 = vld [vmem:[#allocation8 + $0xd8] sm:$0xff]
    %v2029 = vld [vmem:[#allocation8 + $0xe0] sm:$0xff]
    %v2030 = vld [vmem:[#allocation8 + $0xe8] sm:$0xff]
    %v2031 = vld [vmem:[#allocation8 + $0xf0] sm:$0xff]
    %v2032 = vld [vmem:[#allocation8 + $0xf8] sm:$0xff]
    %v2033 = vld [vmem:[%s4] sm:$0x3]
    %v2035 = vperm.slane %v2033, 0
    %v2036 = vperm.slane %v2033, 1
    %v2071 = vunpack.c.l.b16 %v2001
    %v2072 = vunpack.c.h.b16 %v2001
    %v2073 = vunpack.c.l.b16 %v2002
    %v2074 = vunpack.c.h.b16 %v2002
    %v2075 = vunpack.c.l.b16 %v2003
    %v2076 = vunpack.c.h.b16 %v2003
    %v2077 = vunpack.c.l.b16 %v2004
    %v2078 = vunpack.c.h.b16 %v2004
    %v2079 = vunpack.c.l.b16 %v2005
    %v2080 = vunpack.c.h.b16 %v2005
    %v2081 = vunpack.c.l.b16 %v2006
    %v2082 = vunpack.c.h.b16 %v2006
    %v2083 = vunpack.c.l.b16 %v2007
    %v2084 = vunpack.c.h.b16 %v2007
    %v2085 = vunpack.c.l.b16 %v2008
    %v2086 = vunpack.c.h.b16 %v2008
    %v2087 = vunpack.c.l.b16 %v2009
    %v2088 = vunpack.c.h.b16 %v2009
    %v2089 = vunpack.c.l.b16 %v2010
    %v2090 = vunpack.c.h.b16 %v2010
    %v2091 = vunpack.c.l.b16 %v2011
    %v2092 = vunpack.c.h.b16 %v2011
    %v2093 = vunpack.c.l.b16 %v2012
    %v2094 = vunpack.c.h.b16 %v2012
    %v2095 = vunpack.c.l.b16 %v2013
    %v2096 = vunpack.c.h.b16 %v2013
    %v2097 = vunpack.c.l.b16 %v2014
    %v2098 = vunpack.c.h.b16 %v2014
    %v2099 = vunpack.c.l.b16 %v2015
    %v2100 = vunpack.c.h.b16 %v2015
    %v2101 = vunpack.c.l.b16 %v2016
    %v2102 = vunpack.c.h.b16 %v2016
    %v2103 = vunpack.c.l.b16 %v2017
    %v2104 = vunpack.c.h.b16 %v2017
    %v2105 = vunpack.c.l.b16 %v2018
    %v2106 = vunpack.c.h.b16 %v2018
    %v2107 = vunpack.c.l.b16 %v2019
    %v2108 = vunpack.c.h.b16 %v2019
    %v2109 = vunpack.c.l.b16 %v2020
    %v2110 = vunpack.c.h.b16 %v2020
    %v2111 = vunpack.c.l.b16 %v2021
    %v2112 = vunpack.c.h.b16 %v2021
    %v2113 = vunpack.c.l.b16 %v2022
    %v2114 = vunpack.c.h.b16 %v2022
    %v2115 = vunpack.c.l.b16 %v2023
    %v2116 = vunpack.c.h.b16 %v2023
    %v2117 = vunpack.c.l.b16 %v2024
    %v2118 = vunpack.c.h.b16 %v2024
    %v2119 = vunpack.c.l.b16 %v2025
    %v2120 = vunpack.c.h.b16 %v2025
    %v2121 = vunpack.c.l.b16 %v2026
    %v2122 = vunpack.c.h.b16 %v2026
    %v2123 = vunpack.c.l.b16 %v2027
    %v2124 = vunpack.c.h.b16 %v2027
    %v2125 = vunpack.c.l.b16 %v2028
    %v2126 = vunpack.c.h.b16 %v2028
    %v2127 = vunpack.c.l.b16 %v2029
    %v2128 = vunpack.c.h.b16 %v2029
    %v2129 = vunpack.c.l.b16 %v2030
    %v2130 = vunpack.c.h.b16 %v2030
    %v2131 = vunpack.c.l.b16 %v2031
    %v2132 = vunpack.c.h.b16 %v2031
    %v2133 = vunpack.c.l.b16 %v2032
    %v2134 = vunpack.c.h.b16 %v2032
    %v2135 = vpack.c.b16 %v2073, %v2071
    %v2136 = vpack.c.b16 %v2074, %v2072
    %v2137 = vpack.c.b16 %v2077, %v2075
    %v2138 = vpack.c.b16 %v2078, %v2076
    %v2139 = vpack.c.b16 %v2081, %v2079
    %v2140 = vpack.c.b16 %v2082, %v2080
    %v2141 = vpack.c.b16 %v2085, %v2083
    %v2142 = vpack.c.b16 %v2086, %v2084
    %v2143 = vpack.c.b16 %v2089, %v2087
    %v2144 = vpack.c.b16 %v2090, %v2088
    %v2145 = vpack.c.b16 %v2093, %v2091
    %v2146 = vpack.c.b16 %v2094, %v2092
    %v2147 = vpack.c.b16 %v2097, %v2095
    %v2148 = vpack.c.b16 %v2098, %v2096
    %v2149 = vpack.c.b16 %v2101, %v2099
    %v2150 = vpack.c.b16 %v2102, %v2100
    %v2151 = vpack.c.b16 %v2105, %v2103
    %v2152 = vpack.c.b16 %v2106, %v2104
    %v2153 = vpack.c.b16 %v2109, %v2107
    %v2154 = vpack.c.b16 %v2110, %v2108
    %v2155 = vpack.c.b16 %v2113, %v2111
    %v2156 = vpack.c.b16 %v2114, %v2112
    %v2157 = vpack.c.b16 %v2117, %v2115
    %v2158 = vpack.c.b16 %v2118, %v2116
    %v2159 = vpack.c.b16 %v2121, %v2119
    %v2160 = vpack.c.b16 %v2122, %v2120
    %v2161 = vpack.c.b16 %v2125, %v2123
    %v2162 = vpack.c.b16 %v2126, %v2124
    %v2163 = vpack.c.b16 %v2129, %v2127
    %v2164 = vpack.c.b16 %v2130, %v2128
    %v2165 = vpack.c.b16 %v2133, %v2131
    %v2166 = vpack.c.b16 %v2134, %v2132
    %2199 = vmatpush.bf16.msra.mxu0 %v2149
    %2200 = vmatpush.bf16.msra.mxu0 %v2147
    %2201 = vmatpush.bf16.msra.mxu0 %v2145
    %2202 = vmatpush.bf16.msra.mxu0 %v2143
    %2203 = vmatpush.bf16.msra.mxu0 %v2141
    %2204 = vmatpush.bf16.msra.mxu0 %v2139
    %2205 = vmatpush.bf16.msra.mxu0 %v2137
    %2206 = vmatpush.bf16.msra.mxu0 %v2135
    %2207 = vmatmul.bf16.gmra.mxu0 %v1969
    %v2208 = vpop.f32.mrf.mxu0
    %v2209 = vadd.f32 %v2035, %v2208
    %v2210 = vpop.f32.mrf.mxu0
    %v2211 = vadd.f32 %v2035, %v2210
    %2212 = vmatmul.bf16.gmra.mxu0 %v1971
    %v2213 = vpop.f32.mrf.mxu0
    %v2214 = vadd.f32 %v2035, %v2213
    %v2215 = vpop.f32.mrf.mxu0
    %v2216 = vadd.f32 %v2035, %v2215
    %2217 = vmatmul.bf16.gmra.mxu0 %v1973
    %v2218 = vpop.f32.mrf.mxu0
    %v2219 = vadd.f32 %v2035, %v2218
    %v2220 = vpop.f32.mrf.mxu0
    %v2221 = vadd.f32 %v2035, %v2220
    %2222 = vmatmul.bf16.gmra.mxu0 %v1975
    %v2223 = vpop.f32.mrf.mxu0
    %v2224 = vadd.f32 %v2035, %v2223
    %v2225 = vpop.f32.mrf.mxu0
    %v2226 = vadd.f32 %v2035, %v2225
    %2227 = vmatmul.bf16.gmra.mxu0 %v1977
    %v2228 = vpop.f32.mrf.mxu0
    %v2229 = vadd.f32 %v2035, %v2228
    %v2230 = vpop.f32.mrf.mxu0
    %v2231 = vadd.f32 %v2035, %v2230
    %2232 = vmatmul.bf16.gmra.mxu0 %v1979
    %v2233 = vpop.f32.mrf.mxu0
    %v2234 = vadd.f32 %v2035, %v2233
    %v2235 = vpop.f32.mrf.mxu0
    %v2236 = vadd.f32 %v2035, %v2235
    %2237 = vmatmul.bf16.gmra.mxu0 %v1981
    %v2238 = vpop.f32.mrf.mxu0
    %v2239 = vadd.f32 %v2035, %v2238
    %v2240 = vpop.f32.mrf.mxu0
    %v2241 = vadd.f32 %v2035, %v2240
    %2242 = vmatmul.bf16.gmra.mxu0 %v1983
    %v2243 = vpop.f32.mrf.mxu0
    %v2244 = vadd.f32 %v2035, %v2243
    %v2245 = vpop.f32.mrf.mxu0
    %v2246 = vadd.f32 %v2035, %v2245
    %2247 = vmatmul.bf16.gmra.mxu0 %v1985
    %v2248 = vpop.f32.mrf.mxu0
    %v2249 = vadd.f32 %v2035, %v2248
    %v2250 = vpop.f32.mrf.mxu0
    %v2251 = vadd.f32 %v2035, %v2250
    %2252 = vmatmul.bf16.gmra.mxu0 %v1987
    %v2253 = vpop.f32.mrf.mxu0
    %v2254 = vadd.f32 %v2035, %v2253
    %v2255 = vpop.f32.mrf.mxu0
    %v2256 = vadd.f32 %v2035, %v2255
    %2257 = vmatmul.bf16.gmra.mxu0 %v1989
    %v2258 = vpop.f32.mrf.mxu0
    %v2259 = vadd.f32 %v2035, %v2258
    %v2260 = vpop.f32.mrf.mxu0
    %v2261 = vadd.f32 %v2035, %v2260
    %2262 = vmatmul.bf16.gmra.mxu0 %v1991
    %v2263 = vpop.f32.mrf.mxu0
    %v2264 = vadd.f32 %v2035, %v2263
    %v2265 = vpop.f32.mrf.mxu0
    %v2266 = vadd.f32 %v2035, %v2265
    %2267 = vmatmul.bf16.gmra.mxu0 %v1993
    %v2268 = vpop.f32.mrf.mxu0
    %v2269 = vadd.f32 %v2035, %v2268
    %v2270 = vpop.f32.mrf.mxu0
    %v2271 = vadd.f32 %v2035, %v2270
    %2272 = vmatmul.bf16.gmra.mxu0 %v1995
    %v2273 = vpop.f32.mrf.mxu0
    %v2274 = vadd.f32 %v2035, %v2273
    %v2275 = vpop.f32.mrf.mxu0
    %v2276 = vadd.f32 %v2035, %v2275
    %2277 = vmatmul.bf16.gmra.mxu0 %v1997
    %v2278 = vpop.f32.mrf.mxu0
    %v2279 = vadd.f32 %v2035, %v2278
    %v2280 = vpop.f32.mrf.mxu0
    %v2281 = vadd.f32 %v2035, %v2280
    %2282 = vmatmul.bf16.gmra.mxu0 %v1999
    %v2283 = vpop.f32.mrf.mxu0
    %v2284 = vadd.f32 %v2035, %v2283
    %v2285 = vpop.f32.mrf.mxu0
    %v2286 = vadd.f32 %v2035, %v2285
    %2287 = vdwg.mxu0
    %2288 = vmatpush.bf16.msra.mxu0 %v2165
    %2289 = vmatpush.bf16.msra.mxu0 %v2163
    %2290 = vmatpush.bf16.msra.mxu0 %v2161
    %2291 = vmatpush.bf16.msra.mxu0 %v2159
    %2292 = vmatpush.bf16.msra.mxu0 %v2157
    %2293 = vmatpush.bf16.msra.mxu0 %v2155
    %2294 = vmatpush.bf16.msra.mxu0 %v2153
    %2295 = vmatpush.bf16.msra.mxu0 %v2151
    %2296 = vmatmul.bf16.gmra.mxu0 %v1970
    %v2297 = vpop.f32.mrf.mxu0
    %v2298 = vadd.f32 %v2209, %v2297
    %v2299 = vpop.f32.mrf.mxu0
    %v2300 = vadd.f32 %v2211, %v2299
    %2301 = vmatmul.bf16.gmra.mxu0 %v1972
    %v2302 = vpop.f32.mrf.mxu0
    %v2303 = vadd.f32 %v2214, %v2302
    %v2304 = vpop.f32.mrf.mxu0
    %v2305 = vadd.f32 %v2216, %v2304
    %2306 = vmatmul.bf16.gmra.mxu0 %v1974
    %v2307 = vpop.f32.mrf.mxu0
    %v2308 = vadd.f32 %v2219, %v2307
    %v2309 = vpop.f32.mrf.mxu0
    %v2310 = vadd.f32 %v2221, %v2309
    %2311 = vmatmul.bf16.gmra.mxu0 %v1976
    %v2312 = vpop.f32.mrf.mxu0
    %v2313 = vadd.f32 %v2224, %v2312
    %v2314 = vpop.f32.mrf.mxu0
    %v2315 = vadd.f32 %v2226, %v2314
    %2316 = vmatmul.bf16.gmra.mxu0 %v1978
    %v2317 = vpop.f32.mrf.mxu0
    %v2318 = vadd.f32 %v2229, %v2317
    %v2319 = vpop.f32.mrf.mxu0
    %v2320 = vadd.f32 %v2231, %v2319
    %2321 = vmatmul.bf16.gmra.mxu0 %v1980
    %v2322 = vpop.f32.mrf.mxu0
    %v2323 = vadd.f32 %v2234, %v2322
    %v2324 = vpop.f32.mrf.mxu0
    %v2325 = vadd.f32 %v2236, %v2324
    %2326 = vmatmul.bf16.gmra.mxu0 %v1982
    %v2327 = vpop.f32.mrf.mxu0
    %v2328 = vadd.f32 %v2239, %v2327
    %v2329 = vpop.f32.mrf.mxu0
    %v2330 = vadd.f32 %v2241, %v2329
    %2331 = vmatmul.bf16.gmra.mxu0 %v1984
    %v2332 = vpop.f32.mrf.mxu0
    %v2333 = vadd.f32 %v2244, %v2332
    %v2334 = vpop.f32.mrf.mxu0
    %v2335 = vadd.f32 %v2246, %v2334
    %2336 = vmatmul.bf16.gmra.mxu0 %v1986
    %v2337 = vpop.f32.mrf.mxu0
    %v2338 = vadd.f32 %v2249, %v2337
    %v2339 = vpop.f32.mrf.mxu0
    %v2340 = vadd.f32 %v2251, %v2339
    %2341 = vmatmul.bf16.gmra.mxu0 %v1988
    %v2342 = vpop.f32.mrf.mxu0
    %v2343 = vadd.f32 %v2254, %v2342
    %v2344 = vpop.f32.mrf.mxu0
    %v2345 = vadd.f32 %v2256, %v2344
    %2346 = vmatmul.bf16.gmra.mxu0 %v1990
    %v2347 = vpop.f32.mrf.mxu0
    %v2348 = vadd.f32 %v2259, %v2347
    %v2349 = vpop.f32.mrf.mxu0
    %v2350 = vadd.f32 %v2261, %v2349
    %2351 = vmatmul.bf16.gmra.mxu0 %v1992
    %v2352 = vpop.f32.mrf.mxu0
    %v2353 = vadd.f32 %v2264, %v2352
    %v2354 = vpop.f32.mrf.mxu0
    %v2355 = vadd.f32 %v2266, %v2354
    %2356 = vmatmul.bf16.gmra.mxu0 %v1994
    %v2357 = vpop.f32.mrf.mxu0
    %v2358 = vadd.f32 %v2269, %v2357
    %v2359 = vpop.f32.mrf.mxu0
    %v2360 = vadd.f32 %v2271, %v2359
    %2361 = vmatmul.bf16.gmra.mxu0 %v1996
    %v2362 = vpop.f32.mrf.mxu0
    %v2363 = vadd.f32 %v2274, %v2362
    %v2364 = vpop.f32.mrf.mxu0
    %v2365 = vadd.f32 %v2276, %v2364
    %2366 = vmatmul.bf16.gmra.mxu0 %v1998
    %v2367 = vpop.f32.mrf.mxu0
    %v2368 = vadd.f32 %v2279, %v2367
    %v2369 = vpop.f32.mrf.mxu0
    %v2370 = vadd.f32 %v2281, %v2369
    %2371 = vmatmul.bf16.gmra.mxu0 %v2000
    %v2372 = vpop.f32.mrf.mxu0
    %v2373 = vadd.f32 %v2284, %v2372
    %v2374 = vpop.f32.mrf.mxu0
    %v2375 = vadd.f32 %v2286, %v2374
    %2376 = vdwg.mxu0
    %2377 = vmatpush.bf16.msra.mxu0 %v2150
    %2378 = vmatpush.bf16.msra.mxu0 %v2148
    %2379 = vmatpush.bf16.msra.mxu0 %v2146
    %2380 = vmatpush.bf16.msra.mxu0 %v2144
    %2381 = vmatpush.bf16.msra.mxu0 %v2142
    %2382 = vmatpush.bf16.msra.mxu0 %v2140
    %2383 = vmatpush.bf16.msra.mxu0 %v2138
    %2384 = vmatpush.bf16.msra.mxu0 %v2136
    %2385 = vmatmul.bf16.gmra.mxu0 %v1969
    %v2386 = vpop.f32.mrf.mxu0
    %v2387 = vadd.f32 %v2036, %v2386
    %v2388 = vpop.f32.mrf.mxu0
    %v2389 = vadd.f32 %v2036, %v2388
    %2390 = vmatmul.bf16.gmra.mxu0 %v1971
    %v2391 = vpop.f32.mrf.mxu0
    %v2392 = vadd.f32 %v2036, %v2391
    %v2393 = vpop.f32.mrf.mxu0
    %v2394 = vadd.f32 %v2036, %v2393
    %2395 = vmatmul.bf16.gmra.mxu0 %v1973
    %v2396 = vpop.f32.mrf.mxu0
    %v2397 = vadd.f32 %v2036, %v2396
    %v2398 = vpop.f32.mrf.mxu0
    %v2399 = vadd.f32 %v2036, %v2398
    %2400 = vmatmul.bf16.gmra.mxu0 %v1975
    %v2401 = vpop.f32.mrf.mxu0
    %v2402 = vadd.f32 %v2036, %v2401
    %v2403 = vpop.f32.mrf.mxu0
    %v2404 = vadd.f32 %v2036, %v2403
    %2405 = vmatmul.bf16.gmra.mxu0 %v1977
    %v2406 = vpop.f32.mrf.mxu0
    %v2407 = vadd.f32 %v2036, %v2406
    %v2408 = vpop.f32.mrf.mxu0
    %v2409 = vadd.f32 %v2036, %v2408
    %2410 = vmatmul.bf16.gmra.mxu0 %v1979
    %v2411 = vpop.f32.mrf.mxu0
    %v2412 = vadd.f32 %v2036, %v2411
    %v2413 = vpop.f32.mrf.mxu0
    %v2414 = vadd.f32 %v2036, %v2413
    %2415 = vmatmul.bf16.gmra.mxu0 %v1981
    %v2416 = vpop.f32.mrf.mxu0
    %v2417 = vadd.f32 %v2036, %v2416
    %v2418 = vpop.f32.mrf.mxu0
    %v2419 = vadd.f32 %v2036, %v2418
    %2420 = vmatmul.bf16.gmra.mxu0 %v1983
    %v2421 = vpop.f32.mrf.mxu0
    %v2422 = vadd.f32 %v2036, %v2421
    %v2423 = vpop.f32.mrf.mxu0
    %v2424 = vadd.f32 %v2036, %v2423
    %2425 = vmatmul.bf16.gmra.mxu0 %v1985
    %v2426 = vpop.f32.mrf.mxu0
    %v2427 = vadd.f32 %v2036, %v2426
    %v2428 = vpop.f32.mrf.mxu0
    %v2429 = vadd.f32 %v2036, %v2428
    %2430 = vmatmul.bf16.gmra.mxu0 %v1987
    %v2431 = vpop.f32.mrf.mxu0
    %v2432 = vadd.f32 %v2036, %v2431
    %v2433 = vpop.f32.mrf.mxu0
    %v2434 = vadd.f32 %v2036, %v2433
    %2435 = vmatmul.bf16.gmra.mxu0 %v1989
    %v2436 = vpop.f32.mrf.mxu0
    %v2437 = vadd.f32 %v2036, %v2436
    %v2438 = vpop.f32.mrf.mxu0
    %v2439 = vadd.f32 %v2036, %v2438
    %2440 = vmatmul.bf16.gmra.mxu0 %v1991
    %v2441 = vpop.f32.mrf.mxu0
    %v2442 = vadd.f32 %v2036, %v2441
    %v2443 = vpop.f32.mrf.mxu0
    %v2444 = vadd.f32 %v2036, %v2443
    %2445 = vmatmul.bf16.gmra.mxu0 %v1993
    %v2446 = vpop.f32.mrf.mxu0
    %v2447 = vadd.f32 %v2036, %v2446
    %v2448 = vpop.f32.mrf.mxu0
    %v2449 = vadd.f32 %v2036, %v2448
    %2450 = vmatmul.bf16.gmra.mxu0 %v1995
    %v2451 = vpop.f32.mrf.mxu0
    %v2452 = vadd.f32 %v2036, %v2451
    %v2453 = vpop.f32.mrf.mxu0
    %v2454 = vadd.f32 %v2036, %v2453
    %2455 = vmatmul.bf16.gmra.mxu0 %v1997
    %v2456 = vpop.f32.mrf.mxu0
    %v2457 = vadd.f32 %v2036, %v2456
    %v2458 = vpop.f32.mrf.mxu0
    %v2459 = vadd.f32 %v2036, %v2458
    %2460 = vmatmul.bf16.gmra.mxu0 %v1999
    %v2461 = vpop.f32.mrf.mxu0
    %v2462 = vadd.f32 %v2036, %v2461
    %v2463 = vpop.f32.mrf.mxu0
    %v2464 = vadd.f32 %v2036, %v2463
    %2465 = vdwg.mxu0
    %2466 = vmatpush.bf16.msra.mxu0 %v2166
    %2467 = vmatpush.bf16.msra.mxu0 %v2164
    %2468 = vmatpush.bf16.msra.mxu0 %v2162
    %2469 = vmatpush.bf16.msra.mxu0 %v2160
    %2470 = vmatpush.bf16.msra.mxu0 %v2158
    %2471 = vmatpush.bf16.msra.mxu0 %v2156
    %2472 = vmatpush.bf16.msra.mxu0 %v2154
    %2473 = vmatpush.bf16.msra.mxu0 %v2152
    %2474 = vmatmul.bf16.gmra.mxu0 %v1970
    %v2475 = vpop.f32.mrf.mxu0
    %v2476 = vadd.f32 %v2387, %v2475
    %v2477 = vpop.f32.mrf.mxu0
    %v2478 = vadd.f32 %v2389, %v2477
    %2479 = vmatmul.bf16.gmra.mxu0 %v1972
    %v2480 = vpop.f32.mrf.mxu0
    %v2481 = vadd.f32 %v2392, %v2480
    %v2482 = vpop.f32.mrf.mxu0
    %v2483 = vadd.f32 %v2394, %v2482
    %2484 = vmatmul.bf16.gmra.mxu0 %v1974
    %v2485 = vpop.f32.mrf.mxu0
    %v2486 = vadd.f32 %v2397, %v2485
    %v2487 = vpop.f32.mrf.mxu0
    %v2488 = vadd.f32 %v2399, %v2487
    %2489 = vmatmul.bf16.gmra.mxu0 %v1976
    %v2490 = vpop.f32.mrf.mxu0
    %v2491 = vadd.f32 %v2402, %v2490
    %v2492 = vpop.f32.mrf.mxu0
    %v2493 = vadd.f32 %v2404, %v2492
    %2494 = vmatmul.bf16.gmra.mxu0 %v1978
    %v2495 = vpop.f32.mrf.mxu0
    %v2496 = vadd.f32 %v2407, %v2495
    %v2497 = vpop.f32.mrf.mxu0
    %v2498 = vadd.f32 %v2409, %v2497
    %2499 = vmatmul.bf16.gmra.mxu0 %v1980
    %v2500 = vpop.f32.mrf.mxu0
    %v2501 = vadd.f32 %v2412, %v2500
    %v2502 = vpop.f32.mrf.mxu0
    %v2503 = vadd.f32 %v2414, %v2502
    %2504 = vmatmul.bf16.gmra.mxu0 %v1982
    %v2505 = vpop.f32.mrf.mxu0
    %v2506 = vadd.f32 %v2417, %v2505
    %v2507 = vpop.f32.mrf.mxu0
    %v2508 = vadd.f32 %v2419, %v2507
    %2509 = vmatmul.bf16.gmra.mxu0 %v1984
    %v2510 = vpop.f32.mrf.mxu0
    %v2511 = vadd.f32 %v2422, %v2510
    %v2512 = vpop.f32.mrf.mxu0
    %v2513 = vadd.f32 %v2424, %v2512
    %2514 = vmatmul.bf16.gmra.mxu0 %v1986
    %v2515 = vpop.f32.mrf.mxu0
    %v2516 = vadd.f32 %v2427, %v2515
    %v2517 = vpop.f32.mrf.mxu0
    %v2518 = vadd.f32 %v2429, %v2517
    %2519 = vmatmul.bf16.gmra.mxu0 %v1988
    %v2520 = vpop.f32.mrf.mxu0
    %v2521 = vadd.f32 %v2432, %v2520
    %v2522 = vpop.f32.mrf.mxu0
    %v2523 = vadd.f32 %v2434, %v2522
    %2524 = vmatmul.bf16.gmra.mxu0 %v1990
    %v2525 = vpop.f32.mrf.mxu0
    %v2526 = vadd.f32 %v2437, %v2525
    %v2527 = vpop.f32.mrf.mxu0
    %v2528 = vadd.f32 %v2439, %v2527
    %2529 = vmatmul.bf16.gmra.mxu0 %v1992
    %v2530 = vpop.f32.mrf.mxu0
    %v2531 = vadd.f32 %v2442, %v2530
    %v2532 = vpop.f32.mrf.mxu0
    %v2533 = vadd.f32 %v2444, %v2532
    %2534 = vmatmul.bf16.gmra.mxu0 %v1994
    %v2535 = vpop.f32.mrf.mxu0
    %v2536 = vadd.f32 %v2447, %v2535
    %v2537 = vpop.f32.mrf.mxu0
    %v2538 = vadd.f32 %v2449, %v2537
    %2539 = vmatmul.bf16.gmra.mxu0 %v1996
    %v2540 = vpop.f32.mrf.mxu0
    %v2541 = vadd.f32 %v2452, %v2540
    %v2542 = vpop.f32.mrf.mxu0
    %v2543 = vadd.f32 %v2454, %v2542
    %2544 = vmatmul.bf16.gmra.mxu0 %v1998
    %v2545 = vpop.f32.mrf.mxu0
    %v2546 = vadd.f32 %v2457, %v2545
    %v2547 = vpop.f32.mrf.mxu0
    %v2548 = vadd.f32 %v2459, %v2547
    %2549 = vmatmul.bf16.gmra.mxu0 %v2000
    %v2550 = vpop.f32.mrf.mxu0
    %v2551 = vadd.f32 %v2462, %v2550
    %v2552 = vpop.f32.mrf.mxu0
    %v2553 = vadd.f32 %v2464, %v2552
    %2554 = vdwg.mxu0
    %v2555 = vmax.f32 %v2298, 0.0
    %v2556 = vmax.f32 %v2476, 0.0
    %v2557 = vmax.f32 %v2300, 0.0
    %v2558 = vmax.f32 %v2478, 0.0
    %v2559 = vmax.f32 %v2303, 0.0
    %v2560 = vmax.f32 %v2481, 0.0
    %v2561 = vmax.f32 %v2305, 0.0
    %v2562 = vmax.f32 %v2483, 0.0
    %v2563 = vmax.f32 %v2308, 0.0
    %v2564 = vmax.f32 %v2486, 0.0
    %v2565 = vmax.f32 %v2310, 0.0
    %v2566 = vmax.f32 %v2488, 0.0
    %v2567 = vmax.f32 %v2313, 0.0
    %v2568 = vmax.f32 %v2491, 0.0
    %v2569 = vmax.f32 %v2315, 0.0
    %v2570 = vmax.f32 %v2493, 0.0
    %v2571 = vmax.f32 %v2318, 0.0
    %v2572 = vmax.f32 %v2496, 0.0
    %v2573 = vmax.f32 %v2320, 0.0
    %v2574 = vmax.f32 %v2498, 0.0
    %v2575 = vmax.f32 %v2323, 0.0
    %v2576 = vmax.f32 %v2501, 0.0
    %v2577 = vmax.f32 %v2325, 0.0
    %v2578 = vmax.f32 %v2503, 0.0
    %v2579 = vmax.f32 %v2328, 0.0
    %v2580 = vmax.f32 %v2506, 0.0
    %v2581 = vmax.f32 %v2330, 0.0
    %v2582 = vmax.f32 %v2508, 0.0
    %v2583 = vmax.f32 %v2333, 0.0
    %v2584 = vmax.f32 %v2511, 0.0
    %v2585 = vmax.f32 %v2335, 0.0
    %v2586 = vmax.f32 %v2513, 0.0
    %v2587 = vmax.f32 %v2338, 0.0
    %v2588 = vmax.f32 %v2516, 0.0
    %v2589 = vmax.f32 %v2340, 0.0
    %v2590 = vmax.f32 %v2518, 0.0
    %v2591 = vmax.f32 %v2343, 0.0
    %v2592 = vmax.f32 %v2521, 0.0
    %v2593 = vmax.f32 %v2345, 0.0
    %v2594 = vmax.f32 %v2523, 0.0
    %v2595 = vmax.f32 %v2348, 0.0
    %v2596 = vmax.f32 %v2526, 0.0
    %v2597 = vmax.f32 %v2350, 0.0
    %v2598 = vmax.f32 %v2528, 0.0
    %v2599 = vmax.f32 %v2353, 0.0
    %v2600 = vmax.f32 %v2531, 0.0
    %v2601 = vmax.f32 %v2355, 0.0
    %v2602 = vmax.f32 %v2533, 0.0
    %v2603 = vmax.f32 %v2358, 0.0
    %v2604 = vmax.f32 %v2536, 0.0
    %v2605 = vmax.f32 %v2360, 0.0
    %v2606 = vmax.f32 %v2538, 0.0
    %v2607 = vmax.f32 %v2363, 0.0
    %v2608 = vmax.f32 %v2541, 0.0
    %v2609 = vmax.f32 %v2365, 0.0
    %v2610 = vmax.f32 %v2543, 0.0
    %v2611 = vmax.f32 %v2368, 0.0
    %v2612 = vmax.f32 %v2546, 0.0
    %v2613 = vmax.f32 %v2370, 0.0
    %v2614 = vmax.f32 %v2548, 0.0
    %v2615 = vmax.f32 %v2373, 0.0
    %v2616 = vmax.f32 %v2551, 0.0
    %v2617 = vmax.f32 %v2375, 0.0
    %v2618 = vmax.f32 %v2553, 0.0
    %v2619 = vpack.c.bf16 %v2557, %v2555
    %v2620 = vpack.c.bf16 %v2558, %v2556
    %v2621 = vpack.c.bf16 %v2561, %v2559
    %v2622 = vpack.c.bf16 %v2562, %v2560
    %v2623 = vpack.c.bf16 %v2565, %v2563
    %v2624 = vpack.c.bf16 %v2566, %v2564
    %v2625 = vpack.c.bf16 %v2569, %v2567
    %v2626 = vpack.c.bf16 %v2570, %v2568
    %v2627 = vpack.c.bf16 %v2573, %v2571
    %v2628 = vpack.c.bf16 %v2574, %v2572
    %v2629 = vpack.c.bf16 %v2577, %v2575
    %v2630 = vpack.c.bf16 %v2578, %v2576
    %v2631 = vpack.c.bf16 %v2581, %v2579
    %v2632 = vpack.c.bf16 %v2582, %v2580
    %v2633 = vpack.c.bf16 %v2585, %v2583
    %v2634 = vpack.c.bf16 %v2586, %v2584
    %v2635 = vpack.c.bf16 %v2589, %v2587
    %v2636 = vpack.c.bf16 %v2590, %v2588
    %v2637 = vpack.c.bf16 %v2593, %v2591
    %v2638 = vpack.c.bf16 %v2594, %v2592
    %v2639 = vpack.c.bf16 %v2597, %v2595
    %v2640 = vpack.c.bf16 %v2598, %v2596
    %v2641 = vpack.c.bf16 %v2601, %v2599
    %v2642 = vpack.c.bf16 %v2602, %v2600
    %v2643 = vpack.c.bf16 %v2605, %v2603
    %v2644 = vpack.c.bf16 %v2606, %v2604
    %v2645 = vpack.c.bf16 %v2609, %v2607
    %v2646 = vpack.c.bf16 %v2610, %v2608
    %v2647 = vpack.c.bf16 %v2613, %v2611
    %v2648 = vpack.c.bf16 %v2614, %v2612
    %v2649 = vpack.c.bf16 %v2617, %v2615
    %v2650 = vpack.c.bf16 %v2618, %v2616
    %v2651 = vld [vmem:[#allocation10] sm:$0xf]
    %v2652 = vld [vmem:[#allocation10 + $0x4] sm:$0xf]
    %v2653 = vld [vmem:[#allocation10 + $0x8] sm:$0xf]
    %v2654 = vld [vmem:[#allocation10 + $0xc] sm:$0xf]
    %v2655 = vld [vmem:[#allocation10 + $0x10] sm:$0xf]
    %v2656 = vld [vmem:[#allocation10 + $0x14] sm:$0xf]
    %v2657 = vld [vmem:[#allocation10 + $0x18] sm:$0xf]
    %v2658 = vld [vmem:[#allocation10 + $0x1c] sm:$0xf]
    %v2659 = vld [vmem:[#allocation10 + $0x20] sm:$0xf]
    %v2660 = vld [vmem:[#allocation10 + $0x24] sm:$0xf]
    %v2661 = vld [vmem:[#allocation10 + $0x28] sm:$0xf]
    %v2662 = vld [vmem:[#allocation10 + $0x2c] sm:$0xf]
    %v2663 = vld [vmem:[#allocation10 + $0x30] sm:$0xf]
    %v2664 = vld [vmem:[#allocation10 + $0x34] sm:$0xf]
    %v2665 = vld [vmem:[#allocation10 + $0x38] sm:$0xf]
    %v2666 = vld [vmem:[#allocation10 + $0x3c] sm:$0xf]
    %v2667 = vld [vmem:[#allocation10 + $0x40] sm:$0xf]
    %v2668 = vld [vmem:[#allocation10 + $0x44] sm:$0xf]
    %v2669 = vld [vmem:[#allocation10 + $0x48] sm:$0xf]
    %v2670 = vld [vmem:[#allocation10 + $0x4c] sm:$0xf]
    %v2671 = vld [vmem:[#allocation10 + $0x50] sm:$0xf]
    %v2672 = vld [vmem:[#allocation10 + $0x54] sm:$0xf]
    %v2673 = vld [vmem:[#allocation10 + $0x58] sm:$0xf]
    %v2674 = vld [vmem:[#allocation10 + $0x5c] sm:$0xf]
    %v2675 = vld [vmem:[#allocation10 + $0x60] sm:$0xf]
    %v2676 = vld [vmem:[#allocation10 + $0x64] sm:$0xf]
    %v2677 = vld [vmem:[#allocation10 + $0x68] sm:$0xf]
    %v2678 = vld [vmem:[#allocation10 + $0x6c] sm:$0xf]
    %v2679 = vld [vmem:[#allocation10 + $0x70] sm:$0xf]
    %v2680 = vld [vmem:[#allocation10 + $0x74] sm:$0xf]
    %v2681 = vld [vmem:[#allocation10 + $0x78] sm:$0xf]
    %v2682 = vld [vmem:[#allocation10 + $0x7c] sm:$0xf]
    %v2683 = vld [vmem:[%s6] sm:$0x1]
    %v2685 = vperm.slane %v2683, 0
    %v2719 = vunpack.c.l.b16 %v2651
    %v2720 = vunpack.c.l.b16 %v2652
    %v2721 = vunpack.c.l.b16 %v2653
    %v2722 = vunpack.c.l.b16 %v2654
    %v2723 = vunpack.c.l.b16 %v2655
    %v2724 = vunpack.c.l.b16 %v2656
    %v2725 = vunpack.c.l.b16 %v2657
    %v2726 = vunpack.c.l.b16 %v2658
    %v2727 = vunpack.c.l.b16 %v2659
    %v2728 = vunpack.c.l.b16 %v2660
    %v2729 = vunpack.c.l.b16 %v2661
    %v2730 = vunpack.c.l.b16 %v2662
    %v2731 = vunpack.c.l.b16 %v2663
    %v2732 = vunpack.c.l.b16 %v2664
    %v2733 = vunpack.c.l.b16 %v2665
    %v2734 = vunpack.c.l.b16 %v2666
    %v2735 = vunpack.c.l.b16 %v2667
    %v2736 = vunpack.c.l.b16 %v2668
    %v2737 = vunpack.c.l.b16 %v2669
    %v2738 = vunpack.c.l.b16 %v2670
    %v2739 = vunpack.c.l.b16 %v2671
    %v2740 = vunpack.c.l.b16 %v2672
    %v2741 = vunpack.c.l.b16 %v2673
    %v2742 = vunpack.c.l.b16 %v2674
    %v2743 = vunpack.c.l.b16 %v2675
    %v2744 = vunpack.c.l.b16 %v2676
    %v2745 = vunpack.c.l.b16 %v2677
    %v2746 = vunpack.c.l.b16 %v2678
    %v2747 = vunpack.c.l.b16 %v2679
    %v2748 = vunpack.c.l.b16 %v2680
    %v2749 = vunpack.c.l.b16 %v2681
    %v2750 = vunpack.c.l.b16 %v2682
    %v2751 = vpack.c.b16 %v2720, %v2719
    %v2752 = vpack.c.b16 %v2722, %v2721
    %v2753 = vpack.c.b16 %v2724, %v2723
    %v2754 = vpack.c.b16 %v2726, %v2725
    %v2755 = vpack.c.b16 %v2728, %v2727
    %v2756 = vpack.c.b16 %v2730, %v2729
    %v2757 = vpack.c.b16 %v2732, %v2731
    %v2758 = vpack.c.b16 %v2734, %v2733
    %v2759 = vpack.c.b16 %v2736, %v2735
    %v2760 = vpack.c.b16 %v2738, %v2737
    %v2761 = vpack.c.b16 %v2740, %v2739
    %v2762 = vpack.c.b16 %v2742, %v2741
    %v2763 = vpack.c.b16 %v2744, %v2743
    %v2764 = vpack.c.b16 %v2746, %v2745
    %v2765 = vpack.c.b16 %v2748, %v2747
    %v2766 = vpack.c.b16 %v2750, %v2749
    %2783 = vmatpush.bf16.msra.mxu0 %v2758
    %2784 = vmatpush.bf16.msra.mxu0 %v2757
    %2785 = vmatpush.bf16.msra.mxu0 %v2756
    %2786 = vmatpush.bf16.msra.mxu0 %v2755
    %2787 = vmatpush.bf16.msra.mxu0 %v2754
    %2788 = vmatpush.bf16.msra.mxu0 %v2753
    %2789 = vmatpush.bf16.msra.mxu0 %v2752
    %2790 = vmatpush.bf16.msra.mxu0 %v2751
    %2791 = vmatmul.bf16.gmra.mxu0 %v2619
    %v2792 = vpop.f32.mrf.mxu0
    %v2793 = vadd.f32 %v2685, %v2792
    %v2794 = vpop.f32.mrf.mxu0
    %v2795 = vadd.f32 %v2685, %v2794
    %2796 = vmatmul.bf16.gmra.mxu0 %v2621
    %v2797 = vpop.f32.mrf.mxu0
    %v2798 = vadd.f32 %v2685, %v2797
    %v2799 = vpop.f32.mrf.mxu0
    %v2800 = vadd.f32 %v2685, %v2799
    %2801 = vmatmul.bf16.gmra.mxu0 %v2623
    %v2802 = vpop.f32.mrf.mxu0
    %v2803 = vadd.f32 %v2685, %v2802
    %v2804 = vpop.f32.mrf.mxu0
    %v2805 = vadd.f32 %v2685, %v2804
    %2806 = vmatmul.bf16.gmra.mxu0 %v2625
    %v2807 = vpop.f32.mrf.mxu0
    %v2808 = vadd.f32 %v2685, %v2807
    %v2809 = vpop.f32.mrf.mxu0
    %v2810 = vadd.f32 %v2685, %v2809
    %2811 = vmatmul.bf16.gmra.mxu0 %v2627
    %v2812 = vpop.f32.mrf.mxu0
    %v2813 = vadd.f32 %v2685, %v2812
    %v2814 = vpop.f32.mrf.mxu0
    %v2815 = vadd.f32 %v2685, %v2814
    %2816 = vmatmul.bf16.gmra.mxu0 %v2629
    %v2817 = vpop.f32.mrf.mxu0
    %v2818 = vadd.f32 %v2685, %v2817
    %v2819 = vpop.f32.mrf.mxu0
    %v2820 = vadd.f32 %v2685, %v2819
    %2821 = vmatmul.bf16.gmra.mxu0 %v2631
    %v2822 = vpop.f32.mrf.mxu0
    %v2823 = vadd.f32 %v2685, %v2822
    %v2824 = vpop.f32.mrf.mxu0
    %v2825 = vadd.f32 %v2685, %v2824
    %2826 = vmatmul.bf16.gmra.mxu0 %v2633
    %v2827 = vpop.f32.mrf.mxu0
    %v2828 = vadd.f32 %v2685, %v2827
    %v2829 = vpop.f32.mrf.mxu0
    %v2830 = vadd.f32 %v2685, %v2829
    %2831 = vmatmul.bf16.gmra.mxu0 %v2635
    %v2832 = vpop.f32.mrf.mxu0
    %v2833 = vadd.f32 %v2685, %v2832
    %v2834 = vpop.f32.mrf.mxu0
    %v2835 = vadd.f32 %v2685, %v2834
    %2836 = vmatmul.bf16.gmra.mxu0 %v2637
    %v2837 = vpop.f32.mrf.mxu0
    %v2838 = vadd.f32 %v2685, %v2837
    %v2839 = vpop.f32.mrf.mxu0
    %v2840 = vadd.f32 %v2685, %v2839
    %2841 = vmatmul.bf16.gmra.mxu0 %v2639
    %v2842 = vpop.f32.mrf.mxu0
    %v2843 = vadd.f32 %v2685, %v2842
    %v2844 = vpop.f32.mrf.mxu0
    %v2845 = vadd.f32 %v2685, %v2844
    %2846 = vmatmul.bf16.gmra.mxu0 %v2641
    %v2847 = vpop.f32.mrf.mxu0
    %v2848 = vadd.f32 %v2685, %v2847
    %v2849 = vpop.f32.mrf.mxu0
    %v2850 = vadd.f32 %v2685, %v2849
    %2851 = vmatmul.bf16.gmra.mxu0 %v2643
    %v2852 = vpop.f32.mrf.mxu0
    %v2853 = vadd.f32 %v2685, %v2852
    %v2854 = vpop.f32.mrf.mxu0
    %v2855 = vadd.f32 %v2685, %v2854
    %2856 = vmatmul.bf16.gmra.mxu0 %v2645
    %v2857 = vpop.f32.mrf.mxu0
    %v2858 = vadd.f32 %v2685, %v2857
    %v2859 = vpop.f32.mrf.mxu0
    %v2860 = vadd.f32 %v2685, %v2859
    %2861 = vmatmul.bf16.gmra.mxu0 %v2647
    %v2862 = vpop.f32.mrf.mxu0
    %v2863 = vadd.f32 %v2685, %v2862
    %v2864 = vpop.f32.mrf.mxu0
    %v2865 = vadd.f32 %v2685, %v2864
    %2866 = vmatmul.bf16.gmra.mxu0 %v2649
    %v2867 = vpop.f32.mrf.mxu0
    %v2868 = vadd.f32 %v2685, %v2867
    %v2869 = vpop.f32.mrf.mxu0
    %v2870 = vadd.f32 %v2685, %v2869
    %2871 = vdwg.mxu0
    %2872 = vmatpush.bf16.msra.mxu0 %v2766
    %2873 = vmatpush.bf16.msra.mxu0 %v2765
    %2874 = vmatpush.bf16.msra.mxu0 %v2764
    %2875 = vmatpush.bf16.msra.mxu0 %v2763
    %2876 = vmatpush.bf16.msra.mxu0 %v2762
    %2877 = vmatpush.bf16.msra.mxu0 %v2761
    %2878 = vmatpush.bf16.msra.mxu0 %v2760
    %2879 = vmatpush.bf16.msra.mxu0 %v2759
    %2880 = vmatmul.bf16.gmra.mxu0 %v2620
    %v2881 = vpop.f32.mrf.mxu0
    %v2882 = vadd.f32 %v2793, %v2881
    %v2883 = vpop.f32.mrf.mxu0
    %v2884 = vadd.f32 %v2795, %v2883
    %2885 = vmatmul.bf16.gmra.mxu0 %v2622
    %v2886 = vpop.f32.mrf.mxu0
    %v2887 = vadd.f32 %v2798, %v2886
    %v2888 = vpop.f32.mrf.mxu0
    %v2889 = vadd.f32 %v2800, %v2888
    %2890 = vmatmul.bf16.gmra.mxu0 %v2624
    %v2891 = vpop.f32.mrf.mxu0
    %v2892 = vadd.f32 %v2803, %v2891
    %v2893 = vpop.f32.mrf.mxu0
    %v2894 = vadd.f32 %v2805, %v2893
    %2895 = vmatmul.bf16.gmra.mxu0 %v2626
    %v2896 = vpop.f32.mrf.mxu0
    %v2897 = vadd.f32 %v2808, %v2896
    %v2898 = vpop.f32.mrf.mxu0
    %v2899 = vadd.f32 %v2810, %v2898
    %2900 = vmatmul.bf16.gmra.mxu0 %v2628
    %v2901 = vpop.f32.mrf.mxu0
    %v2902 = vadd.f32 %v2813, %v2901
    %v2903 = vpop.f32.mrf.mxu0
    %v2904 = vadd.f32 %v2815, %v2903
    %2905 = vmatmul.bf16.gmra.mxu0 %v2630
    %v2906 = vpop.f32.mrf.mxu0
    %v2907 = vadd.f32 %v2818, %v2906
    %v2908 = vpop.f32.mrf.mxu0
    %v2909 = vadd.f32 %v2820, %v2908
    %2910 = vmatmul.bf16.gmra.mxu0 %v2632
    %v2911 = vpop.f32.mrf.mxu0
    %v2912 = vadd.f32 %v2823, %v2911
    %v2913 = vpop.f32.mrf.mxu0
    %v2914 = vadd.f32 %v2825, %v2913
    %2915 = vmatmul.bf16.gmra.mxu0 %v2634
    %v2916 = vpop.f32.mrf.mxu0
    %v2917 = vadd.f32 %v2828, %v2916
    %v2918 = vpop.f32.mrf.mxu0
    %v2919 = vadd.f32 %v2830, %v2918
    %2920 = vmatmul.bf16.gmra.mxu0 %v2636
    %v2921 = vpop.f32.mrf.mxu0
    %v2922 = vadd.f32 %v2833, %v2921
    %v2923 = vpop.f32.mrf.mxu0
    %v2924 = vadd.f32 %v2835, %v2923
    %2925 = vmatmul.bf16.gmra.mxu0 %v2638
    %v2926 = vpop.f32.mrf.mxu0
    %v2927 = vadd.f32 %v2838, %v2926
    %v2928 = vpop.f32.mrf.mxu0
    %v2929 = vadd.f32 %v2840, %v2928
    %2930 = vmatmul.bf16.gmra.mxu0 %v2640
    %v2931 = vpop.f32.mrf.mxu0
    %v2932 = vadd.f32 %v2843, %v2931
    %v2933 = vpop.f32.mrf.mxu0
    %v2934 = vadd.f32 %v2845, %v2933
    %2935 = vmatmul.bf16.gmra.mxu0 %v2642
    %v2936 = vpop.f32.mrf.mxu0
    %v2937 = vadd.f32 %v2848, %v2936
    %v2938 = vpop.f32.mrf.mxu0
    %v2939 = vadd.f32 %v2850, %v2938
    %2940 = vmatmul.bf16.gmra.mxu0 %v2644
    %v2941 = vpop.f32.mrf.mxu0
    %v2942 = vadd.f32 %v2853, %v2941
    %v2943 = vpop.f32.mrf.mxu0
    %v2944 = vadd.f32 %v2855, %v2943
    %2945 = vmatmul.bf16.gmra.mxu0 %v2646
    %v2946 = vpop.f32.mrf.mxu0
    %v2947 = vadd.f32 %v2858, %v2946
    %v2948 = vpop.f32.mrf.mxu0
    %v2949 = vadd.f32 %v2860, %v2948
    %2950 = vmatmul.bf16.gmra.mxu0 %v2648
    %v2951 = vpop.f32.mrf.mxu0
    %v2952 = vadd.f32 %v2863, %v2951
    %v2953 = vpop.f32.mrf.mxu0
    %v2954 = vadd.f32 %v2865, %v2953
    %2955 = vmatmul.bf16.gmra.mxu0 %v2650
    %v2956 = vpop.f32.mrf.mxu0
    %v2957 = vadd.f32 %v2868, %v2956
    %v2958 = vpop.f32.mrf.mxu0
    %v2959 = vadd.f32 %v2870, %v2958
    %2960 = vdwg.mxu0
    %v2961 = vmax.f32 %v2882, 0.0
    %v2962 = vmax.f32 %v2884, 0.0
    %v2963 = vmax.f32 %v2887, 0.0
    %v2964 = vmax.f32 %v2889, 0.0
    %v2965 = vmax.f32 %v2892, 0.0
    %v2966 = vmax.f32 %v2894, 0.0
    %v2967 = vmax.f32 %v2897, 0.0
    %v2968 = vmax.f32 %v2899, 0.0
    %v2969 = vmax.f32 %v2902, 0.0
    %v2970 = vmax.f32 %v2904, 0.0
    %v2971 = vmax.f32 %v2907, 0.0
    %v2972 = vmax.f32 %v2909, 0.0
    %v2973 = vmax.f32 %v2912, 0.0
    %v2974 = vmax.f32 %v2914, 0.0
    %v2975 = vmax.f32 %v2917, 0.0
    %v2976 = vmax.f32 %v2919, 0.0
    %v2977 = vmax.f32 %v2922, 0.0
    %v2978 = vmax.f32 %v2924, 0.0
    %v2979 = vmax.f32 %v2927, 0.0
    %v2980 = vmax.f32 %v2929, 0.0
    %v2981 = vmax.f32 %v2932, 0.0
    %v2982 = vmax.f32 %v2934, 0.0
    %v2983 = vmax.f32 %v2937, 0.0
    %v2984 = vmax.f32 %v2939, 0.0
    %v2985 = vmax.f32 %v2942, 0.0
    %v2986 = vmax.f32 %v2944, 0.0
    %v2987 = vmax.f32 %v2947, 0.0
    %v2988 = vmax.f32 %v2949, 0.0
    %v2989 = vmax.f32 %v2952, 0.0
    %v2990 = vmax.f32 %v2954, 0.0
    %v2991 = vmax.f32 %v2957, 0.0
    %v2992 = vmax.f32 %v2959, 0.0
    %v2993 = vpack.c.bf16 %v2962, %v2961
    %v2994 = vpack.c.bf16 %v2964, %v2963
    %v2995 = vpack.c.bf16 %v2966, %v2965
    %v2996 = vpack.c.bf16 %v2968, %v2967
    %v2997 = vpack.c.bf16 %v2970, %v2969
    %v2998 = vpack.c.bf16 %v2972, %v2971
    %v2999 = vpack.c.bf16 %v2974, %v2973
    %v3000 = vpack.c.bf16 %v2976, %v2975
    %v3001 = vpack.c.bf16 %v2978, %v2977
    %v3002 = vpack.c.bf16 %v2980, %v2979
    %v3003 = vpack.c.bf16 %v2982, %v2981
    %v3004 = vpack.c.bf16 %v2984, %v2983
    %v3005 = vpack.c.bf16 %v2986, %v2985
    %v3006 = vpack.c.bf16 %v2988, %v2987
    %v3007 = vpack.c.bf16 %v2990, %v2989
    %v3008 = vpack.c.bf16 %v2992, %v2991
    %v3009 = vld [vmem:[#allocation11] sm:$0xf]
    %v3010 = vld [vmem:[#allocation11 + $0x4] sm:$0xf]
    %v3011 = vld [vmem:[#allocation11 + $0x8] sm:$0xf]
    %v3012 = vld [vmem:[#allocation11 + $0xc] sm:$0xf]
    %v3013 = vld [vmem:[#allocation11 + $0x10] sm:$0xf]
    %v3014 = vld [vmem:[#allocation11 + $0x14] sm:$0xf]
    %v3015 = vld [vmem:[#allocation11 + $0x18] sm:$0xf]
    %v3016 = vld [vmem:[#allocation11 + $0x1c] sm:$0xf]
    %v3017 = vld [vmem:[#allocation11 + $0x20] sm:$0xf]
    %v3018 = vld [vmem:[#allocation11 + $0x24] sm:$0xf]
    %v3019 = vld [vmem:[#allocation11 + $0x28] sm:$0xf]
    %v3020 = vld [vmem:[#allocation11 + $0x2c] sm:$0xf]
    %v3021 = vld [vmem:[#allocation11 + $0x30] sm:$0xf]
    %v3022 = vld [vmem:[#allocation11 + $0x34] sm:$0xf]
    %v3023 = vld [vmem:[#allocation11 + $0x38] sm:$0xf]
    %v3024 = vld [vmem:[#allocation11 + $0x3c] sm:$0xf]
    %v3025 = vld [vmem:[%s8] sm:$0x1]
    %v3027 = vperm.slane %v3025, 0
    %v3045 = vunpack.c.l.b16 %v3009
    %v3046 = vunpack.c.l.b16 %v3010
    %v3047 = vunpack.c.l.b16 %v3011
    %v3048 = vunpack.c.l.b16 %v3012
    %v3049 = vunpack.c.l.b16 %v3013
    %v3050 = vunpack.c.l.b16 %v3014
    %v3051 = vunpack.c.l.b16 %v3015
    %v3052 = vunpack.c.l.b16 %v3016
    %v3053 = vunpack.c.l.b16 %v3017
    %v3054 = vunpack.c.l.b16 %v3018
    %v3055 = vunpack.c.l.b16 %v3019
    %v3056 = vunpack.c.l.b16 %v3020
    %v3057 = vunpack.c.l.b16 %v3021
    %v3058 = vunpack.c.l.b16 %v3022
    %v3059 = vunpack.c.l.b16 %v3023
    %v3060 = vunpack.c.l.b16 %v3024
    %v3061 = vpack.c.b16 %v3046, %v3045
    %v3062 = vpack.c.b16 %v3048, %v3047
    %v3063 = vpack.c.b16 %v3050, %v3049
    %v3064 = vpack.c.b16 %v3052, %v3051
    %v3065 = vpack.c.b16 %v3054, %v3053
    %v3066 = vpack.c.b16 %v3056, %v3055
    %v3067 = vpack.c.b16 %v3058, %v3057
    %v3068 = vpack.c.b16 %v3060, %v3059
    %3077 = vmatpush.bf16.msra.mxu0 %v3068
    %3078 = vmatpush.bf16.msra.mxu0 %v3067
    %3079 = vmatpush.bf16.msra.mxu0 %v3066
    %3080 = vmatpush.bf16.msra.mxu0 %v3065
    %3081 = vmatpush.bf16.msra.mxu0 %v3064
    %3082 = vmatpush.bf16.msra.mxu0 %v3063
    %3083 = vmatpush.bf16.msra.mxu0 %v3062
    %3084 = vmatpush.bf16.msra.mxu0 %v3061
    %3085 = vmatmul.bf16.gmra.mxu0 %v2993
    %v3086 = vpop.f32.mrf.mxu0
    %v3087 = vadd.f32 %v3027, %v3086
    %v3088 = vpop.f32.mrf.mxu0
    %v3089 = vadd.f32 %v3027, %v3088
    %3090 = vmatmul.bf16.gmra.mxu0 %v2994
    %v3091 = vpop.f32.mrf.mxu0
    %v3092 = vadd.f32 %v3027, %v3091
    %v3093 = vpop.f32.mrf.mxu0
    %v3094 = vadd.f32 %v3027, %v3093
    %3095 = vmatmul.bf16.gmra.mxu0 %v2995
    %v3096 = vpop.f32.mrf.mxu0
    %v3097 = vadd.f32 %v3027, %v3096
    %v3098 = vpop.f32.mrf.mxu0
    %v3099 = vadd.f32 %v3027, %v3098
    %3100 = vmatmul.bf16.gmra.mxu0 %v2996
    %v3101 = vpop.f32.mrf.mxu0
    %v3102 = vadd.f32 %v3027, %v3101
    %v3103 = vpop.f32.mrf.mxu0
    %v3104 = vadd.f32 %v3027, %v3103
    %3105 = vmatmul.bf16.gmra.mxu0 %v2997
    %v3106 = vpop.f32.mrf.mxu0
    %v3107 = vadd.f32 %v3027, %v3106
    %v3108 = vpop.f32.mrf.mxu0
    %v3109 = vadd.f32 %v3027, %v3108
    %3110 = vmatmul.bf16.gmra.mxu0 %v2998
    %v3111 = vpop.f32.mrf.mxu0
    %v3112 = vadd.f32 %v3027, %v3111
    %v3113 = vpop.f32.mrf.mxu0
    %v3114 = vadd.f32 %v3027, %v3113
    %3115 = vmatmul.bf16.gmra.mxu0 %v2999
    %v3116 = vpop.f32.mrf.mxu0
    %v3117 = vadd.f32 %v3027, %v3116
    %v3118 = vpop.f32.mrf.mxu0
    %v3119 = vadd.f32 %v3027, %v3118
    %3120 = vmatmul.bf16.gmra.mxu0 %v3000
    %v3121 = vpop.f32.mrf.mxu0
    %v3122 = vadd.f32 %v3027, %v3121
    %v3123 = vpop.f32.mrf.mxu0
    %v3124 = vadd.f32 %v3027, %v3123
    %3125 = vmatmul.bf16.gmra.mxu0 %v3001
    %v3126 = vpop.f32.mrf.mxu0
    %v3127 = vadd.f32 %v3027, %v3126
    %v3128 = vpop.f32.mrf.mxu0
    %v3129 = vadd.f32 %v3027, %v3128
    %3130 = vmatmul.bf16.gmra.mxu0 %v3002
    %v3131 = vpop.f32.mrf.mxu0
    %v3132 = vadd.f32 %v3027, %v3131
    %v3133 = vpop.f32.mrf.mxu0
    %v3134 = vadd.f32 %v3027, %v3133
    %3135 = vmatmul.bf16.gmra.mxu0 %v3003
    %v3136 = vpop.f32.mrf.mxu0
    %v3137 = vadd.f32 %v3027, %v3136
    %v3138 = vpop.f32.mrf.mxu0
    %v3139 = vadd.f32 %v3027, %v3138
    %3140 = vmatmul.bf16.gmra.mxu0 %v3004
    %v3141 = vpop.f32.mrf.mxu0
    %v3142 = vadd.f32 %v3027, %v3141
    %v3143 = vpop.f32.mrf.mxu0
    %v3144 = vadd.f32 %v3027, %v3143
    %3145 = vmatmul.bf16.gmra.mxu0 %v3005
    %v3146 = vpop.f32.mrf.mxu0
    %v3147 = vadd.f32 %v3027, %v3146
    %v3148 = vpop.f32.mrf.mxu0
    %v3149 = vadd.f32 %v3027, %v3148
    %3150 = vmatmul.bf16.gmra.mxu0 %v3006
    %v3151 = vpop.f32.mrf.mxu0
    %v3152 = vadd.f32 %v3027, %v3151
    %v3153 = vpop.f32.mrf.mxu0
    %v3154 = vadd.f32 %v3027, %v3153
    %3155 = vmatmul.bf16.gmra.mxu0 %v3007
    %v3156 = vpop.f32.mrf.mxu0
    %v3157 = vadd.f32 %v3027, %v3156
    %v3158 = vpop.f32.mrf.mxu0
    %v3159 = vadd.f32 %v3027, %v3158
    %3160 = vmatmul.bf16.gmra.mxu0 %v3008
    %v3161 = vpop.f32.mrf.mxu0
    %v3162 = vadd.f32 %v3027, %v3161
    %v3163 = vpop.f32.mrf.mxu0
    %v3164 = vadd.f32 %v3027, %v3163
    %3165 = vdwg.mxu0
    %v3166 = vmax.f32 %v3087, 0.0
    %v3167 = vmax.f32 %v3089, 0.0
    %v3168 = vmax.f32 %v3092, 0.0
    %v3169 = vmax.f32 %v3094, 0.0
    %v3170 = vmax.f32 %v3097, 0.0
    %v3171 = vmax.f32 %v3099, 0.0
    %v3172 = vmax.f32 %v3102, 0.0
    %v3173 = vmax.f32 %v3104, 0.0
    %v3174 = vmax.f32 %v3107, 0.0
    %v3175 = vmax.f32 %v3109, 0.0
    %v3176 = vmax.f32 %v3112, 0.0
    %v3177 = vmax.f32 %v3114, 0.0
    %v3178 = vmax.f32 %v3117, 0.0
    %v3179 = vmax.f32 %v3119, 0.0
    %v3180 = vmax.f32 %v3122, 0.0
    %v3181 = vmax.f32 %v3124, 0.0
    %v3182 = vmax.f32 %v3127, 0.0
    %v3183 = vmax.f32 %v3129, 0.0
    %v3184 = vmax.f32 %v3132, 0.0
    %v3185 = vmax.f32 %v3134, 0.0
    %v3186 = vmax.f32 %v3137, 0.0
    %v3187 = vmax.f32 %v3139, 0.0
    %v3188 = vmax.f32 %v3142, 0.0
    %v3189 = vmax.f32 %v3144, 0.0
    %v3190 = vmax.f32 %v3147, 0.0
    %v3191 = vmax.f32 %v3149, 0.0
    %v3192 = vmax.f32 %v3152, 0.0
    %v3193 = vmax.f32 %v3154, 0.0
    %v3194 = vmax.f32 %v3157, 0.0
    %v3195 = vmax.f32 %v3159, 0.0
    %v3196 = vmax.f32 %v3162, 0.0
    %v3197 = vmax.f32 %v3164, 0.0
    %vm3198 = vcmask 15360
    %3199 = vst.msk [vmem:[#allocation13] sm:$0xff] %vm3198, %v3166
    %3200 = vst.msk [vmem:[#allocation13 + $0x8] sm:$0xff] %vm3198, %v3167
    %3201 = vst.msk [vmem:[#allocation13 + $0x10] sm:$0xff] %vm3198, %v3168
    %3202 = vst.msk [vmem:[#allocation13 + $0x18] sm:$0xff] %vm3198, %v3169
    %3203 = vst.msk [vmem:[#allocation13 + $0x20] sm:$0xff] %vm3198, %v3170
    %3204 = vst.msk [vmem:[#allocation13 + $0x28] sm:$0xff] %vm3198, %v3171
    %3205 = vst.msk [vmem:[#allocation13 + $0x30] sm:$0xff] %vm3198, %v3172
    %3206 = vst.msk [vmem:[#allocation13 + $0x38] sm:$0xff] %vm3198, %v3173
    %3207 = vst.msk [vmem:[#allocation13 + $0x40] sm:$0xff] %vm3198, %v3174
    %3208 = vst.msk [vmem:[#allocation13 + $0x48] sm:$0xff] %vm3198, %v3175
    %3209 = vst.msk [vmem:[#allocation13 + $0x50] sm:$0xff] %vm3198, %v3176
    %3210 = vst.msk [vmem:[#allocation13 + $0x58] sm:$0xff] %vm3198, %v3177
    %3211 = vst.msk [vmem:[#allocation13 + $0x60] sm:$0xff] %vm3198, %v3178
    %3212 = vst.msk [vmem:[#allocation13 + $0x68] sm:$0xff] %vm3198, %v3179
    %3213 = vst.msk [vmem:[#allocation13 + $0x70] sm:$0xff] %vm3198, %v3180
    %3214 = vst.msk [vmem:[#allocation13 + $0x78] sm:$0xff] %vm3198, %v3181
    %3215 = vst.msk [vmem:[#allocation13 + $0x80] sm:$0xff] %vm3198, %v3182
    %3216 = vst.msk [vmem:[#allocation13 + $0x88] sm:$0xff] %vm3198, %v3183
    %3217 = vst.msk [vmem:[#allocation13 + $0x90] sm:$0xff] %vm3198, %v3184
    %3218 = vst.msk [vmem:[#allocation13 + $0x98] sm:$0xff] %vm3198, %v3185
    %3219 = vst.msk [vmem:[#allocation13 + $0xa0] sm:$0xff] %vm3198, %v3186
    %3220 = vst.msk [vmem:[#allocation13 + $0xa8] sm:$0xff] %vm3198, %v3187
    %3221 = vst.msk [vmem:[#allocation13 + $0xb0] sm:$0xff] %vm3198, %v3188
    %3222 = vst.msk [vmem:[#allocation13 + $0xb8] sm:$0xff] %vm3198, %v3189
    %3223 = vst.msk [vmem:[#allocation13 + $0xc0] sm:$0xff] %vm3198, %v3190
    %3224 = vst.msk [vmem:[#allocation13 + $0xc8] sm:$0xff] %vm3198, %v3191
    %3225 = vst.msk [vmem:[#allocation13 + $0xd0] sm:$0xff] %vm3198, %v3192
    %3226 = vst.msk [vmem:[#allocation13 + $0xd8] sm:$0xff] %vm3198, %v3193
    %3227 = vst.msk [vmem:[#allocation13 + $0xe0] sm:$0xff] %vm3198, %v3194
    %3228 = vst.msk [vmem:[#allocation13 + $0xe8] sm:$0xff] %vm3198, %v3195
    %3229 = vst.msk [vmem:[#allocation13 + $0xf0] sm:$0xff] %vm3198, %v3196
    %3230 = vst.msk [vmem:[#allocation13 + $0xf8] sm:$0xff] %vm3198, %v3197
    // Predicated region
    $region62: #{tpu_custom_call.1} parent=1 // pred_check
      _
    $region63: #{tpu_custom_call.1} parent=1 // pred_check_branch
      %3232 = sbr.rel (0) target = $region65
    $region64: #{tpu_custom_call.1} parent=1 // pred_region
      %3234 = vsyncadd [#allocation4], 4064
      %s3235 = sshll.u32 [#allocation13], 4
      %s3236 = int_to_ptr.vmem [resolvable:$true] %s3235
      %s3237 = sshll.u32 %s9, 4
      %s3238 = int_to_ptr.hbm [resolvable:$true] %s3237
      %3243 = dma.vmem_to_hbm [thread:$0]  %s3236, 32, %s3238, [#allocation4], 32, 32, 2
    $region65: #{tpu_custom_call.1} parent=1 // pred_fallthru
      _
    // Predicated region
    $region66: #{tpu_custom_call.1} parent=1 // pred_check
      _
    $region67: #{tpu_custom_call.1} parent=1 // pred_check_branch
      %3245 = sbr.rel (0) target = $region69
    $region68: #{tpu_custom_call.1} parent=1 // pred_region
      %3247 = dma.done [#allocation4], 4096
    $region69: #{tpu_custom_call.1} parent=1 // pred_fallthru
      _
    %3248 = vsyncpa [#allocation3], 1
    %3249 = vsyncpa [#allocation6], 1
    %3250 = vsyncpa [#allocation9], 1
    %3251 = vsyncpa [#allocation12], 1
    %3252 = vsyncpa [#allocation4], 1

</llo_original>
